<compile_context>
chip_gen: v7x
topology: tpu7x:2x2x1
jax: 0.10.0
libtpu: 0.0.40
codegen_flags: <defaults>
</compile_context>

<pallas_src>
import jax
import jax.numpy as jnp
from jax.experimental import pallas as pl
from jax.experimental.pallas import tpu as pltpu

N_EMBED = 512
HIDDEN = 512


def _round_up(x, m):
    return ((x + m - 1) // m) * m


def _pick_tile(M, tm_max):
    """Largest row tile (multiple of 8, <= tm_max) dividing M; prefer an even
    grid length so the 'parallel' axis load-balances across v7x's 2 TCs."""
    cap = min(tm_max, _round_up(M, 8))
    cap -= cap % 8
    even_grid, any_div = None, None
    for t in range(cap, 7, -8):
        if M % t == 0:
            if any_div is None:
                any_div = t
            if even_grid is None and (M // t) % 2 == 0:
                even_grid = t
    if even_grid is not None and even_grid >= 128:
        return even_grid, 0
    if any_div is not None:
        return any_div, 0
    return cap, (-M) % cap            # rare ragged tail -> pad


def _ffn_core(x, w1, b1, w2, b2):
    # bf16 MXU inputs, f32 accumulation; bias + ReLU in f32 on the VPU.
    h = jnp.dot(x.astype(jnp.bfloat16), w1, preferred_element_type=jnp.float32)
    h = jnp.maximum(h + b1, 0.0)
    # Dropout(p=0.1) in eval mode == identity.
    out = jnp.dot(h.astype(jnp.bfloat16), w2, preferred_element_type=jnp.float32)
    return out + b2


def ffw_kernel(x_ref, w1_ref, b1_ref, w2_ref, b2_ref, o_ref):
    out = _ffn_core(x_ref[...], w1_ref[...], b1_ref[...], w2_ref[...], b2_ref[...])
    o_ref[...] = out.astype(o_ref.dtype)


def ffw_res_kernel(x_ref, res_ref, w1_ref, b1_ref, w2_ref, b2_ref, o_ref):
    out = _ffn_core(x_ref[...], w1_ref[...], b1_ref[...], w2_ref[...], b2_ref[...])
    o_ref[...] = (out + res_ref[...].astype(jnp.float32)).astype(o_ref.dtype)


def feed_forward(x, params, *, residual=None, out_dtype=None, tm=512):
    """x: (B, T, 512) -> (B, T, 512).

    params = (w1 bf16 (512,512), b1 f32 (1,512), w2 bf16 (512,512), b2 f32 (1,512))
    as produced by init_params (dtype conversions hoisted out of the hot path).
    If `residual` is given, returns FFN(x) + residual fused in-kernel.
    Pass bf16 x / out_dtype=bf16 to halve streamed activation bytes (v6e/v7x
    are HBM-bound here)."""
    w1, b1, w2, b2 = params
    B, T, D = x.shape
    assert D == N_EMBED
    out_dtype = x.dtype if out_dtype is None else out_dtype

    M = B * T
    inputs = [x.reshape(M, D)]
    if residual is not None:
        assert residual.shape == x.shape
        inputs.append(residual.reshape(M, D))

    tm_eff, pad = _pick_tile(M, tm)
    if pad:                                          # rare ragged tail only
        inputs = [jnp.pad(a, ((0, pad), (0, 0))) for a in inputs]
    Mp = M + pad
    grid = (Mp // tm_eff,)

    row_spec = pl.BlockSpec((tm_eff, D), lambda i: (i, 0))
    in_specs = [row_spec] * len(inputs) + [
        pl.BlockSpec((D, HIDDEN), lambda i: (0, 0)),         # W1 (resident)
        pl.BlockSpec((1, HIDDEN), lambda i: (0, 0)),         # b1
        pl.BlockSpec((HIDDEN, N_EMBED), lambda i: (0, 0)),   # W2 (resident)
        pl.BlockSpec((1, N_EMBED), lambda i: (0, 0)),        # b2
    ]
    kernel = ffw_res_kernel if residual is not None else ffw_kernel

    def bpe(a):
        return jnp.dtype(a.dtype).itemsize

    act_bytes = (sum(Mp * D * bpe(a) for a in inputs)
                 + Mp * D * jnp.dtype(out_dtype).itemsize)
    cost = pl.CostEstimate(
        flops=2 * 2 * Mp * N_EMBED * HIDDEN,
        transcendentals=0,
        bytes_accessed=act_bytes + 2 * N_EMBED * HIDDEN * 2 + (HIDDEN + N_EMBED) * 4,
    )

    # VMEM: double-buffered row tiles (in/out/residual), resident bf16 weights
    # (2 bufs each), f32 intermediates. Raise scoped limit only if needed.
    est_vmem = (2 * tm_eff * D * sum(bpe(a) for a in inputs)
                + 2 * tm_eff * D * jnp.dtype(out_dtype).itemsize
                + 2 * 2 * N_EMBED * HIDDEN * 2
                + 2 * tm_eff * HIDDEN * 4)
    compiler_kwargs = dict(dimension_semantics=("parallel",))
    if est_vmem > 12 * 1024 * 1024:
        compiler_kwargs["vmem_limit_bytes"] = min(est_vmem + (8 << 20), 48 << 20)

    out = pl.pallas_call(
        kernel,
        out_shape=jax.ShapeDtypeStruct((Mp, N_EMBED), out_dtype),
        grid_spec=pltpu.PrefetchScalarGridSpec(
            num_scalar_prefetch=0,
            grid=grid,
            in_specs=in_specs,
            out_specs=pl.BlockSpec((tm_eff, N_EMBED), lambda i: (i, 0)),
        ),
        compiler_params=pltpu.CompilerParams(**compiler_kwargs),
        cost_estimate=cost,
    )(*inputs, w1, b1, w2, b2)

    if pad:
        out = out[:M]
    return out.reshape(B, T, N_EMBED)


def init_params(key):
    """torch.nn.Linear default init U(-1/sqrt(fan_in), +1/sqrt(fan_in)),
    pre-converted ONCE to the kernel's layout/dtypes (casts hoisted)."""
    k1, k2, k3, k4 = jax.random.split(key, 4)
    bound1 = 1.0 / (N_EMBED ** 0.5)
    bound2 = 1.0 / (HIDDEN ** 0.5)
    # (in_features, out_features) so the kernel computes x @ W.
    w1 = jax.random.uniform(k1, (N_EMBED, HIDDEN), jnp.float32, -bound1, bound1)
    b1 = jax.random.uniform(k2, (HIDDEN,), jnp.float32, -bound1, bound1)
    w2 = jax.random.uniform(k3, (HIDDEN, N_EMBED), jnp.float32, -bound2, bound2)
    b2 = jax.random.uniform(k4, (N_EMBED,), jnp.float32, -bound2, bound2)
    return (w1.astype(jnp.bfloat16), b1.reshape(1, HIDDEN),
            w2.astype(jnp.bfloat16), b2.reshape(1, N_EMBED))


def _reference(x, params, residual=None):
    """Pure-JAX reference with the same bf16-input / f32-accumulate matmuls."""
    w1, b1, w2, b2 = params
    B, T, D = x.shape
    x2 = x.reshape(-1, D)
    h = jnp.dot(x2.astype(jnp.bfloat16), w1, preferred_element_type=jnp.float32) + b1
    h = jnp.maximum(h, 0.0)
    out = jnp.dot(h.astype(jnp.bfloat16), w2, preferred_element_type=jnp.float32) + b2
    if residual is not None:
        out = out + residual.reshape(-1, D).astype(jnp.float32)
    return out.reshape(B, T, D)


if __name__ == "__main__":
    key = jax.random.PRNGKey(0)
    kx, kx2, kr, kp = jax.random.split(key, 4)
    params = init_params(kp)

    # Test 1: module-scale seq (block_size=384), f32 path. M=768 -> tile 384,
    # grid=2 (even -> both v7x TensorCores stay busy).
    B, T = 2, 384
    x = jax.random.normal(kx, (B, T, N_EMBED), jnp.float32)
    out = jax.block_until_ready(feed_forward(x, params))
    ref = _reference(x, params)
    assert out.shape == (B, T, N_EMBED) and out.dtype == jnp.float32
    assert jnp.allclose(out, ref, atol=1e-2, rtol=1e-2)

    # Test 2: bf16 activation I/O (half the streamed bytes on v6e/v7x) with the
    # fused residual add (saves one (M,512) HBM read+write vs a separate add).
    xb = x.astype(jnp.bfloat16)
    res = jax.random.normal(kr, (B, T, N_EMBED), jnp.float32).astype(jnp.bfloat16)
    outb = jax.block_until_ready(
        feed_forward(xb, params, residual=res, out_dtype=jnp.bfloat16))
    refb = _reference(xb, params, residual=res)
    assert outb.shape == (B, T, N_EMBED) and outb.dtype == jnp.bfloat16
    assert jnp.allclose(outb.astype(jnp.float32), refb, atol=6e-2, rtol=6e-2)

    # Test 3: tiny input exercises the tile-clamping / single-tile path.
    B2, T2 = 2, 8
    xs = jax.random.normal(kx2, (B2, T2, N_EMBED), jnp.float32)
    outs = jax.block_until_ready(feed_forward(xs, params))
    refs = _reference(xs, params)
    assert outs.shape == (B2, T2, N_EMBED)
    assert jnp.allclose(outs, refs, atol=1e-2, rtol=1e-2)

    print("KERNEL_OK")
</pallas_src>

<mosaic_0001>
module attributes {stable_mosaic.version = 11 : i64} {
  func.func @ffw_kernel(%arg0: i32, %arg1: memref<384x512xf32, #tpu.memory_space<vmem>>, %arg2: memref<512x512xbf16, #tpu.memory_space<vmem>>, %arg3: memref<1x512xf32, #tpu.memory_space<vmem>>, %arg4: memref<512x512xbf16, #tpu.memory_space<vmem>>, %arg5: memref<1x512xf32, #tpu.memory_space<vmem>>, %arg6: memref<384x512xf32, #tpu.memory_space<vmem>>) attributes {dimension_semantics = [#tpu.dimension_semantics<parallel>], iteration_bounds = array<i64: 2>, scalar_prefetch = 0 : i64, scratch_operands = 0 : i64, tpu.core_type = #tpu.core_type<tc>, window_params = [{transform_indices = @transform_0, window_bounds = array<i64: 384, 512>}, {pipeline_mode = #tpu.pipeline_mode<synchronous>, transform_indices = @transform_1, window_bounds = array<i64: 512, 512>}, {pipeline_mode = #tpu.pipeline_mode<synchronous>, transform_indices = @transform_2, window_bounds = array<i64: 1, 512>}, {pipeline_mode = #tpu.pipeline_mode<synchronous>, transform_indices = @transform_3, window_bounds = array<i64: 512, 512>}, {pipeline_mode = #tpu.pipeline_mode<synchronous>, transform_indices = @transform_4, window_bounds = array<i64: 1, 512>}, {transform_indices = @transform_5, window_bounds = array<i64: 384, 512>}]} {
    %c0 = arith.constant 0 : index
    %c0_0 = arith.constant 0 : index
    %0 = vector.load %arg1[%c0, %c0_0] : memref<384x512xf32, #tpu.memory_space<vmem>>, vector<384x512xf32>
    %c0_1 = arith.constant 0 : index
    %c0_2 = arith.constant 0 : index
    %1 = vector.load %arg2[%c0_1, %c0_2] : memref<512x512xbf16, #tpu.memory_space<vmem>>, vector<512x512xbf16>
    %c0_3 = arith.constant 0 : index
    %c0_4 = arith.constant 0 : index
    %2 = vector.load %arg3[%c0_3, %c0_4] : memref<1x512xf32, #tpu.memory_space<vmem>>, vector<1x512xf32>
    %c0_5 = arith.constant 0 : index
    %c0_6 = arith.constant 0 : index
    %3 = vector.load %arg4[%c0_5, %c0_6] : memref<512x512xbf16, #tpu.memory_space<vmem>>, vector<512x512xbf16>
    %c0_7 = arith.constant 0 : index
    %c0_8 = arith.constant 0 : index
    %4 = vector.load %arg5[%c0_7, %c0_8] : memref<1x512xf32, #tpu.memory_space<vmem>>, vector<1x512xf32>
    %5 = arith.truncf %0 : vector<384x512xf32> to vector<384x512xbf16>
    %cst = arith.constant dense<0.000000e+00> : vector<384x512xf32>
    %6 = tpu.matmul %5, %1, %cst {dimension_numbers = #tpu.dot_dimension_numbers<[1], [0], [0], [1], [0, 0, 1, 1], [], []>} : vector<384x512xbf16>, vector<512x512xbf16>, vector<384x512xf32> -> vector<384x512xf32>
    %7 = vector.broadcast %2 : vector<1x512xf32> to vector<384x512xf32>
    %8 = arith.addf %6, %7 : vector<384x512xf32>
    %cst_9 = arith.constant 0.000000e+00 : f32
    %9 = vector.broadcast %cst_9 : f32 to vector<384x512xf32>
    %10 = arith.maximumf %8, %9 : vector<384x512xf32>
    %11 = arith.truncf %10 : vector<384x512xf32> to vector<384x512xbf16>
    %cst_10 = arith.constant dense<0.000000e+00> : vector<384x512xf32>
    %12 = tpu.matmul %11, %3, %cst_10 {dimension_numbers = #tpu.dot_dimension_numbers<[1], [0], [0], [1], [0, 0, 1, 1], [], []>} : vector<384x512xbf16>, vector<512x512xbf16>, vector<384x512xf32> -> vector<384x512xf32>
    %13 = vector.broadcast %4 : vector<1x512xf32> to vector<384x512xf32>
    %14 = arith.addf %12, %13 : vector<384x512xf32>
    %c0_11 = arith.constant 0 : index
    %c0_12 = arith.constant 0 : index
    %15 = vector.load %arg6[%c0_11, %c0_12] : memref<384x512xf32, #tpu.memory_space<vmem>>, vector<384x512xf32>
    tpu.vector_store %arg6[%c0_11, %c0_12], %14 {strides = array<i32>} : memref<384x512xf32, #tpu.memory_space<vmem>>, vector<384x512xf32>,
    return
  }
  func.func @transform_0(%arg0: i32) -> (i32, i32) {
    %c0_i32 = arith.constant 0 : i32
    %c0_i32_0 = arith.constant 0 : i32
    return %arg0, %c0_i32 : i32, i32
  }
  func.func @transform_1(%arg0: i32) -> (i32, i32) {
    %c0_i32 = arith.constant 0 : i32
    %c0_i32_0 = arith.constant 0 : i32
    %c0_i32_1 = arith.constant 0 : i32
    return %c0_i32, %c0_i32_0 : i32, i32
  }
  func.func @transform_2(%arg0: i32) -> (i32, i32) {
    %c0_i32 = arith.constant 0 : i32
    %c0_i32_0 = arith.constant 0 : i32
    %c0_i32_1 = arith.constant 0 : i32
    return %c0_i32, %c0_i32_0 : i32, i32
  }
  func.func @transform_3(%arg0: i32) -> (i32, i32) {
    %c0_i32 = arith.constant 0 : i32
    %c0_i32_0 = arith.constant 0 : i32
    %c0_i32_1 = arith.constant 0 : i32
    return %c0_i32, %c0_i32_0 : i32, i32
  }
  func.func @transform_4(%arg0: i32) -> (i32, i32) {
    %c0_i32 = arith.constant 0 : i32
    %c0_i32_0 = arith.constant 0 : i32
    %c0_i32_1 = arith.constant 0 : i32
    return %c0_i32, %c0_i32_0 : i32, i32
  }
  func.func @transform_5(%arg0: i32) -> (i32, i32) {
    %c0_i32 = arith.constant 0 : i32
    %c0_i32_0 = arith.constant 0 : i32
    return %arg0, %c0_i32 : i32, i32
  }
}

</mosaic_0001>

<llo_original>
// kernel: tpu_custom_call.1
$region0: #{tpu_custom_call.1}
  #allocation0 [shape = 'u32[]', space=smem, size = 0x4, offset = 0x4, fixed_abs, tag = 'smem constant byte address 0x4 - core index']
  #allocation1 [shape = 'u32[144,128]{1,0:T(1,128)}', space=vmem, size = 0x12000, scoped, tag = 'internal scratch']
  %s0 = inlined_call_operand.hbm [shape: f32[768,512], index: 0, kind: input, shape index: {}]
  %s1 = inlined_call_operand.hbm [shape: bf16[512,512], index: 1, kind: input, shape index: {}]
  %s2 = inlined_call_operand.hbm [shape: f32[1,512], index: 2, kind: input, shape index: {}]
  %s3 = inlined_call_operand.hbm [shape: bf16[512,512], index: 3, kind: input, shape index: {}]
  %s4 = inlined_call_operand.hbm [shape: f32[1,512], index: 4, kind: input, shape index: {}]
  %s5 = inlined_call_operand.hbm [shape: f32[768,512], index: 5, kind: output, shape index: {}]
  %s6 = sld [smem:[#allocation0]]
  $region73: #{tpu_custom_call.1} parent=0
    _
  %s8 = ssub.s32 1, %s6
  %s9 = scalar_select 0, %s8, %s6
  $region1: #{tpu_custom_call.1} parent=0
    #allocation2 [shape = 'u8[1572864]{0}', space=vmem, size = 0x180000, scoped, tag = 'input window, operand 0']
    #allocation3 [shape = 's32[2]{0}', space=sflag, size = 0x8, scoped, tag = 'scoped memory for tpu_custom_call.1']
    #allocation4 [shape = 's32[2]{0}', space=sflag, size = 0x8, scoped, tag = 'scoped memory for tpu_custom_call.1']
    #allocation5 [shape = 'u8[524288]{0}', space=vmem, size = 0x80000, scoped, tag = 'input window, operand 1, single buffered']
    #allocation6 [shape = 's32[1]{0}', space=sflag, size = 0x4, scoped, tag = 'scoped memory for tpu_custom_call.1']
    #allocation7 [shape = 'u8[2048]{0}', space=vmem, size = 0x800, scoped, tag = 'input window, operand 2, single buffered']
    #allocation8 [shape = 'u8[524288]{0}', space=vmem, size = 0x80000, scoped, tag = 'input window, operand 3, single buffered']
    #allocation9 [shape = 's32[1]{0}', space=sflag, size = 0x4, scoped, tag = 'scoped memory for tpu_custom_call.1']
    #allocation10 [shape = 'u8[2048]{0}', space=vmem, size = 0x800, scoped, tag = 'input window, operand 4, single buffered']
    #allocation11 [shape = 'u8[1572864]{0}', space=vmem, size = 0x180000, scoped, tag = 'output window, operand 0']
    %10 = vsyncpa [#allocation3], 0
    %s11 = scalar_lea.sflag [#allocation3], 1
    %12 = vsyncpa %s11, 0
    %13 = vsyncpa [#allocation6], 0
    %14 = vsyncpa [#allocation9], 0
    %15 = vsyncpa [#allocation4], 0
    %s16 = scalar_lea.sflag [#allocation4], 1
    %17 = vsyncpa %s16, 0
    loop: start=0, step=1, limit=4
    $region2: #{tpu_custom_call.1} parent=1 // loop_pre_header
      _
    $region3: #{tpu_custom_call.1} parent=1 // loop_header
      %s19 = sphi 0, %s23
      %p20 = scmp.ge.s32.totalorder %s19, 4
      %s29 = sphi 0, %s31
      %s32 = sphi 0, %s29
      %s33 = sphi 0, %s32
      %s49 = sphi 0, %s33
      %s53 = sphi 0, %s53
      %s55 = sphi 0, %s53
      %s56 = sphi 0, %s55
      %s70 = sphi 0, %s56
      %s74 = sphi 0, %s74
      %s76 = sphi 0, %s74
      %s77 = sphi 0, %s76
      %s91 = sphi 0, %s77
      %s95 = sphi 0, %s95
      %s97 = sphi 0, %s95
      %s98 = sphi 0, %s97
      %s112 = sphi 0, %s98
      %s116 = sphi 0, %s116
      %s118 = sphi 0, %s116
      %s119 = sphi 0, %s118
      %s133 = sphi 0, %s119
      %s139 = sphi 0, %s141
      %s142 = sphi 0, %s139
      %s143 = sphi 0, %s142
      %s159 = sphi 0, %s143
    $region4: #{tpu_custom_call.1} parent=1 // loop_header_branch
      %22 = sbr.rel (%p20) target = $region8
    $region5: #{tpu_custom_call.1} parent=1 // loop_body
      %s24 = ssub.s32 %s19, 1
      %s25 = ssub.s32 %s19, 2
      %s26 = sadd.s32 %s19, 1
      %s27 = ssub.s32 %s19, %s26
      %p28 = scmp.eq.s32.totalorder %s27, 0
      %s30 = sadd.s32 %s29, 1
      %s31 = scalar_select %p28, %s29, %s30
      %p34 = pneg %p28
      %p35 = scmp.eq.s32.totalorder %s19, 1
      %p36 = por %p34, %p35
      %p37 = scmp.ne.s32.totalorder %s29, %s32
      %p38 = scmp.eq.s32.totalorder %s19, 0
      %p39 = por %p37, %p38
      %p40 = scmp.ne.s32.totalorder %s29, %s32
      %p41 = scmp.eq.s32.totalorder %s24, 1
      %p42 = por %p40, %p41
      %p43 = scmp.ne.s32.totalorder %s32, %s33
      %p44 = scmp.eq.s32.totalorder %s24, 0
      %p45 = por %p43, %p44
      %p46 = scmp.ne.s32.totalorder %s32, %s33
      %p47 = scmp.eq.s32.totalorder %s25, 1
      %p48 = por %p46, %p47
      %p50 = scmp.ne.s32.totalorder %s33, %s49
      %p51 = scmp.eq.s32.totalorder %s25, 0
      %p52 = por %p50, %p51
      %s54 = sadd.s32 %s53, 1
      %p57 = scmp.eq.s32.totalorder %s19, 1
      %p58 = scmp.ne.s32.totalorder %s53, %s55
      %p59 = scmp.eq.s32.totalorder %s19, 0
      %p60 = por %p58, %p59
      %p61 = scmp.ne.s32.totalorder %s53, %s55
      %p62 = scmp.eq.s32.totalorder %s24, 1
      %p63 = por %p61, %p62
      %p64 = scmp.ne.s32.totalorder %s55, %s56
      %p65 = scmp.eq.s32.totalorder %s24, 0
      %p66 = por %p64, %p65
      %p67 = scmp.ne.s32.totalorder %s55, %s56
      %p68 = scmp.eq.s32.totalorder %s25, 1
      %p69 = por %p67, %p68
      %p71 = scmp.ne.s32.totalorder %s56, %s70
      %p72 = scmp.eq.s32.totalorder %s25, 0
      %p73 = por %p71, %p72
      %s75 = sadd.s32 %s74, 1
      %p78 = scmp.eq.s32.totalorder %s19, 1
      %p79 = scmp.ne.s32.totalorder %s74, %s76
      %p80 = scmp.eq.s32.totalorder %s19, 0
      %p81 = por %p79, %p80
      %p82 = scmp.ne.s32.totalorder %s74, %s76
      %p83 = scmp.eq.s32.totalorder %s24, 1
      %p84 = por %p82, %p83
      %p85 = scmp.ne.s32.totalorder %s76, %s77
      %p86 = scmp.eq.s32.totalorder %s24, 0
      %p87 = por %p85, %p86
      %p88 = scmp.ne.s32.totalorder %s76, %s77
      %p89 = scmp.eq.s32.totalorder %s25, 1
      %p90 = por %p88, %p89
      %p92 = scmp.ne.s32.totalorder %s77, %s91
      %p93 = scmp.eq.s32.totalorder %s25, 0
      %p94 = por %p92, %p93
      %s96 = sadd.s32 %s95, 1
      %p99 = scmp.eq.s32.totalorder %s19, 1
      %p100 = scmp.ne.s32.totalorder %s95, %s97
      %p101 = scmp.eq.s32.totalorder %s19, 0
      %p102 = por %p100, %p101
      %p103 = scmp.ne.s32.totalorder %s95, %s97
      %p104 = scmp.eq.s32.totalorder %s24, 1
      %p105 = por %p103, %p104
      %p106 = scmp.ne.s32.totalorder %s97, %s98
      %p107 = scmp.eq.s32.totalorder %s24, 0
      %p108 = por %p106, %p107
      %p109 = scmp.ne.s32.totalorder %s97, %s98
      %p110 = scmp.eq.s32.totalorder %s25, 1
      %p111 = por %p109, %p110
      %p113 = scmp.ne.s32.totalorder %s98, %s112
      %p114 = scmp.eq.s32.totalorder %s25, 0
      %p115 = por %p113, %p114
      %s117 = sadd.s32 %s116, 1
      %p120 = scmp.eq.s32.totalorder %s19, 1
      %p121 = scmp.ne.s32.totalorder %s116, %s118
      %p122 = scmp.eq.s32.totalorder %s19, 0
      %p123 = por %p121, %p122
      %p124 = scmp.ne.s32.totalorder %s116, %s118
      %p125 = scmp.eq.s32.totalorder %s24, 1
      %p126 = por %p124, %p125
      %p127 = scmp.ne.s32.totalorder %s118, %s119
      %p128 = scmp.eq.s32.totalorder %s24, 0
      %p129 = por %p127, %p128
      %p130 = scmp.ne.s32.totalorder %s118, %s119
      %p131 = scmp.eq.s32.totalorder %s25, 1
      %p132 = por %p130, %p131
      %p134 = scmp.ne.s32.totalorder %s119, %s133
      %p135 = scmp.eq.s32.totalorder %s25, 0
      %p136 = por %p134, %p135
      %s137 = ssub.s32 %s19, %s26
      %p138 = scmp.eq.s32.totalorder %s137, 0
      %s140 = sadd.s32 %s139, 1
      %s141 = scalar_select %p138, %s139, %s140
      %p144 = pneg %p138
      %p145 = scmp.eq.s32.totalorder %s19, 1
      %p146 = por %p144, %p145
      %p147 = scmp.ne.s32.totalorder %s139, %s142
      %p148 = scmp.eq.s32.totalorder %s19, 0
      %p149 = por %p147, %p148
      %p150 = scmp.ne.s32.totalorder %s139, %s142
      %p151 = scmp.eq.s32.totalorder %s24, 1
      %p152 = por %p150, %p151
      %p153 = scmp.ne.s32.totalorder %s142, %s143
      %p154 = scmp.eq.s32.totalorder %s24, 0
      %p155 = por %p153, %p154
      %p156 = scmp.ne.s32.totalorder %s142, %s143
      %p157 = scmp.eq.s32.totalorder %s25, 1
      %p158 = por %p156, %p157
      %p160 = scmp.ne.s32.totalorder %s143, %s159
      %p161 = scmp.eq.s32.totalorder %s25, 0
      %p162 = por %p160, %p161
      %p163 = scmp.le.s32.totalorder 1, %s19
      %p164 = scmp.lt.s32.totalorder %s19, 3
      %p165 = pnand %p163, %p164
      %p166 = pneg %p165
      // Predicated region
      $region9: #{tpu_custom_call.1} parent=5 // pred_check
        _
      $region10: #{tpu_custom_call.1} parent=5 // pred_check_branch
        %168 = sbr.rel (%p165) target = $region12
      $region11: #{tpu_custom_call.1} parent=5 // pred_region
        %s169 = ssub.s32 %s19, 1
        // Predicated region
        $region13: #{tpu_custom_call.1} parent=11 // pred_check
          %p170 = pneg %p66
        $region14: #{tpu_custom_call.1} parent=11 // pred_check_branch
          %172 = sbr.rel (%p170) target = $region16
        $region15: #{tpu_custom_call.1} parent=11 // pred_region
          %s174 = ssub.s32 16384, 16384
          %175 = vsyncadd [#allocation6], %s174
          %s176 = sshll.u32 [#allocation5], 4
          %s177 = int_to_ptr.vmem [resolvable:$true] %s176
          %182 = dma.hbm_to_vmem [thread:$0]  %s1, 16384, %s177, [#allocation6], 256, 256, 16
        $region16: #{tpu_custom_call.1} parent=11 // pred_fallthru
          _
        // Predicated region
        $region17: #{tpu_custom_call.1} parent=11 // pred_check
          %p183 = pneg %p87
        $region18: #{tpu_custom_call.1} parent=11 // pred_check_branch
          %185 = sbr.rel (%p183) target = $region20
        $region19: #{tpu_custom_call.1} parent=11 // pred_region
          %s187 = ssub.s32 64, 64
          %188 = vsyncadd [#allocation6], %s187
          %s190 = sshll.u32 [#allocation7], 4
          %s191 = int_to_ptr.vmem [resolvable:$true] %s190
          %193 = dma.hbm_to_vmem [thread:$0]  %s2, 64, %s191, [#allocation6]
        $region20: #{tpu_custom_call.1} parent=11 // pred_fallthru
          _
        // Predicated region
        $region21: #{tpu_custom_call.1} parent=11 // pred_check
          %p194 = pneg %p108
        $region22: #{tpu_custom_call.1} parent=11 // pred_check_branch
          %196 = sbr.rel (%p194) target = $region24
        $region23: #{tpu_custom_call.1} parent=11 // pred_region
          %s198 = ssub.s32 16384, 16384
          %199 = vsyncadd [#allocation9], %s198
          %s200 = sshll.u32 [#allocation8], 4
          %s201 = int_to_ptr.vmem [resolvable:$true] %s200
          %206 = dma.hbm_to_vmem [thread:$0]  %s3, 16384, %s201, [#allocation9], 256, 256, 16
        $region24: #{tpu_custom_call.1} parent=11 // pred_fallthru
          _
        // Predicated region
        $region25: #{tpu_custom_call.1} parent=11 // pred_check
          %p207 = pneg %p129
        $region26: #{tpu_custom_call.1} parent=11 // pred_check_branch
          %209 = sbr.rel (%p207) target = $region28
        $region27: #{tpu_custom_call.1} parent=11 // pred_region
          %s211 = ssub.s32 64, 64
          %212 = vsyncadd [#allocation9], %s211
          %s214 = sshll.u32 [#allocation10], 4
          %s215 = int_to_ptr.vmem [resolvable:$true] %s214
          %217 = dma.hbm_to_vmem [thread:$0]  %s4, 64, %s215, [#allocation9]
        $region28: #{tpu_custom_call.1} parent=11 // pred_fallthru
          _
      $region12: #{tpu_custom_call.1} parent=5 // pred_fallthru
        _
      %p218 = scmp.lt.s32.totalorder %s19, 2
      // Predicated region
      $region29: #{tpu_custom_call.1} parent=5 // pred_check
        %p219 = pneg %p218
      $region30: #{tpu_custom_call.1} parent=5 // pred_check_branch
        %221 = sbr.rel (%p219) target = $region32
      $region31: #{tpu_custom_call.1} parent=5 // pred_region
        // Predicated region
        $region33: #{tpu_custom_call.1} parent=31 // pred_check
          %p222 = pneg %p39
        $region34: #{tpu_custom_call.1} parent=31 // pred_check_branch
          %224 = sbr.rel (%p222) target = $region36
        $region35: #{tpu_custom_call.1} parent=31 // pred_region
          %s225 = sand.u32 %s29, 1
          %s226 = scalar_lea.sflag [#allocation3], %s225
          %s227 = sand.u32 %s29, 1
          %s228 = smul.addr %s227, 1536
          %s229 = scalar_lea.vmem [#allocation2], %s228
          %s230 = smul.u32 48, %s19
          %s232 = ssub.s32 24576, 24576
          %233 = vsyncadd %s226, %s232
          %s234 = smul.addr %s230, 4
          %s235 = smul.addr %s234, 128
          %s236 = scalar_lea.hbm %s0, %s235
          %s237 = sshll.u32 %s229, 4
          %s238 = int_to_ptr.vmem [resolvable:$true] %s237
          %243 = dma.hbm_to_vmem [thread:$0]  %s236, 24576, %s238, %s226, 512, 512, 32
        $region36: #{tpu_custom_call.1} parent=31 // pred_fallthru
          _
      $region32: #{tpu_custom_call.1} parent=5 // pred_fallthru
        _
      %p244 = scmp.le.s32.totalorder 1, %s19
      %p245 = scmp.lt.s32.totalorder %s19, 3
      %p246 = pnand %p244, %p245
      %p247 = pneg %p246
      // Predicated region
      $region37: #{tpu_custom_call.1} parent=5 // pred_check
        _
      $region38: #{tpu_custom_call.1} parent=5 // pred_check_branch
        %249 = sbr.rel (%p246) target = $region40
      $region39: #{tpu_custom_call.1} parent=5 // pred_region
        %s250 = ssub.s32 %s19, 1
        %s251 = sand.u32 %s32, 1
        %s252 = scalar_lea.sflag [#allocation3], %s251
        %s253 = sand.u32 %s32, 1
        %s254 = smul.addr %s253, 1536
        %s255 = scalar_lea.vmem [#allocation2], %s254
        // Predicated region
        $region41: #{tpu_custom_call.1} parent=39 // pred_check
          %p256 = pneg %p45
        $region42: #{tpu_custom_call.1} parent=39 // pred_check_branch
          %258 = sbr.rel (%p256) target = $region44
        $region43: #{tpu_custom_call.1} parent=39 // pred_region
          %259 = dma.done %s252, 24576
        $region44: #{tpu_custom_call.1} parent=39 // pred_fallthru
          _
        // Predicated region
        $region45: #{tpu_custom_call.1} parent=39 // pred_check
          %p260 = pneg %p66
        $region46: #{tpu_custom_call.1} parent=39 // pred_check_branch
          %262 = sbr.rel (%p260) target = $region48
        $region47: #{tpu_custom_call.1} parent=39 // pred_region
          %263 = dma.done [#allocation6], 16384
        $region48: #{tpu_custom_call.1} parent=39 // pred_fallthru
          _
        // Predicated region
        $region49: #{tpu_custom_call.1} parent=39 // pred_check
          %p264 = pneg %p87
        $region50: #{tpu_custom_call.1} parent=39 // pred_check_branch
          %266 = sbr.rel (%p264) target = $region52
        $region51: #{tpu_custom_call.1} parent=39 // pred_region
          %267 = dma.done [#allocation6], 64
        $region52: #{tpu_custom_call.1} parent=39 // pred_fallthru
          _
        // Predicated region
        $region53: #{tpu_custom_call.1} parent=39 // pred_check
          %p268 = pneg %p108
        $region54: #{tpu_custom_call.1} parent=39 // pred_check_branch
          %270 = sbr.rel (%p268) target = $region56
        $region55: #{tpu_custom_call.1} parent=39 // pred_region
          %271 = dma.done [#allocation9], 16384
        $region56: #{tpu_custom_call.1} parent=39 // pred_fallthru
          _
        // Predicated region
        $region57: #{tpu_custom_call.1} parent=39 // pred_check
          %p272 = pneg %p129
        $region58: #{tpu_custom_call.1} parent=39 // pred_check_branch
          %274 = sbr.rel (%p272) target = $region60
        $region59: #{tpu_custom_call.1} parent=39 // pred_region
          %275 = dma.done [#allocation9], 64
        $region60: #{tpu_custom_call.1} parent=39 // pred_fallthru
          _
        %s276 = sand.u32 %s32, 1
        %s277 = scalar_lea.sflag [#allocation3], %s276
        %s278 = sand.u32 %s32, 1
        %s279 = smul.addr %s278, 1536
        %s280 = scalar_lea.vmem [#allocation2], %s279
        %p281 = pneg %p45
        %p282 = pneg %p42
        %p283 = pneg %p66
        %p284 = pneg %p63
        %p285 = pneg %p87
        %p286 = pneg %p84
        %p287 = pneg %p108
        %p288 = pneg %p105
        %p289 = pneg %p129
        %p290 = pneg %p126
        %p291 = pneg %p155
        %p292 = pneg %p152
        %s293 = sand.u32 %s142, 1
        %s294 = scalar_lea.sflag [#allocation4], %s293
        %s295 = sand.u32 %s142, 1
        %s296 = smul.addr %s295, 1536
        %s297 = scalar_lea.vmem [#allocation11], %s296
        %s298 = smul.u32 48, %s24
        %s299 = smul.u32 48, %s24
        %v300 = vld [vmem:[%s255] sm:$0xff]
        %v301 = vld [vmem:[%s255 + $0x8] sm:$0xff]
        %v302 = vld [vmem:[%s255 + $0x10] sm:$0xff]
        %v303 = vld [vmem:[%s255 + $0x18] sm:$0xff]
        %v304 = vld [vmem:[%s255 + $0x20] sm:$0xff]
        %v305 = vld [vmem:[%s255 + $0x28] sm:$0xff]
        %v306 = vld [vmem:[%s255 + $0x30] sm:$0xff]
        %v307 = vld [vmem:[%s255 + $0x38] sm:$0xff]
        %v308 = vld [vmem:[%s255 + $0x40] sm:$0xff]
        %v309 = vld [vmem:[%s255 + $0x48] sm:$0xff]
        %v310 = vld [vmem:[%s255 + $0x50] sm:$0xff]
        %v311 = vld [vmem:[%s255 + $0x58] sm:$0xff]
        %v312 = vld [vmem:[%s255 + $0x60] sm:$0xff]
        %v313 = vld [vmem:[%s255 + $0x68] sm:$0xff]
        %v314 = vld [vmem:[%s255 + $0x70] sm:$0xff]
        %v315 = vld [vmem:[%s255 + $0x78] sm:$0xff]
        %v316 = vld [vmem:[%s255 + $0x80] sm:$0xff]
        %v317 = vld [vmem:[%s255 + $0x88] sm:$0xff]
        %v318 = vld [vmem:[%s255 + $0x90] sm:$0xff]
        %v319 = vld [vmem:[%s255 + $0x98] sm:$0xff]
        %v320 = vld [vmem:[%s255 + $0xa0] sm:$0xff]
        %v321 = vld [vmem:[%s255 + $0xa8] sm:$0xff]
        %v322 = vld [vmem:[%s255 + $0xb0] sm:$0xff]
        %v323 = vld [vmem:[%s255 + $0xb8] sm:$0xff]
        %v324 = vld [vmem:[%s255 + $0xc0] sm:$0xff]
        %v325 = vld [vmem:[%s255 + $0xc8] sm:$0xff]
        %v326 = vld [vmem:[%s255 + $0xd0] sm:$0xff]
        %v327 = vld [vmem:[%s255 + $0xd8] sm:$0xff]
        %v328 = vld [vmem:[%s255 + $0xe0] sm:$0xff]
        %v329 = vld [vmem:[%s255 + $0xe8] sm:$0xff]
        %v330 = vld [vmem:[%s255 + $0xf0] sm:$0xff]
        %v331 = vld [vmem:[%s255 + $0xf8] sm:$0xff]
        %v332 = vld [vmem:[%s255 + $0x100] sm:$0xff]
        %v333 = vld [vmem:[%s255 + $0x108] sm:$0xff]
        %v334 = vld [vmem:[%s255 + $0x110] sm:$0xff]
        %v335 = vld [vmem:[%s255 + $0x118] sm:$0xff]
        %v336 = vld [vmem:[%s255 + $0x120] sm:$0xff]
        %v337 = vld [vmem:[%s255 + $0x128] sm:$0xff]
        %v338 = vld [vmem:[%s255 + $0x130] sm:$0xff]
        %v339 = vld [vmem:[%s255 + $0x138] sm:$0xff]
        %v340 = vld [vmem:[%s255 + $0x140] sm:$0xff]
        %v341 = vld [vmem:[%s255 + $0x148] sm:$0xff]
        %v342 = vld [vmem:[%s255 + $0x150] sm:$0xff]
        %v343 = vld [vmem:[%s255 + $0x158] sm:$0xff]
        %v344 = vld [vmem:[%s255 + $0x160] sm:$0xff]
        %v345 = vld [vmem:[%s255 + $0x168] sm:$0xff]
        %v346 = vld [vmem:[%s255 + $0x170] sm:$0xff]
        %v347 = vld [vmem:[%s255 + $0x178] sm:$0xff]
        %v348 = vld [vmem:[%s255 + $0x180] sm:$0xff]
        %v349 = vld [vmem:[%s255 + $0x188] sm:$0xff]
        %v350 = vld [vmem:[%s255 + $0x190] sm:$0xff]
        %v351 = vld [vmem:[%s255 + $0x198] sm:$0xff]
        %v352 = vld [vmem:[%s255 + $0x1a0] sm:$0xff]
        %v353 = vld [vmem:[%s255 + $0x1a8] sm:$0xff]
        %v354 = vld [vmem:[%s255 + $0x1b0] sm:$0xff]
        %v355 = vld [vmem:[%s255 + $0x1b8] sm:$0xff]
        %v356 = vld [vmem:[%s255 + $0x1c0] sm:$0xff]
        %v357 = vld [vmem:[%s255 + $0x1c8] sm:$0xff]
        %v358 = vld [vmem:[%s255 + $0x1d0] sm:$0xff]
        %v359 = vld [vmem:[%s255 + $0x1d8] sm:$0xff]
        %v360 = vld [vmem:[%s255 + $0x1e0] sm:$0xff]
        %v361 = vld [vmem:[%s255 + $0x1e8] sm:$0xff]
        %v362 = vld [vmem:[%s255 + $0x1f0] sm:$0xff]
        %v363 = vld [vmem:[%s255 + $0x1f8] sm:$0xff]
        %v364 = vld [vmem:[%s255 + $0x200] sm:$0xff]
        %v365 = vld [vmem:[%s255 + $0x208] sm:$0xff]
        %v366 = vld [vmem:[%s255 + $0x210] sm:$0xff]
        %v367 = vld [vmem:[%s255 + $0x218] sm:$0xff]
        %v368 = vld [vmem:[%s255 + $0x220] sm:$0xff]
        %v369 = vld [vmem:[%s255 + $0x228] sm:$0xff]
        %v370 = vld [vmem:[%s255 + $0x230] sm:$0xff]
        %v371 = vld [vmem:[%s255 + $0x238] sm:$0xff]
        %v372 = vld [vmem:[%s255 + $0x240] sm:$0xff]
        %v373 = vld [vmem:[%s255 + $0x248] sm:$0xff]
        %v374 = vld [vmem:[%s255 + $0x250] sm:$0xff]
        %v375 = vld [vmem:[%s255 + $0x258] sm:$0xff]
        %v376 = vld [vmem:[%s255 + $0x260] sm:$0xff]
        %v377 = vld [vmem:[%s255 + $0x268] sm:$0xff]
        %v378 = vld [vmem:[%s255 + $0x270] sm:$0xff]
        %v379 = vld [vmem:[%s255 + $0x278] sm:$0xff]
        %v380 = vld [vmem:[%s255 + $0x280] sm:$0xff]
        %v381 = vld [vmem:[%s255 + $0x288] sm:$0xff]
        %v382 = vld [vmem:[%s255 + $0x290] sm:$0xff]
        %v383 = vld [vmem:[%s255 + $0x298] sm:$0xff]
        %v384 = vld [vmem:[%s255 + $0x2a0] sm:$0xff]
        %v385 = vld [vmem:[%s255 + $0x2a8] sm:$0xff]
        %v386 = vld [vmem:[%s255 + $0x2b0] sm:$0xff]
        %v387 = vld [vmem:[%s255 + $0x2b8] sm:$0xff]
        %v388 = vld [vmem:[%s255 + $0x2c0] sm:$0xff]
        %v389 = vld [vmem:[%s255 + $0x2c8] sm:$0xff]
        %v390 = vld [vmem:[%s255 + $0x2d0] sm:$0xff]
        %v391 = vld [vmem:[%s255 + $0x2d8] sm:$0xff]
        %v392 = vld [vmem:[%s255 + $0x2e0] sm:$0xff]
        %v393 = vld [vmem:[%s255 + $0x2e8] sm:$0xff]
        %v394 = vld [vmem:[%s255 + $0x2f0] sm:$0xff]
        %v395 = vld [vmem:[%s255 + $0x2f8] sm:$0xff]
        %v396 = vld [vmem:[%s255 + $0x300] sm:$0xff]
        %v397 = vld [vmem:[%s255 + $0x308] sm:$0xff]
        %v398 = vld [vmem:[%s255 + $0x310] sm:$0xff]
        %v399 = vld [vmem:[%s255 + $0x318] sm:$0xff]
        %v400 = vld [vmem:[%s255 + $0x320] sm:$0xff]
        %v401 = vld [vmem:[%s255 + $0x328] sm:$0xff]
        %v402 = vld [vmem:[%s255 + $0x330] sm:$0xff]
        %v403 = vld [vmem:[%s255 + $0x338] sm:$0xff]
        %v404 = vld [vmem:[%s255 + $0x340] sm:$0xff]
        %v405 = vld [vmem:[%s255 + $0x348] sm:$0xff]
        %v406 = vld [vmem:[%s255 + $0x350] sm:$0xff]
        %v407 = vld [vmem:[%s255 + $0x358] sm:$0xff]
        %v408 = vld [vmem:[%s255 + $0x360] sm:$0xff]
        %v409 = vld [vmem:[%s255 + $0x368] sm:$0xff]
        %v410 = vld [vmem:[%s255 + $0x370] sm:$0xff]
        %v411 = vld [vmem:[%s255 + $0x378] sm:$0xff]
        %v412 = vld [vmem:[%s255 + $0x380] sm:$0xff]
        %v413 = vld [vmem:[%s255 + $0x388] sm:$0xff]
        %v414 = vld [vmem:[%s255 + $0x390] sm:$0xff]
        %v415 = vld [vmem:[%s255 + $0x398] sm:$0xff]
        %v416 = vld [vmem:[%s255 + $0x3a0] sm:$0xff]
        %v417 = vld [vmem:[%s255 + $0x3a8] sm:$0xff]
        %v418 = vld [vmem:[%s255 + $0x3b0] sm:$0xff]
        %v419 = vld [vmem:[%s255 + $0x3b8] sm:$0xff]
        %v420 = vld [vmem:[%s255 + $0x3c0] sm:$0xff]
        %v421 = vld [vmem:[%s255 + $0x3c8] sm:$0xff]
        %v422 = vld [vmem:[%s255 + $0x3d0] sm:$0xff]
        %v423 = vld [vmem:[%s255 + $0x3d8] sm:$0xff]
        %v424 = vld [vmem:[%s255 + $0x3e0] sm:$0xff]
        %v425 = vld [vmem:[%s255 + $0x3e8] sm:$0xff]
        %v426 = vld [vmem:[%s255 + $0x3f0] sm:$0xff]
        %v427 = vld [vmem:[%s255 + $0x3f8] sm:$0xff]
        %v428 = vld [vmem:[%s255 + $0x400] sm:$0xff]
        %v429 = vld [vmem:[%s255 + $0x408] sm:$0xff]
        %v430 = vld [vmem:[%s255 + $0x410] sm:$0xff]
        %v431 = vld [vmem:[%s255 + $0x418] sm:$0xff]
        %v432 = vld [vmem:[%s255 + $0x420] sm:$0xff]
        %v433 = vld [vmem:[%s255 + $0x428] sm:$0xff]
        %v434 = vld [vmem:[%s255 + $0x430] sm:$0xff]
        %v435 = vld [vmem:[%s255 + $0x438] sm:$0xff]
        %v436 = vld [vmem:[%s255 + $0x440] sm:$0xff]
        %v437 = vld [vmem:[%s255 + $0x448] sm:$0xff]
        %v438 = vld [vmem:[%s255 + $0x450] sm:$0xff]
        %v439 = vld [vmem:[%s255 + $0x458] sm:$0xff]
        %v440 = vld [vmem:[%s255 + $0x460] sm:$0xff]
        %v441 = vld [vmem:[%s255 + $0x468] sm:$0xff]
        %v442 = vld [vmem:[%s255 + $0x470] sm:$0xff]
        %v443 = vld [vmem:[%s255 + $0x478] sm:$0xff]
        %v444 = vld [vmem:[%s255 + $0x480] sm:$0xff]
        %v445 = vld [vmem:[%s255 + $0x488] sm:$0xff]
        %v446 = vld [vmem:[%s255 + $0x490] sm:$0xff]
        %v447 = vld [vmem:[%s255 + $0x498] sm:$0xff]
        %v448 = vld [vmem:[%s255 + $0x4a0] sm:$0xff]
        %v449 = vld [vmem:[%s255 + $0x4a8] sm:$0xff]
        %v450 = vld [vmem:[%s255 + $0x4b0] sm:$0xff]
        %v451 = vld [vmem:[%s255 + $0x4b8] sm:$0xff]
        %v452 = vld [vmem:[%s255 + $0x4c0] sm:$0xff]
        %v453 = vld [vmem:[%s255 + $0x4c8] sm:$0xff]
        %v454 = vld [vmem:[%s255 + $0x4d0] sm:$0xff]
        %v455 = vld [vmem:[%s255 + $0x4d8] sm:$0xff]
        %v456 = vld [vmem:[%s255 + $0x4e0] sm:$0xff]
        %v457 = vld [vmem:[%s255 + $0x4e8] sm:$0xff]
        %v458 = vld [vmem:[%s255 + $0x4f0] sm:$0xff]
        %v459 = vld [vmem:[%s255 + $0x4f8] sm:$0xff]
        %v460 = vld [vmem:[%s255 + $0x500] sm:$0xff]
        %v461 = vld [vmem:[%s255 + $0x508] sm:$0xff]
        %v462 = vld [vmem:[%s255 + $0x510] sm:$0xff]
        %v463 = vld [vmem:[%s255 + $0x518] sm:$0xff]
        %v464 = vld [vmem:[%s255 + $0x520] sm:$0xff]
        %v465 = vld [vmem:[%s255 + $0x528] sm:$0xff]
        %v466 = vld [vmem:[%s255 + $0x530] sm:$0xff]
        %v467 = vld [vmem:[%s255 + $0x538] sm:$0xff]
        %v468 = vld [vmem:[%s255 + $0x540] sm:$0xff]
        %v469 = vld [vmem:[%s255 + $0x548] sm:$0xff]
        %v470 = vld [vmem:[%s255 + $0x550] sm:$0xff]
        %v471 = vld [vmem:[%s255 + $0x558] sm:$0xff]
        %v472 = vld [vmem:[%s255 + $0x560] sm:$0xff]
        %v473 = vld [vmem:[%s255 + $0x568] sm:$0xff]
        %v474 = vld [vmem:[%s255 + $0x570] sm:$0xff]
        %v475 = vld [vmem:[%s255 + $0x578] sm:$0xff]
        %v476 = vld [vmem:[%s255 + $0x580] sm:$0xff]
        %v477 = vld [vmem:[%s255 + $0x588] sm:$0xff]
        %v478 = vld [vmem:[%s255 + $0x590] sm:$0xff]
        %v479 = vld [vmem:[%s255 + $0x598] sm:$0xff]
        %v480 = vld [vmem:[%s255 + $0x5a0] sm:$0xff]
        %v481 = vld [vmem:[%s255 + $0x5a8] sm:$0xff]
        %v482 = vld [vmem:[%s255 + $0x5b0] sm:$0xff]
        %v483 = vld [vmem:[%s255 + $0x5b8] sm:$0xff]
        %v484 = vld [vmem:[%s255 + $0x5c0] sm:$0xff]
        %v485 = vld [vmem:[%s255 + $0x5c8] sm:$0xff]
        %v486 = vld [vmem:[%s255 + $0x5d0] sm:$0xff]
        %v487 = vld [vmem:[%s255 + $0x5d8] sm:$0xff]
        %v488 = vld [vmem:[%s255 + $0x5e0] sm:$0xff]
        %v489 = vld [vmem:[%s255 + $0x5e8] sm:$0xff]
        %v490 = vld [vmem:[%s255 + $0x5f0] sm:$0xff]
        %v491 = vld [vmem:[%s255 + $0x5f8] sm:$0xff]
        %v492 = vld [vmem:[#allocation5] sm:$0xff]
        %v493 = vld [vmem:[#allocation5 + $0x8] sm:$0xff]
        %v494 = vld [vmem:[#allocation5 + $0x10] sm:$0xff]
        %v495 = vld [vmem:[#allocation5 + $0x18] sm:$0xff]
        %v496 = vld [vmem:[#allocation5 + $0x20] sm:$0xff]
        %v497 = vld [vmem:[#allocation5 + $0x28] sm:$0xff]
        %v498 = vld [vmem:[#allocation5 + $0x30] sm:$0xff]
        %v499 = vld [vmem:[#allocation5 + $0x38] sm:$0xff]
        %v500 = vld [vmem:[#allocation5 + $0x40] sm:$0xff]
        %v501 = vld [vmem:[#allocation5 + $0x48] sm:$0xff]
        %v502 = vld [vmem:[#allocation5 + $0x50] sm:$0xff]
        %v503 = vld [vmem:[#allocation5 + $0x58] sm:$0xff]
        %v504 = vld [vmem:[#allocation5 + $0x60] sm:$0xff]
        %v505 = vld [vmem:[#allocation5 + $0x68] sm:$0xff]
        %v506 = vld [vmem:[#allocation5 + $0x70] sm:$0xff]
        %v507 = vld [vmem:[#allocation5 + $0x78] sm:$0xff]
        %v508 = vld [vmem:[#allocation5 + $0x80] sm:$0xff]
        %v509 = vld [vmem:[#allocation5 + $0x88] sm:$0xff]
        %v510 = vld [vmem:[#allocation5 + $0x90] sm:$0xff]
        %v511 = vld [vmem:[#allocation5 + $0x98] sm:$0xff]
        %v512 = vld [vmem:[#allocation5 + $0xa0] sm:$0xff]
        %v513 = vld [vmem:[#allocation5 + $0xa8] sm:$0xff]
        %v514 = vld [vmem:[#allocation5 + $0xb0] sm:$0xff]
        %v515 = vld [vmem:[#allocation5 + $0xb8] sm:$0xff]
        %v516 = vld [vmem:[#allocation5 + $0xc0] sm:$0xff]
        %v517 = vld [vmem:[#allocation5 + $0xc8] sm:$0xff]
        %v518 = vld [vmem:[#allocation5 + $0xd0] sm:$0xff]
        %v519 = vld [vmem:[#allocation5 + $0xd8] sm:$0xff]
        %v520 = vld [vmem:[#allocation5 + $0xe0] sm:$0xff]
        %v521 = vld [vmem:[#allocation5 + $0xe8] sm:$0xff]
        %v522 = vld [vmem:[#allocation5 + $0xf0] sm:$0xff]
        %v523 = vld [vmem:[#allocation5 + $0xf8] sm:$0xff]
        %v524 = vld [vmem:[#allocation5 + $0x100] sm:$0xff]
        %v525 = vld [vmem:[#allocation5 + $0x108] sm:$0xff]
        %v526 = vld [vmem:[#allocation5 + $0x110] sm:$0xff]
        %v527 = vld [vmem:[#allocation5 + $0x118] sm:$0xff]
        %v528 = vld [vmem:[#allocation5 + $0x120] sm:$0xff]
        %v529 = vld [vmem:[#allocation5 + $0x128] sm:$0xff]
        %v530 = vld [vmem:[#allocation5 + $0x130] sm:$0xff]
        %v531 = vld [vmem:[#allocation5 + $0x138] sm:$0xff]
        %v532 = vld [vmem:[#allocation5 + $0x140] sm:$0xff]
        %v533 = vld [vmem:[#allocation5 + $0x148] sm:$0xff]
        %v534 = vld [vmem:[#allocation5 + $0x150] sm:$0xff]
        %v535 = vld [vmem:[#allocation5 + $0x158] sm:$0xff]
        %v536 = vld [vmem:[#allocation5 + $0x160] sm:$0xff]
        %v537 = vld [vmem:[#allocation5 + $0x168] sm:$0xff]
        %v538 = vld [vmem:[#allocation5 + $0x170] sm:$0xff]
        %v539 = vld [vmem:[#allocation5 + $0x178] sm:$0xff]
        %v540 = vld [vmem:[#allocation5 + $0x180] sm:$0xff]
        %v541 = vld [vmem:[#allocation5 + $0x188] sm:$0xff]
        %v542 = vld [vmem:[#allocation5 + $0x190] sm:$0xff]
        %v543 = vld [vmem:[#allocation5 + $0x198] sm:$0xff]
        %v544 = vld [vmem:[#allocation5 + $0x1a0] sm:$0xff]
        %v545 = vld [vmem:[#allocation5 + $0x1a8] sm:$0xff]
        %v546 = vld [vmem:[#allocation5 + $0x1b0] sm:$0xff]
        %v547 = vld [vmem:[#allocation5 + $0x1b8] sm:$0xff]
        %v548 = vld [vmem:[#allocation5 + $0x1c0] sm:$0xff]
        %v549 = vld [vmem:[#allocation5 + $0x1c8] sm:$0xff]
        %v550 = vld [vmem:[#allocation5 + $0x1d0] sm:$0xff]
        %v551 = vld [vmem:[#allocation5 + $0x1d8] sm:$0xff]
        %v552 = vld [vmem:[#allocation5 + $0x1e0] sm:$0xff]
        %v553 = vld [vmem:[#allocation5 + $0x1e8] sm:$0xff]
        %v554 = vld [vmem:[#allocation5 + $0x1f0] sm:$0xff]
        %v555 = vld [vmem:[#allocation5 + $0x1f8] sm:$0xff]
        %v556 = vld [vmem:[#allocation5 + $0x200] sm:$0xff]
        %v557 = vld [vmem:[#allocation5 + $0x208] sm:$0xff]
        %v558 = vld [vmem:[#allocation5 + $0x210] sm:$0xff]
        %v559 = vld [vmem:[#allocation5 + $0x218] sm:$0xff]
        %v560 = vld [vmem:[#allocation5 + $0x220] sm:$0xff]
        %v561 = vld [vmem:[#allocation5 + $0x228] sm:$0xff]
        %v562 = vld [vmem:[#allocation5 + $0x230] sm:$0xff]
        %v563 = vld [vmem:[#allocation5 + $0x238] sm:$0xff]
        %v564 = vld [vmem:[#allocation5 + $0x240] sm:$0xff]
        %v565 = vld [vmem:[#allocation5 + $0x248] sm:$0xff]
        %v566 = vld [vmem:[#allocation5 + $0x250] sm:$0xff]
        %v567 = vld [vmem:[#allocation5 + $0x258] sm:$0xff]
        %v568 = vld [vmem:[#allocation5 + $0x260] sm:$0xff]
        %v569 = vld [vmem:[#allocation5 + $0x268] sm:$0xff]
        %v570 = vld [vmem:[#allocation5 + $0x270] sm:$0xff]
        %v571 = vld [vmem:[#allocation5 + $0x278] sm:$0xff]
        %v572 = vld [vmem:[#allocation5 + $0x280] sm:$0xff]
        %v573 = vld [vmem:[#allocation5 + $0x288] sm:$0xff]
        %v574 = vld [vmem:[#allocation5 + $0x290] sm:$0xff]
        %v575 = vld [vmem:[#allocation5 + $0x298] sm:$0xff]
        %v576 = vld [vmem:[#allocation5 + $0x2a0] sm:$0xff]
        %v577 = vld [vmem:[#allocation5 + $0x2a8] sm:$0xff]
        %v578 = vld [vmem:[#allocation5 + $0x2b0] sm:$0xff]
        %v579 = vld [vmem:[#allocation5 + $0x2b8] sm:$0xff]
        %v580 = vld [vmem:[#allocation5 + $0x2c0] sm:$0xff]
        %v581 = vld [vmem:[#allocation5 + $0x2c8] sm:$0xff]
        %v582 = vld [vmem:[#allocation5 + $0x2d0] sm:$0xff]
        %v583 = vld [vmem:[#allocation5 + $0x2d8] sm:$0xff]
        %v584 = vld [vmem:[#allocation5 + $0x2e0] sm:$0xff]
        %v585 = vld [vmem:[#allocation5 + $0x2e8] sm:$0xff]
        %v586 = vld [vmem:[#allocation5 + $0x2f0] sm:$0xff]
        %v587 = vld [vmem:[#allocation5 + $0x2f8] sm:$0xff]
        %v588 = vld [vmem:[#allocation5 + $0x300] sm:$0xff]
        %v589 = vld [vmem:[#allocation5 + $0x308] sm:$0xff]
        %v590 = vld [vmem:[#allocation5 + $0x310] sm:$0xff]
        %v591 = vld [vmem:[#allocation5 + $0x318] sm:$0xff]
        %v592 = vld [vmem:[#allocation5 + $0x320] sm:$0xff]
        %v593 = vld [vmem:[#allocation5 + $0x328] sm:$0xff]
        %v594 = vld [vmem:[#allocation5 + $0x330] sm:$0xff]
        %v595 = vld [vmem:[#allocation5 + $0x338] sm:$0xff]
        %v596 = vld [vmem:[#allocation5 + $0x340] sm:$0xff]
        %v597 = vld [vmem:[#allocation5 + $0x348] sm:$0xff]
        %v598 = vld [vmem:[#allocation5 + $0x350] sm:$0xff]
        %v599 = vld [vmem:[#allocation5 + $0x358] sm:$0xff]
        %v600 = vld [vmem:[#allocation5 + $0x360] sm:$0xff]
        %v601 = vld [vmem:[#allocation5 + $0x368] sm:$0xff]
        %v602 = vld [vmem:[#allocation5 + $0x370] sm:$0xff]
        %v603 = vld [vmem:[#allocation5 + $0x378] sm:$0xff]
        %v604 = vld [vmem:[#allocation5 + $0x380] sm:$0xff]
        %v605 = vld [vmem:[#allocation5 + $0x388] sm:$0xff]
        %v606 = vld [vmem:[#allocation5 + $0x390] sm:$0xff]
        %v607 = vld [vmem:[#allocation5 + $0x398] sm:$0xff]
        %v608 = vld [vmem:[#allocation5 + $0x3a0] sm:$0xff]
        %v609 = vld [vmem:[#allocation5 + $0x3a8] sm:$0xff]
        %v610 = vld [vmem:[#allocation5 + $0x3b0] sm:$0xff]
        %v611 = vld [vmem:[#allocation5 + $0x3b8] sm:$0xff]
        %v612 = vld [vmem:[#allocation5 + $0x3c0] sm:$0xff]
        %v613 = vld [vmem:[#allocation5 + $0x3c8] sm:$0xff]
        %v614 = vld [vmem:[#allocation5 + $0x3d0] sm:$0xff]
        %v615 = vld [vmem:[#allocation5 + $0x3d8] sm:$0xff]
        %v616 = vld [vmem:[#allocation5 + $0x3e0] sm:$0xff]
        %v617 = vld [vmem:[#allocation5 + $0x3e8] sm:$0xff]
        %v618 = vld [vmem:[#allocation5 + $0x3f0] sm:$0xff]
        %v619 = vld [vmem:[#allocation5 + $0x3f8] sm:$0xff]
        %v620 = vld [vmem:[#allocation7] sm:$0xf]
        %v621 = vld [vmem:[#allocation8] sm:$0xff]
        %v622 = vld [vmem:[#allocation8 + $0x8] sm:$0xff]
        %v623 = vld [vmem:[#allocation8 + $0x10] sm:$0xff]
        %v624 = vld [vmem:[#allocation8 + $0x18] sm:$0xff]
        %v625 = vld [vmem:[#allocation8 + $0x20] sm:$0xff]
        %v626 = vld [vmem:[#allocation8 + $0x28] sm:$0xff]
        %v627 = vld [vmem:[#allocation8 + $0x30] sm:$0xff]
        %v628 = vld [vmem:[#allocation8 + $0x38] sm:$0xff]
        %v629 = vld [vmem:[#allocation8 + $0x40] sm:$0xff]
        %v630 = vld [vmem:[#allocation8 + $0x48] sm:$0xff]
        %v631 = vld [vmem:[#allocation8 + $0x50] sm:$0xff]
        %v632 = vld [vmem:[#allocation8 + $0x58] sm:$0xff]
        %v633 = vld [vmem:[#allocation8 + $0x60] sm:$0xff]
        %v634 = vld [vmem:[#allocation8 + $0x68] sm:$0xff]
        %v635 = vld [vmem:[#allocation8 + $0x70] sm:$0xff]
        %v636 = vld [vmem:[#allocation8 + $0x78] sm:$0xff]
        %v637 = vld [vmem:[#allocation8 + $0x80] sm:$0xff]
        %v638 = vld [vmem:[#allocation8 + $0x88] sm:$0xff]
        %v639 = vld [vmem:[#allocation8 + $0x90] sm:$0xff]
        %v640 = vld [vmem:[#allocation8 + $0x98] sm:$0xff]
        %v641 = vld [vmem:[#allocation8 + $0xa0] sm:$0xff]
        %v642 = vld [vmem:[#allocation8 + $0xa8] sm:$0xff]
        %v643 = vld [vmem:[#allocation8 + $0xb0] sm:$0xff]
        %v644 = vld [vmem:[#allocation8 + $0xb8] sm:$0xff]
        %v645 = vld [vmem:[#allocation8 + $0xc0] sm:$0xff]
        %v646 = vld [vmem:[#allocation8 + $0xc8] sm:$0xff]
        %v647 = vld [vmem:[#allocation8 + $0xd0] sm:$0xff]
        %v648 = vld [vmem:[#allocation8 + $0xd8] sm:$0xff]
        %v649 = vld [vmem:[#allocation8 + $0xe0] sm:$0xff]
        %v650 = vld [vmem:[#allocation8 + $0xe8] sm:$0xff]
        %v651 = vld [vmem:[#allocation8 + $0xf0] sm:$0xff]
        %v652 = vld [vmem:[#allocation8 + $0xf8] sm:$0xff]
        %v653 = vld [vmem:[#allocation8 + $0x100] sm:$0xff]
        %v654 = vld [vmem:[#allocation8 + $0x108] sm:$0xff]
        %v655 = vld [vmem:[#allocation8 + $0x110] sm:$0xff]
        %v656 = vld [vmem:[#allocation8 + $0x118] sm:$0xff]
        %v657 = vld [vmem:[#allocation8 + $0x120] sm:$0xff]
        %v658 = vld [vmem:[#allocation8 + $0x128] sm:$0xff]
        %v659 = vld [vmem:[#allocation8 + $0x130] sm:$0xff]
        %v660 = vld [vmem:[#allocation8 + $0x138] sm:$0xff]
        %v661 = vld [vmem:[#allocation8 + $0x140] sm:$0xff]
        %v662 = vld [vmem:[#allocation8 + $0x148] sm:$0xff]
        %v663 = vld [vmem:[#allocation8 + $0x150] sm:$0xff]
        %v664 = vld [vmem:[#allocation8 + $0x158] sm:$0xff]
        %v665 = vld [vmem:[#allocation8 + $0x160] sm:$0xff]
        %v666 = vld [vmem:[#allocation8 + $0x168] sm:$0xff]
        %v667 = vld [vmem:[#allocation8 + $0x170] sm:$0xff]
        %v668 = vld [vmem:[#allocation8 + $0x178] sm:$0xff]
        %v669 = vld [vmem:[#allocation8 + $0x180] sm:$0xff]
        %v670 = vld [vmem:[#allocation8 + $0x188] sm:$0xff]
        %v671 = vld [vmem:[#allocation8 + $0x190] sm:$0xff]
        %v672 = vld [vmem:[#allocation8 + $0x198] sm:$0xff]
        %v673 = vld [vmem:[#allocation8 + $0x1a0] sm:$0xff]
        %v674 = vld [vmem:[#allocation8 + $0x1a8] sm:$0xff]
        %v675 = vld [vmem:[#allocation8 + $0x1b0] sm:$0xff]
        %v676 = vld [vmem:[#allocation8 + $0x1b8] sm:$0xff]
        %v677 = vld [vmem:[#allocation8 + $0x1c0] sm:$0xff]
        %v678 = vld [vmem:[#allocation8 + $0x1c8] sm:$0xff]
        %v679 = vld [vmem:[#allocation8 + $0x1d0] sm:$0xff]
        %v680 = vld [vmem:[#allocation8 + $0x1d8] sm:$0xff]
        %v681 = vld [vmem:[#allocation8 + $0x1e0] sm:$0xff]
        %v682 = vld [vmem:[#allocation8 + $0x1e8] sm:$0xff]
        %v683 = vld [vmem:[#allocation8 + $0x1f0] sm:$0xff]
        %v684 = vld [vmem:[#allocation8 + $0x1f8] sm:$0xff]
        %v685 = vld [vmem:[#allocation8 + $0x200] sm:$0xff]
        %v686 = vld [vmem:[#allocation8 + $0x208] sm:$0xff]
        %v687 = vld [vmem:[#allocation8 + $0x210] sm:$0xff]
        %v688 = vld [vmem:[#allocation8 + $0x218] sm:$0xff]
        %v689 = vld [vmem:[#allocation8 + $0x220] sm:$0xff]
        %v690 = vld [vmem:[#allocation8 + $0x228] sm:$0xff]
        %v691 = vld [vmem:[#allocation8 + $0x230] sm:$0xff]
        %v692 = vld [vmem:[#allocation8 + $0x238] sm:$0xff]
        %v693 = vld [vmem:[#allocation8 + $0x240] sm:$0xff]
        %v694 = vld [vmem:[#allocation8 + $0x248] sm:$0xff]
        %v695 = vld [vmem:[#allocation8 + $0x250] sm:$0xff]
        %v696 = vld [vmem:[#allocation8 + $0x258] sm:$0xff]
        %v697 = vld [vmem:[#allocation8 + $0x260] sm:$0xff]
        %v698 = vld [vmem:[#allocation8 + $0x268] sm:$0xff]
        %v699 = vld [vmem:[#allocation8 + $0x270] sm:$0xff]
        %v700 = vld [vmem:[#allocation8 + $0x278] sm:$0xff]
        %v701 = vld [vmem:[#allocation8 + $0x280] sm:$0xff]
        %v702 = vld [vmem:[#allocation8 + $0x288] sm:$0xff]
        %v703 = vld [vmem:[#allocation8 + $0x290] sm:$0xff]
        %v704 = vld [vmem:[#allocation8 + $0x298] sm:$0xff]
        %v705 = vld [vmem:[#allocation8 + $0x2a0] sm:$0xff]
        %v706 = vld [vmem:[#allocation8 + $0x2a8] sm:$0xff]
        %v707 = vld [vmem:[#allocation8 + $0x2b0] sm:$0xff]
        %v708 = vld [vmem:[#allocation8 + $0x2b8] sm:$0xff]
        %v709 = vld [vmem:[#allocation8 + $0x2c0] sm:$0xff]
        %v710 = vld [vmem:[#allocation8 + $0x2c8] sm:$0xff]
        %v711 = vld [vmem:[#allocation8 + $0x2d0] sm:$0xff]
        %v712 = vld [vmem:[#allocation8 + $0x2d8] sm:$0xff]
        %v713 = vld [vmem:[#allocation8 + $0x2e0] sm:$0xff]
        %v714 = vld [vmem:[#allocation8 + $0x2e8] sm:$0xff]
        %v715 = vld [vmem:[#allocation8 + $0x2f0] sm:$0xff]
        %v716 = vld [vmem:[#allocation8 + $0x2f8] sm:$0xff]
        %v717 = vld [vmem:[#allocation8 + $0x300] sm:$0xff]
        %v718 = vld [vmem:[#allocation8 + $0x308] sm:$0xff]
        %v719 = vld [vmem:[#allocation8 + $0x310] sm:$0xff]
        %v720 = vld [vmem:[#allocation8 + $0x318] sm:$0xff]
        %v721 = vld [vmem:[#allocation8 + $0x320] sm:$0xff]
        %v722 = vld [vmem:[#allocation8 + $0x328] sm:$0xff]
        %v723 = vld [vmem:[#allocation8 + $0x330] sm:$0xff]
        %v724 = vld [vmem:[#allocation8 + $0x338] sm:$0xff]
        %v725 = vld [vmem:[#allocation8 + $0x340] sm:$0xff]
        %v726 = vld [vmem:[#allocation8 + $0x348] sm:$0xff]
        %v727 = vld [vmem:[#allocation8 + $0x350] sm:$0xff]
        %v728 = vld [vmem:[#allocation8 + $0x358] sm:$0xff]
        %v729 = vld [vmem:[#allocation8 + $0x360] sm:$0xff]
        %v730 = vld [vmem:[#allocation8 + $0x368] sm:$0xff]
        %v731 = vld [vmem:[#allocation8 + $0x370] sm:$0xff]
        %v732 = vld [vmem:[#allocation8 + $0x378] sm:$0xff]
        %v733 = vld [vmem:[#allocation8 + $0x380] sm:$0xff]
        %v734 = vld [vmem:[#allocation8 + $0x388] sm:$0xff]
        %v735 = vld [vmem:[#allocation8 + $0x390] sm:$0xff]
        %v736 = vld [vmem:[#allocation8 + $0x398] sm:$0xff]
        %v737 = vld [vmem:[#allocation8 + $0x3a0] sm:$0xff]
        %v738 = vld [vmem:[#allocation8 + $0x3a8] sm:$0xff]
        %v739 = vld [vmem:[#allocation8 + $0x3b0] sm:$0xff]
        %v740 = vld [vmem:[#allocation8 + $0x3b8] sm:$0xff]
        %v741 = vld [vmem:[#allocation8 + $0x3c0] sm:$0xff]
        %v742 = vld [vmem:[#allocation8 + $0x3c8] sm:$0xff]
        %v743 = vld [vmem:[#allocation8 + $0x3d0] sm:$0xff]
        %v744 = vld [vmem:[#allocation8 + $0x3d8] sm:$0xff]
        %v745 = vld [vmem:[#allocation8 + $0x3e0] sm:$0xff]
        %v746 = vld [vmem:[#allocation8 + $0x3e8] sm:$0xff]
        %v747 = vld [vmem:[#allocation8 + $0x3f0] sm:$0xff]
        %v748 = vld [vmem:[#allocation8 + $0x3f8] sm:$0xff]
        %v749 = vld [vmem:[#allocation10] sm:$0xf]
        %v750 = vpack.c.bf16 %v304, %v300
        %v751 = vpack.c.bf16 %v305, %v301
        %v752 = vpack.c.bf16 %v306, %v302
        %v753 = vpack.c.bf16 %v307, %v303
        %v754 = vpack.c.bf16 %v312, %v308
        %v755 = vpack.c.bf16 %v313, %v309
        %v756 = vpack.c.bf16 %v314, %v310
        %v757 = vpack.c.bf16 %v315, %v311
        %v758 = vpack.c.bf16 %v320, %v316
        %v759 = vpack.c.bf16 %v321, %v317
        %v760 = vpack.c.bf16 %v322, %v318
        %v761 = vpack.c.bf16 %v323, %v319
        %v762 = vpack.c.bf16 %v328, %v324
        %v763 = vpack.c.bf16 %v329, %v325
        %v764 = vpack.c.bf16 %v330, %v326
        %v765 = vpack.c.bf16 %v331, %v327
        %v766 = vpack.c.bf16 %v336, %v332
        %v767 = vpack.c.bf16 %v337, %v333
        %v768 = vpack.c.bf16 %v338, %v334
        %v769 = vpack.c.bf16 %v339, %v335
        %v770 = vpack.c.bf16 %v344, %v340
        %v771 = vpack.c.bf16 %v345, %v341
        %v772 = vpack.c.bf16 %v346, %v342
        %v773 = vpack.c.bf16 %v347, %v343
        %v774 = vpack.c.bf16 %v352, %v348
        %v775 = vpack.c.bf16 %v353, %v349
        %v776 = vpack.c.bf16 %v354, %v350
        %v777 = vpack.c.bf16 %v355, %v351
        %v778 = vpack.c.bf16 %v360, %v356
        %v779 = vpack.c.bf16 %v361, %v357
        %v780 = vpack.c.bf16 %v362, %v358
        %v781 = vpack.c.bf16 %v363, %v359
        %v782 = vpack.c.bf16 %v368, %v364
        %v783 = vpack.c.bf16 %v369, %v365
        %v784 = vpack.c.bf16 %v370, %v366
        %v785 = vpack.c.bf16 %v371, %v367
        %v786 = vpack.c.bf16 %v376, %v372
        %v787 = vpack.c.bf16 %v377, %v373
        %v788 = vpack.c.bf16 %v378, %v374
        %v789 = vpack.c.bf16 %v379, %v375
        %v790 = vpack.c.bf16 %v384, %v380
        %v791 = vpack.c.bf16 %v385, %v381
        %v792 = vpack.c.bf16 %v386, %v382
        %v793 = vpack.c.bf16 %v387, %v383
        %v794 = vpack.c.bf16 %v392, %v388
        %v795 = vpack.c.bf16 %v393, %v389
        %v796 = vpack.c.bf16 %v394, %v390
        %v797 = vpack.c.bf16 %v395, %v391
        %v798 = vpack.c.bf16 %v400, %v396
        %v799 = vpack.c.bf16 %v401, %v397
        %v800 = vpack.c.bf16 %v402, %v398
        %v801 = vpack.c.bf16 %v403, %v399
        %v802 = vpack.c.bf16 %v408, %v404
        %v803 = vpack.c.bf16 %v409, %v405
        %v804 = vpack.c.bf16 %v410, %v406
        %v805 = vpack.c.bf16 %v411, %v407
        %v806 = vpack.c.bf16 %v416, %v412
        %v807 = vpack.c.bf16 %v417, %v413
        %v808 = vpack.c.bf16 %v418, %v414
        %v809 = vpack.c.bf16 %v419, %v415
        %v810 = vpack.c.bf16 %v424, %v420
        %v811 = vpack.c.bf16 %v425, %v421
        %v812 = vpack.c.bf16 %v426, %v422
        %v813 = vpack.c.bf16 %v427, %v423
        %v814 = vpack.c.bf16 %v432, %v428
        %v815 = vpack.c.bf16 %v433, %v429
        %v816 = vpack.c.bf16 %v434, %v430
        %v817 = vpack.c.bf16 %v435, %v431
        %v818 = vpack.c.bf16 %v440, %v436
        %v819 = vpack.c.bf16 %v441, %v437
        %v820 = vpack.c.bf16 %v442, %v438
        %v821 = vpack.c.bf16 %v443, %v439
        %v822 = vpack.c.bf16 %v448, %v444
        %v823 = vpack.c.bf16 %v449, %v445
        %v824 = vpack.c.bf16 %v450, %v446
        %v825 = vpack.c.bf16 %v451, %v447
        %v826 = vpack.c.bf16 %v456, %v452
        %v827 = vpack.c.bf16 %v457, %v453
        %v828 = vpack.c.bf16 %v458, %v454
        %v829 = vpack.c.bf16 %v459, %v455
        %v830 = vpack.c.bf16 %v464, %v460
        %v831 = vpack.c.bf16 %v465, %v461
        %v832 = vpack.c.bf16 %v466, %v462
        %v833 = vpack.c.bf16 %v467, %v463
        %v834 = vpack.c.bf16 %v472, %v468
        %v835 = vpack.c.bf16 %v473, %v469
        %v836 = vpack.c.bf16 %v474, %v470
        %v837 = vpack.c.bf16 %v475, %v471
        %v838 = vpack.c.bf16 %v480, %v476
        %v839 = vpack.c.bf16 %v481, %v477
        %v840 = vpack.c.bf16 %v482, %v478
        %v841 = vpack.c.bf16 %v483, %v479
        %v842 = vpack.c.bf16 %v488, %v484
        %v843 = vpack.c.bf16 %v489, %v485
        %v844 = vpack.c.bf16 %v490, %v486
        %v845 = vpack.c.bf16 %v491, %v487
        %v847 = vlaneseq
        %v848 = vshrl.u32 %v847, 7
        %v849 = vsub.s32 0, %v848
        %v850 = vrot.slane %v620, %v849
        %v851 = vlaneseq
        %v852 = vshrl.u32 %v851, 7
        %v853 = vsub.s32 1, %v852
        %v854 = vrot.slane %v620, %v853
        %v855 = vlaneseq
        %v856 = vshrl.u32 %v855, 7
        %v857 = vsub.s32 2, %v856
        %v858 = vrot.slane %v620, %v857
        %v859 = vlaneseq
        %v860 = vshrl.u32 %v859, 7
        %v861 = vsub.s32 3, %v860
        %v862 = vrot.slane %v620, %v861
        %v995 = vunpack.c.l.b16 %v492
        %v996 = vunpack.c.h.b16 %v492
        %v997 = vunpack.c.l.b16 %v493
        %v998 = vunpack.c.h.b16 %v493
        %v999 = vunpack.c.l.b16 %v494
        %v1000 = vunpack.c.h.b16 %v494
        %v1001 = vunpack.c.l.b16 %v495
        %v1002 = vunpack.c.h.b16 %v495
        %v1003 = vunpack.c.l.b16 %v496
        %v1004 = vunpack.c.h.b16 %v496
        %v1005 = vunpack.c.l.b16 %v497
        %v1006 = vunpack.c.h.b16 %v497
        %v1007 = vunpack.c.l.b16 %v498
        %v1008 = vunpack.c.h.b16 %v498
        %v1009 = vunpack.c.l.b16 %v499
        %v1010 = vunpack.c.h.b16 %v499
        %v1011 = vunpack.c.l.b16 %v500
        %v1012 = vunpack.c.h.b16 %v500
        %v1013 = vunpack.c.l.b16 %v501
        %v1014 = vunpack.c.h.b16 %v501
        %v1015 = vunpack.c.l.b16 %v502
        %v1016 = vunpack.c.h.b16 %v502
        %v1017 = vunpack.c.l.b16 %v503
        %v1018 = vunpack.c.h.b16 %v503
        %v1019 = vunpack.c.l.b16 %v504
        %v1020 = vunpack.c.h.b16 %v504
        %v1021 = vunpack.c.l.b16 %v505
        %v1022 = vunpack.c.h.b16 %v505
        %v1023 = vunpack.c.l.b16 %v506
        %v1024 = vunpack.c.h.b16 %v506
        %v1025 = vunpack.c.l.b16 %v507
        %v1026 = vunpack.c.h.b16 %v507
        %v1027 = vunpack.c.l.b16 %v508
        %v1028 = vunpack.c.h.b16 %v508
        %v1029 = vunpack.c.l.b16 %v509
        %v1030 = vunpack.c.h.b16 %v509
        %v1031 = vunpack.c.l.b16 %v510
        %v1032 = vunpack.c.h.b16 %v510
        %v1033 = vunpack.c.l.b16 %v511
        %v1034 = vunpack.c.h.b16 %v511
        %v1035 = vunpack.c.l.b16 %v512
        %v1036 = vunpack.c.h.b16 %v512
        %v1037 = vunpack.c.l.b16 %v513
        %v1038 = vunpack.c.h.b16 %v513
        %v1039 = vunpack.c.l.b16 %v514
        %v1040 = vunpack.c.h.b16 %v514
        %v1041 = vunpack.c.l.b16 %v515
        %v1042 = vunpack.c.h.b16 %v515
        %v1043 = vunpack.c.l.b16 %v516
        %v1044 = vunpack.c.h.b16 %v516
        %v1045 = vunpack.c.l.b16 %v517
        %v1046 = vunpack.c.h.b16 %v517
        %v1047 = vunpack.c.l.b16 %v518
        %v1048 = vunpack.c.h.b16 %v518
        %v1049 = vunpack.c.l.b16 %v519
        %v1050 = vunpack.c.h.b16 %v519
        %v1051 = vunpack.c.l.b16 %v520
        %v1052 = vunpack.c.h.b16 %v520
        %v1053 = vunpack.c.l.b16 %v521
        %v1054 = vunpack.c.h.b16 %v521
        %v1055 = vunpack.c.l.b16 %v522
        %v1056 = vunpack.c.h.b16 %v522
        %v1057 = vunpack.c.l.b16 %v523
        %v1058 = vunpack.c.h.b16 %v523
        %v1059 = vunpack.c.l.b16 %v524
        %v1060 = vunpack.c.h.b16 %v524
        %v1061 = vunpack.c.l.b16 %v525
        %v1062 = vunpack.c.h.b16 %v525
        %v1063 = vunpack.c.l.b16 %v526
        %v1064 = vunpack.c.h.b16 %v526
        %v1065 = vunpack.c.l.b16 %v527
        %v1066 = vunpack.c.h.b16 %v527
        %v1067 = vunpack.c.l.b16 %v528
        %v1068 = vunpack.c.h.b16 %v528
        %v1069 = vunpack.c.l.b16 %v529
        %v1070 = vunpack.c.h.b16 %v529
        %v1071 = vunpack.c.l.b16 %v530
        %v1072 = vunpack.c.h.b16 %v530
        %v1073 = vunpack.c.l.b16 %v531
        %v1074 = vunpack.c.h.b16 %v531
        %v1075 = vunpack.c.l.b16 %v532
        %v1076 = vunpack.c.h.b16 %v532
        %v1077 = vunpack.c.l.b16 %v533
        %v1078 = vunpack.c.h.b16 %v533
        %v1079 = vunpack.c.l.b16 %v534
        %v1080 = vunpack.c.h.b16 %v534
        %v1081 = vunpack.c.l.b16 %v535
        %v1082 = vunpack.c.h.b16 %v535
        %v1083 = vunpack.c.l.b16 %v536
        %v1084 = vunpack.c.h.b16 %v536
        %v1085 = vunpack.c.l.b16 %v537
        %v1086 = vunpack.c.h.b16 %v537
        %v1087 = vunpack.c.l.b16 %v538
        %v1088 = vunpack.c.h.b16 %v538
        %v1089 = vunpack.c.l.b16 %v539
        %v1090 = vunpack.c.h.b16 %v539
        %v1091 = vunpack.c.l.b16 %v540
        %v1092 = vunpack.c.h.b16 %v540
        %v1093 = vunpack.c.l.b16 %v541
        %v1094 = vunpack.c.h.b16 %v541
        %v1095 = vunpack.c.l.b16 %v542
        %v1096 = vunpack.c.h.b16 %v542
        %v1097 = vunpack.c.l.b16 %v543
        %v1098 = vunpack.c.h.b16 %v543
        %v1099 = vunpack.c.l.b16 %v544
        %v1100 = vunpack.c.h.b16 %v544
        %v1101 = vunpack.c.l.b16 %v545
        %v1102 = vunpack.c.h.b16 %v545
        %v1103 = vunpack.c.l.b16 %v546
        %v1104 = vunpack.c.h.b16 %v546
        %v1105 = vunpack.c.l.b16 %v547
        %v1106 = vunpack.c.h.b16 %v547
        %v1107 = vunpack.c.l.b16 %v548
        %v1108 = vunpack.c.h.b16 %v548
        %v1109 = vunpack.c.l.b16 %v549
        %v1110 = vunpack.c.h.b16 %v549
        %v1111 = vunpack.c.l.b16 %v550
        %v1112 = vunpack.c.h.b16 %v550
        %v1113 = vunpack.c.l.b16 %v551
        %v1114 = vunpack.c.h.b16 %v551
        %v1115 = vunpack.c.l.b16 %v552
        %v1116 = vunpack.c.h.b16 %v552
        %v1117 = vunpack.c.l.b16 %v553
        %v1118 = vunpack.c.h.b16 %v553
        %v1119 = vunpack.c.l.b16 %v554
        %v1120 = vunpack.c.h.b16 %v554
        %v1121 = vunpack.c.l.b16 %v555
        %v1122 = vunpack.c.h.b16 %v555
        %v1123 = vunpack.c.l.b16 %v556
        %v1124 = vunpack.c.h.b16 %v556
        %v1125 = vunpack.c.l.b16 %v557
        %v1126 = vunpack.c.h.b16 %v557
        %v1127 = vunpack.c.l.b16 %v558
        %v1128 = vunpack.c.h.b16 %v558
        %v1129 = vunpack.c.l.b16 %v559
        %v1130 = vunpack.c.h.b16 %v559
        %v1131 = vunpack.c.l.b16 %v560
        %v1132 = vunpack.c.h.b16 %v560
        %v1133 = vunpack.c.l.b16 %v561
        %v1134 = vunpack.c.h.b16 %v561
        %v1135 = vunpack.c.l.b16 %v562
        %v1136 = vunpack.c.h.b16 %v562
        %v1137 = vunpack.c.l.b16 %v563
        %v1138 = vunpack.c.h.b16 %v563
        %v1139 = vunpack.c.l.b16 %v564
        %v1140 = vunpack.c.h.b16 %v564
        %v1141 = vunpack.c.l.b16 %v565
        %v1142 = vunpack.c.h.b16 %v565
        %v1143 = vunpack.c.l.b16 %v566
        %v1144 = vunpack.c.h.b16 %v566
        %v1145 = vunpack.c.l.b16 %v567
        %v1146 = vunpack.c.h.b16 %v567
        %v1147 = vunpack.c.l.b16 %v568
        %v1148 = vunpack.c.h.b16 %v568
        %v1149 = vunpack.c.l.b16 %v569
        %v1150 = vunpack.c.h.b16 %v569
        %v1151 = vunpack.c.l.b16 %v570
        %v1152 = vunpack.c.h.b16 %v570
        %v1153 = vunpack.c.l.b16 %v571
        %v1154 = vunpack.c.h.b16 %v571
        %v1155 = vunpack.c.l.b16 %v572
        %v1156 = vunpack.c.h.b16 %v572
        %v1157 = vunpack.c.l.b16 %v573
        %v1158 = vunpack.c.h.b16 %v573
        %v1159 = vunpack.c.l.b16 %v574
        %v1160 = vunpack.c.h.b16 %v574
        %v1161 = vunpack.c.l.b16 %v575
        %v1162 = vunpack.c.h.b16 %v575
        %v1163 = vunpack.c.l.b16 %v576
        %v1164 = vunpack.c.h.b16 %v576
        %v1165 = vunpack.c.l.b16 %v577
        %v1166 = vunpack.c.h.b16 %v577
        %v1167 = vunpack.c.l.b16 %v578
        %v1168 = vunpack.c.h.b16 %v578
        %v1169 = vunpack.c.l.b16 %v579
        %v1170 = vunpack.c.h.b16 %v579
        %v1171 = vunpack.c.l.b16 %v580
        %v1172 = vunpack.c.h.b16 %v580
        %v1173 = vunpack.c.l.b16 %v581
        %v1174 = vunpack.c.h.b16 %v581
        %v1175 = vunpack.c.l.b16 %v582
        %v1176 = vunpack.c.h.b16 %v582
        %v1177 = vunpack.c.l.b16 %v583
        %v1178 = vunpack.c.h.b16 %v583
        %v1179 = vunpack.c.l.b16 %v584
        %v1180 = vunpack.c.h.b16 %v584
        %v1181 = vunpack.c.l.b16 %v585
        %v1182 = vunpack.c.h.b16 %v585
        %v1183 = vunpack.c.l.b16 %v586
        %v1184 = vunpack.c.h.b16 %v586
        %v1185 = vunpack.c.l.b16 %v587
        %v1186 = vunpack.c.h.b16 %v587
        %v1187 = vunpack.c.l.b16 %v588
        %v1188 = vunpack.c.h.b16 %v588
        %v1189 = vunpack.c.l.b16 %v589
        %v1190 = vunpack.c.h.b16 %v589
        %v1191 = vunpack.c.l.b16 %v590
        %v1192 = vunpack.c.h.b16 %v590
        %v1193 = vunpack.c.l.b16 %v591
        %v1194 = vunpack.c.h.b16 %v591
        %v1195 = vunpack.c.l.b16 %v592
        %v1196 = vunpack.c.h.b16 %v592
        %v1197 = vunpack.c.l.b16 %v593
        %v1198 = vunpack.c.h.b16 %v593
        %v1199 = vunpack.c.l.b16 %v594
        %v1200 = vunpack.c.h.b16 %v594
        %v1201 = vunpack.c.l.b16 %v595
        %v1202 = vunpack.c.h.b16 %v595
        %v1203 = vunpack.c.l.b16 %v596
        %v1204 = vunpack.c.h.b16 %v596
        %v1205 = vunpack.c.l.b16 %v597
        %v1206 = vunpack.c.h.b16 %v597
        %v1207 = vunpack.c.l.b16 %v598
        %v1208 = vunpack.c.h.b16 %v598
        %v1209 = vunpack.c.l.b16 %v599
        %v1210 = vunpack.c.h.b16 %v599
        %v1211 = vunpack.c.l.b16 %v600
        %v1212 = vunpack.c.h.b16 %v600
        %v1213 = vunpack.c.l.b16 %v601
        %v1214 = vunpack.c.h.b16 %v601
        %v1215 = vunpack.c.l.b16 %v602
        %v1216 = vunpack.c.h.b16 %v602
        %v1217 = vunpack.c.l.b16 %v603
        %v1218 = vunpack.c.h.b16 %v603
        %v1219 = vunpack.c.l.b16 %v604
        %v1220 = vunpack.c.h.b16 %v604
        %v1221 = vunpack.c.l.b16 %v605
        %v1222 = vunpack.c.h.b16 %v605
        %v1223 = vunpack.c.l.b16 %v606
        %v1224 = vunpack.c.h.b16 %v606
        %v1225 = vunpack.c.l.b16 %v607
        %v1226 = vunpack.c.h.b16 %v607
        %v1227 = vunpack.c.l.b16 %v608
        %v1228 = vunpack.c.h.b16 %v608
        %v1229 = vunpack.c.l.b16 %v609
        %v1230 = vunpack.c.h.b16 %v609
        %v1231 = vunpack.c.l.b16 %v610
        %v1232 = vunpack.c.h.b16 %v610
        %v1233 = vunpack.c.l.b16 %v611
        %v1234 = vunpack.c.h.b16 %v611
        %v1235 = vunpack.c.l.b16 %v612
        %v1236 = vunpack.c.h.b16 %v612
        %v1237 = vunpack.c.l.b16 %v613
        %v1238 = vunpack.c.h.b16 %v613
        %v1239 = vunpack.c.l.b16 %v614
        %v1240 = vunpack.c.h.b16 %v614
        %v1241 = vunpack.c.l.b16 %v615
        %v1242 = vunpack.c.h.b16 %v615
        %v1243 = vunpack.c.l.b16 %v616
        %v1244 = vunpack.c.h.b16 %v616
        %v1245 = vunpack.c.l.b16 %v617
        %v1246 = vunpack.c.h.b16 %v617
        %v1247 = vunpack.c.l.b16 %v618
        %v1248 = vunpack.c.h.b16 %v618
        %v1249 = vunpack.c.l.b16 %v619
        %v1250 = vunpack.c.h.b16 %v619
        %v1251 = vpack.c.b16 %v999, %v995
        %v1252 = vpack.c.b16 %v1000, %v996
        %v1253 = vpack.c.b16 %v1001, %v997
        %v1254 = vpack.c.b16 %v1002, %v998
        %v1255 = vpack.c.b16 %v1007, %v1003
        %v1256 = vpack.c.b16 %v1008, %v1004
        %v1257 = vpack.c.b16 %v1009, %v1005
        %v1258 = vpack.c.b16 %v1010, %v1006
        %v1259 = vpack.c.b16 %v1015, %v1011
        %v1260 = vpack.c.b16 %v1016, %v1012
        %v1261 = vpack.c.b16 %v1017, %v1013
        %v1262 = vpack.c.b16 %v1018, %v1014
        %v1263 = vpack.c.b16 %v1023, %v1019
        %v1264 = vpack.c.b16 %v1024, %v1020
        %v1265 = vpack.c.b16 %v1025, %v1021
        %v1266 = vpack.c.b16 %v1026, %v1022
        %v1267 = vpack.c.b16 %v1031, %v1027
        %v1268 = vpack.c.b16 %v1032, %v1028
        %v1269 = vpack.c.b16 %v1033, %v1029
        %v1270 = vpack.c.b16 %v1034, %v1030
        %v1271 = vpack.c.b16 %v1039, %v1035
        %v1272 = vpack.c.b16 %v1040, %v1036
        %v1273 = vpack.c.b16 %v1041, %v1037
        %v1274 = vpack.c.b16 %v1042, %v1038
        %v1275 = vpack.c.b16 %v1047, %v1043
        %v1276 = vpack.c.b16 %v1048, %v1044
        %v1277 = vpack.c.b16 %v1049, %v1045
        %v1278 = vpack.c.b16 %v1050, %v1046
        %v1279 = vpack.c.b16 %v1055, %v1051
        %v1280 = vpack.c.b16 %v1056, %v1052
        %v1281 = vpack.c.b16 %v1057, %v1053
        %v1282 = vpack.c.b16 %v1058, %v1054
        %v1283 = vpack.c.b16 %v1063, %v1059
        %v1284 = vpack.c.b16 %v1064, %v1060
        %v1285 = vpack.c.b16 %v1065, %v1061
        %v1286 = vpack.c.b16 %v1066, %v1062
        %v1287 = vpack.c.b16 %v1071, %v1067
        %v1288 = vpack.c.b16 %v1072, %v1068
        %v1289 = vpack.c.b16 %v1073, %v1069
        %v1290 = vpack.c.b16 %v1074, %v1070
        %v1291 = vpack.c.b16 %v1079, %v1075
        %v1292 = vpack.c.b16 %v1080, %v1076
        %v1293 = vpack.c.b16 %v1081, %v1077
        %v1294 = vpack.c.b16 %v1082, %v1078
        %v1295 = vpack.c.b16 %v1087, %v1083
        %v1296 = vpack.c.b16 %v1088, %v1084
        %v1297 = vpack.c.b16 %v1089, %v1085
        %v1298 = vpack.c.b16 %v1090, %v1086
        %v1299 = vpack.c.b16 %v1095, %v1091
        %v1300 = vpack.c.b16 %v1096, %v1092
        %v1301 = vpack.c.b16 %v1097, %v1093
        %v1302 = vpack.c.b16 %v1098, %v1094
        %v1303 = vpack.c.b16 %v1103, %v1099
        %v1304 = vpack.c.b16 %v1104, %v1100
        %v1305 = vpack.c.b16 %v1105, %v1101
        %v1306 = vpack.c.b16 %v1106, %v1102
        %v1307 = vpack.c.b16 %v1111, %v1107
        %v1308 = vpack.c.b16 %v1112, %v1108
        %v1309 = vpack.c.b16 %v1113, %v1109
        %v1310 = vpack.c.b16 %v1114, %v1110
        %v1311 = vpack.c.b16 %v1119, %v1115
        %v1312 = vpack.c.b16 %v1120, %v1116
        %v1313 = vpack.c.b16 %v1121, %v1117
        %v1314 = vpack.c.b16 %v1122, %v1118
        %v1315 = vpack.c.b16 %v1127, %v1123
        %v1316 = vpack.c.b16 %v1128, %v1124
        %v1317 = vpack.c.b16 %v1129, %v1125
        %v1318 = vpack.c.b16 %v1130, %v1126
        %v1319 = vpack.c.b16 %v1135, %v1131
        %v1320 = vpack.c.b16 %v1136, %v1132
        %v1321 = vpack.c.b16 %v1137, %v1133
        %v1322 = vpack.c.b16 %v1138, %v1134
        %v1323 = vpack.c.b16 %v1143, %v1139
        %v1324 = vpack.c.b16 %v1144, %v1140
        %v1325 = vpack.c.b16 %v1145, %v1141
        %v1326 = vpack.c.b16 %v1146, %v1142
        %v1327 = vpack.c.b16 %v1151, %v1147
        %v1328 = vpack.c.b16 %v1152, %v1148
        %v1329 = vpack.c.b16 %v1153, %v1149
        %v1330 = vpack.c.b16 %v1154, %v1150
        %v1331 = vpack.c.b16 %v1159, %v1155
        %v1332 = vpack.c.b16 %v1160, %v1156
        %v1333 = vpack.c.b16 %v1161, %v1157
        %v1334 = vpack.c.b16 %v1162, %v1158
        %v1335 = vpack.c.b16 %v1167, %v1163
        %v1336 = vpack.c.b16 %v1168, %v1164
        %v1337 = vpack.c.b16 %v1169, %v1165
        %v1338 = vpack.c.b16 %v1170, %v1166
        %v1339 = vpack.c.b16 %v1175, %v1171
        %v1340 = vpack.c.b16 %v1176, %v1172
        %v1341 = vpack.c.b16 %v1177, %v1173
        %v1342 = vpack.c.b16 %v1178, %v1174
        %v1343 = vpack.c.b16 %v1183, %v1179
        %v1344 = vpack.c.b16 %v1184, %v1180
        %v1345 = vpack.c.b16 %v1185, %v1181
        %v1346 = vpack.c.b16 %v1186, %v1182
        %v1347 = vpack.c.b16 %v1191, %v1187
        %v1348 = vpack.c.b16 %v1192, %v1188
        %v1349 = vpack.c.b16 %v1193, %v1189
        %v1350 = vpack.c.b16 %v1194, %v1190
        %v1351 = vpack.c.b16 %v1199, %v1195
        %v1352 = vpack.c.b16 %v1200, %v1196
        %v1353 = vpack.c.b16 %v1201, %v1197
        %v1354 = vpack.c.b16 %v1202, %v1198
        %v1355 = vpack.c.b16 %v1207, %v1203
        %v1356 = vpack.c.b16 %v1208, %v1204
        %v1357 = vpack.c.b16 %v1209, %v1205
        %v1358 = vpack.c.b16 %v1210, %v1206
        %v1359 = vpack.c.b16 %v1215, %v1211
        %v1360 = vpack.c.b16 %v1216, %v1212
        %v1361 = vpack.c.b16 %v1217, %v1213
        %v1362 = vpack.c.b16 %v1218, %v1214
        %v1363 = vpack.c.b16 %v1223, %v1219
        %v1364 = vpack.c.b16 %v1224, %v1220
        %v1365 = vpack.c.b16 %v1225, %v1221
        %v1366 = vpack.c.b16 %v1226, %v1222
        %v1367 = vpack.c.b16 %v1231, %v1227
        %v1368 = vpack.c.b16 %v1232, %v1228
        %v1369 = vpack.c.b16 %v1233, %v1229
        %v1370 = vpack.c.b16 %v1234, %v1230
        %v1371 = vpack.c.b16 %v1239, %v1235
        %v1372 = vpack.c.b16 %v1240, %v1236
        %v1373 = vpack.c.b16 %v1241, %v1237
        %v1374 = vpack.c.b16 %v1242, %v1238
        %v1375 = vpack.c.b16 %v1247, %v1243
        %v1376 = vpack.c.b16 %v1248, %v1244
        %v1377 = vpack.c.b16 %v1249, %v1245
        %v1378 = vpack.c.b16 %v1250, %v1246
        %1507 = vmatprep.subr.bf16.mxu0 %v1252
        %1508 = vmatpush1.bf16.msra.mxu0 %v1251
        %1509 = vmatprep.subr.bf16.mxu0 %v1256
        %1510 = vmatpush1.bf16.msra.mxu0 %v1255
        %1511 = vmatprep.subr.bf16.mxu0 %v1260
        %1512 = vmatpush1.bf16.msra.mxu0 %v1259
        %1513 = vmatprep.subr.bf16.mxu0 %v1264
        %1514 = vmatpush1.bf16.msra.mxu0 %v1263
        %1515 = vmatprep.subr.bf16.mxu0 %v1268
        %1516 = vmatpush1.bf16.msra.mxu0 %v1267
        %1517 = vmatprep.subr.bf16.mxu0 %v1272
        %1518 = vmatpush1.bf16.msra.mxu0 %v1271
        %1519 = vmatprep.subr.bf16.mxu0 %v1276
        %1520 = vmatpush1.bf16.msra.mxu0 %v1275
        %1521 = vmatprep.subr.bf16.mxu0 %v1280
        %1522 = vmatpush1.bf16.msra.mxu0 %v1279
        %1523 = vmatprep.subr.bf16.mxu0 %v1284
        %1524 = vmatpush1.bf16.msra.mxu0 %v1283
        %1525 = vmatprep.subr.bf16.mxu0 %v1288
        %1526 = vmatpush1.bf16.msra.mxu0 %v1287
        %1527 = vmatprep.subr.bf16.mxu0 %v1292
        %1528 = vmatpush1.bf16.msra.mxu0 %v1291
        %1529 = vmatprep.subr.bf16.mxu0 %v1296
        %1530 = vmatpush1.bf16.msra.mxu0 %v1295
        %1531 = vmatprep.subr.bf16.mxu0 %v1300
        %1532 = vmatpush1.bf16.msra.mxu0 %v1299
        %1533 = vmatprep.subr.bf16.mxu0 %v1304
        %1534 = vmatpush1.bf16.msra.mxu0 %v1303
        %1535 = vmatprep.subr.bf16.mxu0 %v1308
        %1536 = vmatpush1.bf16.msra.mxu0 %v1307
        %1537 = vmatprep.subr.bf16.mxu0 %v1312
        %1538 = vmatpush1.bf16.msra.mxu0 %v1311
        %1539 = vmatprep.mubr.bf16.mxu0 %v751
        %1540 = vmatmul.mubr.bf16.gmra.mrb[0].mxu0 %v750
        %v1541 = vpop.f32.mrb[0].mxu0
        %v1542 = vadd.f32 %v850, %v1541
        %v1543 = vpop.f32.mrb[0].mxu0
        %v1544 = vadd.f32 %v854, %v1543
        %v1545 = vpop.f32.mrb[0].mxu0
        %v1546 = vadd.f32 %v850, %v1545
        %v1547 = vpop.f32.mrb[0].mxu0
        %v1548 = vadd.f32 %v854, %v1547
        %1549 = vmatprep.mubr.bf16.mxu0 %v755
        %1550 = vmatmul.mubr.bf16.gmra.mrb[0].mxu0 %v754
        %v1551 = vpop.f32.mrb[0].mxu0
        %v1552 = vadd.f32 %v850, %v1551
        %v1553 = vpop.f32.mrb[0].mxu0
        %v1554 = vadd.f32 %v854, %v1553
        %v1555 = vpop.f32.mrb[0].mxu0
        %v1556 = vadd.f32 %v850, %v1555
        %v1557 = vpop.f32.mrb[0].mxu0
        %v1558 = vadd.f32 %v854, %v1557
        %1559 = vmatprep.mubr.bf16.mxu0 %v759
        %1560 = vmatmul.mubr.bf16.gmra.mrb[0].mxu0 %v758
        %v1561 = vpop.f32.mrb[0].mxu0
        %v1562 = vadd.f32 %v850, %v1561
        %v1563 = vpop.f32.mrb[0].mxu0
        %v1564 = vadd.f32 %v854, %v1563
        %v1565 = vpop.f32.mrb[0].mxu0
        %v1566 = vadd.f32 %v850, %v1565
        %v1567 = vpop.f32.mrb[0].mxu0
        %v1568 = vadd.f32 %v854, %v1567
        %1569 = vmatprep.mubr.bf16.mxu0 %v763
        %1570 = vmatmul.mubr.bf16.gmra.mrb[0].mxu0 %v762
        %v1571 = vpop.f32.mrb[0].mxu0
        %v1572 = vadd.f32 %v850, %v1571
        %v1573 = vpop.f32.mrb[0].mxu0
        %v1574 = vadd.f32 %v854, %v1573
        %v1575 = vpop.f32.mrb[0].mxu0
        %v1576 = vadd.f32 %v850, %v1575
        %v1577 = vpop.f32.mrb[0].mxu0
        %v1578 = vadd.f32 %v854, %v1577
        %1579 = vmatprep.mubr.bf16.mxu0 %v767
        %1580 = vmatmul.mubr.bf16.gmra.mrb[0].mxu0 %v766
        %v1581 = vpop.f32.mrb[0].mxu0
        %v1582 = vadd.f32 %v850, %v1581
        %v1583 = vpop.f32.mrb[0].mxu0
        %v1584 = vadd.f32 %v854, %v1583
        %v1585 = vpop.f32.mrb[0].mxu0
        %v1586 = vadd.f32 %v850, %v1585
        %v1587 = vpop.f32.mrb[0].mxu0
        %v1588 = vadd.f32 %v854, %v1587
        %1589 = vmatprep.mubr.bf16.mxu0 %v771
        %1590 = vmatmul.mubr.bf16.gmra.mrb[0].mxu0 %v770
        %v1591 = vpop.f32.mrb[0].mxu0
        %v1592 = vadd.f32 %v850, %v1591
        %v1593 = vpop.f32.mrb[0].mxu0
        %v1594 = vadd.f32 %v854, %v1593
        %v1595 = vpop.f32.mrb[0].mxu0
        %v1596 = vadd.f32 %v850, %v1595
        %v1597 = vpop.f32.mrb[0].mxu0
        %v1598 = vadd.f32 %v854, %v1597
        %1599 = vmatprep.mubr.bf16.mxu0 %v775
        %1600 = vmatmul.mubr.bf16.gmra.mrb[0].mxu0 %v774
        %v1601 = vpop.f32.mrb[0].mxu0
        %v1602 = vadd.f32 %v850, %v1601
        %v1603 = vpop.f32.mrb[0].mxu0
        %v1604 = vadd.f32 %v854, %v1603
        %v1605 = vpop.f32.mrb[0].mxu0
        %v1606 = vadd.f32 %v850, %v1605
        %v1607 = vpop.f32.mrb[0].mxu0
        %v1608 = vadd.f32 %v854, %v1607
        %1609 = vmatprep.mubr.bf16.mxu0 %v779
        %1610 = vmatmul.mubr.bf16.gmra.mrb[0].mxu0 %v778
        %v1611 = vpop.f32.mrb[0].mxu0
        %v1612 = vadd.f32 %v850, %v1611
        %v1613 = vpop.f32.mrb[0].mxu0
        %v1614 = vadd.f32 %v854, %v1613
        %v1615 = vpop.f32.mrb[0].mxu0
        %v1616 = vadd.f32 %v850, %v1615
        %v1617 = vpop.f32.mrb[0].mxu0
        %v1618 = vadd.f32 %v854, %v1617
        %1619 = vmatprep.mubr.bf16.mxu0 %v783
        %1620 = vmatmul.mubr.bf16.gmra.mrb[0].mxu0 %v782
        %v1621 = vpop.f32.mrb[0].mxu0
        %v1622 = vadd.f32 %v850, %v1621
        %v1623 = vpop.f32.mrb[0].mxu0
        %v1624 = vadd.f32 %v854, %v1623
        %v1625 = vpop.f32.mrb[0].mxu0
        %v1626 = vadd.f32 %v850, %v1625
        %v1627 = vpop.f32.mrb[0].mxu0
        %v1628 = vadd.f32 %v854, %v1627
        %1629 = vmatprep.mubr.bf16.mxu0 %v787
        %1630 = vmatmul.mubr.bf16.gmra.mrb[0].mxu0 %v786
        %v1631 = vpop.f32.mrb[0].mxu0
        %v1632 = vadd.f32 %v850, %v1631
        %v1633 = vpop.f32.mrb[0].mxu0
        %v1634 = vadd.f32 %v854, %v1633
        %v1635 = vpop.f32.mrb[0].mxu0
        %v1636 = vadd.f32 %v850, %v1635
        %v1637 = vpop.f32.mrb[0].mxu0
        %v1638 = vadd.f32 %v854, %v1637
        %1639 = vmatprep.mubr.bf16.mxu0 %v791
        %1640 = vmatmul.mubr.bf16.gmra.mrb[0].mxu0 %v790
        %v1641 = vpop.f32.mrb[0].mxu0
        %v1642 = vadd.f32 %v850, %v1641
        %v1643 = vpop.f32.mrb[0].mxu0
        %v1644 = vadd.f32 %v854, %v1643
        %v1645 = vpop.f32.mrb[0].mxu0
        %v1646 = vadd.f32 %v850, %v1645
        %v1647 = vpop.f32.mrb[0].mxu0
        %v1648 = vadd.f32 %v854, %v1647
        %1649 = vmatprep.mubr.bf16.mxu0 %v795
        %1650 = vmatmul.mubr.bf16.gmra.mrb[0].mxu0 %v794
        %v1651 = vpop.f32.mrb[0].mxu0
        %v1652 = vadd.f32 %v850, %v1651
        %v1653 = vpop.f32.mrb[0].mxu0
        %v1654 = vadd.f32 %v854, %v1653
        %v1655 = vpop.f32.mrb[0].mxu0
        %v1656 = vadd.f32 %v850, %v1655
        %v1657 = vpop.f32.mrb[0].mxu0
        %v1658 = vadd.f32 %v854, %v1657
        %1659 = vmatprep.mubr.bf16.mxu0 %v799
        %1660 = vmatmul.mubr.bf16.gmra.mrb[0].mxu0 %v798
        %v1661 = vpop.f32.mrb[0].mxu0
        %v1662 = vadd.f32 %v850, %v1661
        %v1663 = vpop.f32.mrb[0].mxu0
        %v1664 = vadd.f32 %v854, %v1663
        %v1665 = vpop.f32.mrb[0].mxu0
        %v1666 = vadd.f32 %v850, %v1665
        %v1667 = vpop.f32.mrb[0].mxu0
        %v1668 = vadd.f32 %v854, %v1667
        %1669 = vmatprep.mubr.bf16.mxu0 %v803
        %1670 = vmatmul.mubr.bf16.gmra.mrb[0].mxu0 %v802
        %v1671 = vpop.f32.mrb[0].mxu0
        %v1672 = vadd.f32 %v850, %v1671
        %v1673 = vpop.f32.mrb[0].mxu0
        %v1674 = vadd.f32 %v854, %v1673
        %v1675 = vpop.f32.mrb[0].mxu0
        %v1676 = vadd.f32 %v850, %v1675
        %v1677 = vpop.f32.mrb[0].mxu0
        %v1678 = vadd.f32 %v854, %v1677
        %1679 = vmatprep.mubr.bf16.mxu0 %v807
        %1680 = vmatmul.mubr.bf16.gmra.mrb[0].mxu0 %v806
        %v1681 = vpop.f32.mrb[0].mxu0
        %v1682 = vadd.f32 %v850, %v1681
        %v1683 = vpop.f32.mrb[0].mxu0
        %v1684 = vadd.f32 %v854, %v1683
        %v1685 = vpop.f32.mrb[0].mxu0
        %v1686 = vadd.f32 %v850, %v1685
        %v1687 = vpop.f32.mrb[0].mxu0
        %v1688 = vadd.f32 %v854, %v1687
        %1689 = vmatprep.mubr.bf16.mxu0 %v811
        %1690 = vmatmul.mubr.bf16.gmra.mrb[0].mxu0 %v810
        %v1691 = vpop.f32.mrb[0].mxu0
        %v1692 = vadd.f32 %v850, %v1691
        %v1693 = vpop.f32.mrb[0].mxu0
        %v1694 = vadd.f32 %v854, %v1693
        %v1695 = vpop.f32.mrb[0].mxu0
        %v1696 = vadd.f32 %v850, %v1695
        %v1697 = vpop.f32.mrb[0].mxu0
        %v1698 = vadd.f32 %v854, %v1697
        %1699 = vmatprep.mubr.bf16.mxu0 %v815
        %1700 = vmatmul.mubr.bf16.gmra.mrb[0].mxu0 %v814
        %v1701 = vpop.f32.mrb[0].mxu0
        %v1702 = vadd.f32 %v850, %v1701
        %v1703 = vpop.f32.mrb[0].mxu0
        %v1704 = vadd.f32 %v854, %v1703
        %v1705 = vpop.f32.mrb[0].mxu0
        %v1706 = vadd.f32 %v850, %v1705
        %v1707 = vpop.f32.mrb[0].mxu0
        %v1708 = vadd.f32 %v854, %v1707
        %1709 = vmatprep.mubr.bf16.mxu0 %v819
        %1710 = vmatmul.mubr.bf16.gmra.mrb[0].mxu0 %v818
        %v1711 = vpop.f32.mrb[0].mxu0
        %v1712 = vadd.f32 %v850, %v1711
        %v1713 = vpop.f32.mrb[0].mxu0
        %v1714 = vadd.f32 %v854, %v1713
        %v1715 = vpop.f32.mrb[0].mxu0
        %v1716 = vadd.f32 %v850, %v1715
        %v1717 = vpop.f32.mrb[0].mxu0
        %v1718 = vadd.f32 %v854, %v1717
        %1719 = vmatprep.mubr.bf16.mxu0 %v823
        %1720 = vmatmul.mubr.bf16.gmra.mrb[0].mxu0 %v822
        %v1721 = vpop.f32.mrb[0].mxu0
        %v1722 = vadd.f32 %v850, %v1721
        %v1723 = vpop.f32.mrb[0].mxu0
        %v1724 = vadd.f32 %v854, %v1723
        %v1725 = vpop.f32.mrb[0].mxu0
        %v1726 = vadd.f32 %v850, %v1725
        %v1727 = vpop.f32.mrb[0].mxu0
        %v1728 = vadd.f32 %v854, %v1727
        %1729 = vmatprep.mubr.bf16.mxu0 %v827
        %1730 = vmatmul.mubr.bf16.gmra.mrb[0].mxu0 %v826
        %v1731 = vpop.f32.mrb[0].mxu0
        %v1732 = vadd.f32 %v850, %v1731
        %v1733 = vpop.f32.mrb[0].mxu0
        %v1734 = vadd.f32 %v854, %v1733
        %v1735 = vpop.f32.mrb[0].mxu0
        %v1736 = vadd.f32 %v850, %v1735
        %v1737 = vpop.f32.mrb[0].mxu0
        %v1738 = vadd.f32 %v854, %v1737
        %1739 = vmatprep.mubr.bf16.mxu0 %v831
        %1740 = vmatmul.mubr.bf16.gmra.mrb[0].mxu0 %v830
        %v1741 = vpop.f32.mrb[0].mxu0
        %v1742 = vadd.f32 %v850, %v1741
        %v1743 = vpop.f32.mrb[0].mxu0
        %v1744 = vadd.f32 %v854, %v1743
        %v1745 = vpop.f32.mrb[0].mxu0
        %v1746 = vadd.f32 %v850, %v1745
        %v1747 = vpop.f32.mrb[0].mxu0
        %v1748 = vadd.f32 %v854, %v1747
        %1749 = vmatprep.mubr.bf16.mxu0 %v835
        %1750 = vmatmul.mubr.bf16.gmra.mrb[0].mxu0 %v834
        %v1751 = vpop.f32.mrb[0].mxu0
        %v1752 = vadd.f32 %v850, %v1751
        %v1753 = vpop.f32.mrb[0].mxu0
        %v1754 = vadd.f32 %v854, %v1753
        %v1755 = vpop.f32.mrb[0].mxu0
        %v1756 = vadd.f32 %v850, %v1755
        %v1757 = vpop.f32.mrb[0].mxu0
        %v1758 = vadd.f32 %v854, %v1757
        %1759 = vmatprep.mubr.bf16.mxu0 %v839
        %1760 = vmatmul.mubr.bf16.gmra.mrb[0].mxu0 %v838
        %v1761 = vpop.f32.mrb[0].mxu0
        %v1762 = vadd.f32 %v850, %v1761
        %v1763 = vpop.f32.mrb[0].mxu0
        %v1764 = vadd.f32 %v854, %v1763
        %v1765 = vpop.f32.mrb[0].mxu0
        %v1766 = vadd.f32 %v850, %v1765
        %v1767 = vpop.f32.mrb[0].mxu0
        %v1768 = vadd.f32 %v854, %v1767
        %1769 = vmatprep.mubr.bf16.mxu0 %v843
        %1770 = vmatmul.mubr.bf16.gmra.mrb[0].mxu0 %v842
        %v1771 = vpop.f32.mrb[0].mxu0
        %v1772 = vadd.f32 %v850, %v1771
        %v1773 = vpop.f32.mrb[0].mxu0
        %v1774 = vadd.f32 %v854, %v1773
        %v1775 = vpop.f32.mrb[0].mxu0
        %v1776 = vadd.f32 %v850, %v1775
        %v1777 = vpop.f32.mrb[0].mxu0
        %v1778 = vadd.f32 %v854, %v1777
        %1779 = vdwg.mxu0
        %1780 = vmatprep.subr.bf16.mxu0 %v1316
        %1781 = vmatpush1.bf16.msra.mxu0 %v1315
        %1782 = vmatprep.subr.bf16.mxu0 %v1320
        %1783 = vmatpush1.bf16.msra.mxu0 %v1319
        %1784 = vmatprep.subr.bf16.mxu0 %v1324
        %1785 = vmatpush1.bf16.msra.mxu0 %v1323
        %1786 = vmatprep.subr.bf16.mxu0 %v1328
        %1787 = vmatpush1.bf16.msra.mxu0 %v1327
        %1788 = vmatprep.subr.bf16.mxu0 %v1332
        %1789 = vmatpush1.bf16.msra.mxu0 %v1331
        %1790 = vmatprep.subr.bf16.mxu0 %v1336
        %1791 = vmatpush1.bf16.msra.mxu0 %v1335
        %1792 = vmatprep.subr.bf16.mxu0 %v1340
        %1793 = vmatpush1.bf16.msra.mxu0 %v1339
        %1794 = vmatprep.subr.bf16.mxu0 %v1344
        %1795 = vmatpush1.bf16.msra.mxu0 %v1343
        %1796 = vmatprep.subr.bf16.mxu0 %v1348
        %1797 = vmatpush1.bf16.msra.mxu0 %v1347
        %1798 = vmatprep.subr.bf16.mxu0 %v1352
        %1799 = vmatpush1.bf16.msra.mxu0 %v1351
        %1800 = vmatprep.subr.bf16.mxu0 %v1356
        %1801 = vmatpush1.bf16.msra.mxu0 %v1355
        %1802 = vmatprep.subr.bf16.mxu0 %v1360
        %1803 = vmatpush1.bf16.msra.mxu0 %v1359
        %1804 = vmatprep.subr.bf16.mxu0 %v1364
        %1805 = vmatpush1.bf16.msra.mxu0 %v1363
        %1806 = vmatprep.subr.bf16.mxu0 %v1368
        %1807 = vmatpush1.bf16.msra.mxu0 %v1367
        %1808 = vmatprep.subr.bf16.mxu0 %v1372
        %1809 = vmatpush1.bf16.msra.mxu0 %v1371
        %1810 = vmatprep.subr.bf16.mxu0 %v1376
        %1811 = vmatpush1.bf16.msra.mxu0 %v1375
        %1812 = vmatprep.mubr.bf16.mxu0 %v753
        %1813 = vmatmul.mubr.bf16.gmra.mrb[0].mxu0 %v752
        %v1814 = vpop.f32.mrb[0].mxu0
        %v1815 = vadd.f32 %v1542, %v1814
        %v1816 = vpop.f32.mrb[0].mxu0
        %v1817 = vadd.f32 %v1544, %v1816
        %v1818 = vpop.f32.mrb[0].mxu0
        %v1819 = vadd.f32 %v1546, %v1818
        %v1820 = vpop.f32.mrb[0].mxu0
        %v1821 = vadd.f32 %v1548, %v1820
        %1822 = vmatprep.mubr.bf16.mxu0 %v757
        %1823 = vmatmul.mubr.bf16.gmra.mrb[0].mxu0 %v756
        %v1824 = vpop.f32.mrb[0].mxu0
        %v1825 = vadd.f32 %v1552, %v1824
        %v1826 = vpop.f32.mrb[0].mxu0
        %v1827 = vadd.f32 %v1554, %v1826
        %v1828 = vpop.f32.mrb[0].mxu0
        %v1829 = vadd.f32 %v1556, %v1828
        %v1830 = vpop.f32.mrb[0].mxu0
        %v1831 = vadd.f32 %v1558, %v1830
        %1832 = vmatprep.mubr.bf16.mxu0 %v761
        %1833 = vmatmul.mubr.bf16.gmra.mrb[0].mxu0 %v760
        %v1834 = vpop.f32.mrb[0].mxu0
        %v1835 = vadd.f32 %v1562, %v1834
        %v1836 = vpop.f32.mrb[0].mxu0
        %v1837 = vadd.f32 %v1564, %v1836
        %v1838 = vpop.f32.mrb[0].mxu0
        %v1839 = vadd.f32 %v1566, %v1838
        %v1840 = vpop.f32.mrb[0].mxu0
        %v1841 = vadd.f32 %v1568, %v1840
        %1842 = vmatprep.mubr.bf16.mxu0 %v765
        %1843 = vmatmul.mubr.bf16.gmra.mrb[0].mxu0 %v764
        %v1844 = vpop.f32.mrb[0].mxu0
        %v1845 = vadd.f32 %v1572, %v1844
        %v1846 = vpop.f32.mrb[0].mxu0
        %v1847 = vadd.f32 %v1574, %v1846
        %v1848 = vpop.f32.mrb[0].mxu0
        %v1849 = vadd.f32 %v1576, %v1848
        %v1850 = vpop.f32.mrb[0].mxu0
        %v1851 = vadd.f32 %v1578, %v1850
        %1852 = vmatprep.mubr.bf16.mxu0 %v769
        %1853 = vmatmul.mubr.bf16.gmra.mrb[0].mxu0 %v768
        %v1854 = vpop.f32.mrb[0].mxu0
        %v1855 = vadd.f32 %v1582, %v1854
        %v1856 = vpop.f32.mrb[0].mxu0
        %v1857 = vadd.f32 %v1584, %v1856
        %v1858 = vpop.f32.mrb[0].mxu0
        %v1859 = vadd.f32 %v1586, %v1858
        %v1860 = vpop.f32.mrb[0].mxu0
        %v1861 = vadd.f32 %v1588, %v1860
        %1862 = vmatprep.mubr.bf16.mxu0 %v773
        %1863 = vmatmul.mubr.bf16.gmra.mrb[0].mxu0 %v772
        %v1864 = vpop.f32.mrb[0].mxu0
        %v1865 = vadd.f32 %v1592, %v1864
        %v1866 = vpop.f32.mrb[0].mxu0
        %v1867 = vadd.f32 %v1594, %v1866
        %v1868 = vpop.f32.mrb[0].mxu0
        %v1869 = vadd.f32 %v1596, %v1868
        %v1870 = vpop.f32.mrb[0].mxu0
        %v1871 = vadd.f32 %v1598, %v1870
        %1872 = vmatprep.mubr.bf16.mxu0 %v777
        %1873 = vmatmul.mubr.bf16.gmra.mrb[0].mxu0 %v776
        %v1874 = vpop.f32.mrb[0].mxu0
        %v1875 = vadd.f32 %v1602, %v1874
        %v1876 = vpop.f32.mrb[0].mxu0
        %v1877 = vadd.f32 %v1604, %v1876
        %v1878 = vpop.f32.mrb[0].mxu0
        %v1879 = vadd.f32 %v1606, %v1878
        %v1880 = vpop.f32.mrb[0].mxu0
        %v1881 = vadd.f32 %v1608, %v1880
        %1882 = vmatprep.mubr.bf16.mxu0 %v781
        %1883 = vmatmul.mubr.bf16.gmra.mrb[0].mxu0 %v780
        %v1884 = vpop.f32.mrb[0].mxu0
        %v1885 = vadd.f32 %v1612, %v1884
        %v1886 = vpop.f32.mrb[0].mxu0
        %v1887 = vadd.f32 %v1614, %v1886
        %v1888 = vpop.f32.mrb[0].mxu0
        %v1889 = vadd.f32 %v1616, %v1888
        %v1890 = vpop.f32.mrb[0].mxu0
        %v1891 = vadd.f32 %v1618, %v1890
        %1892 = vmatprep.mubr.bf16.mxu0 %v785
        %1893 = vmatmul.mubr.bf16.gmra.mrb[0].mxu0 %v784
        %v1894 = vpop.f32.mrb[0].mxu0
        %v1895 = vadd.f32 %v1622, %v1894
        %v1896 = vpop.f32.mrb[0].mxu0
        %v1897 = vadd.f32 %v1624, %v1896
        %v1898 = vpop.f32.mrb[0].mxu0
        %v1899 = vadd.f32 %v1626, %v1898
        %v1900 = vpop.f32.mrb[0].mxu0
        %v1901 = vadd.f32 %v1628, %v1900
        %1902 = vmatprep.mubr.bf16.mxu0 %v789
        %1903 = vmatmul.mubr.bf16.gmra.mrb[0].mxu0 %v788
        %v1904 = vpop.f32.mrb[0].mxu0
        %v1905 = vadd.f32 %v1632, %v1904
        %v1906 = vpop.f32.mrb[0].mxu0
        %v1907 = vadd.f32 %v1634, %v1906
        %v1908 = vpop.f32.mrb[0].mxu0
        %v1909 = vadd.f32 %v1636, %v1908
        %v1910 = vpop.f32.mrb[0].mxu0
        %v1911 = vadd.f32 %v1638, %v1910
        %1912 = vmatprep.mubr.bf16.mxu0 %v793
        %1913 = vmatmul.mubr.bf16.gmra.mrb[0].mxu0 %v792
        %v1914 = vpop.f32.mrb[0].mxu0
        %v1915 = vadd.f32 %v1642, %v1914
        %v1916 = vpop.f32.mrb[0].mxu0
        %v1917 = vadd.f32 %v1644, %v1916
        %v1918 = vpop.f32.mrb[0].mxu0
        %v1919 = vadd.f32 %v1646, %v1918
        %v1920 = vpop.f32.mrb[0].mxu0
        %v1921 = vadd.f32 %v1648, %v1920
        %1922 = vmatprep.mubr.bf16.mxu0 %v797
        %1923 = vmatmul.mubr.bf16.gmra.mrb[0].mxu0 %v796
        %v1924 = vpop.f32.mrb[0].mxu0
        %v1925 = vadd.f32 %v1652, %v1924
        %v1926 = vpop.f32.mrb[0].mxu0
        %v1927 = vadd.f32 %v1654, %v1926
        %v1928 = vpop.f32.mrb[0].mxu0
        %v1929 = vadd.f32 %v1656, %v1928
        %v1930 = vpop.f32.mrb[0].mxu0
        %v1931 = vadd.f32 %v1658, %v1930
        %1932 = vmatprep.mubr.bf16.mxu0 %v801
        %1933 = vmatmul.mubr.bf16.gmra.mrb[0].mxu0 %v800
        %v1934 = vpop.f32.mrb[0].mxu0
        %v1935 = vadd.f32 %v1662, %v1934
        %v1936 = vpop.f32.mrb[0].mxu0
        %v1937 = vadd.f32 %v1664, %v1936
        %v1938 = vpop.f32.mrb[0].mxu0
        %v1939 = vadd.f32 %v1666, %v1938
        %v1940 = vpop.f32.mrb[0].mxu0
        %v1941 = vadd.f32 %v1668, %v1940
        %1942 = vmatprep.mubr.bf16.mxu0 %v805
        %1943 = vmatmul.mubr.bf16.gmra.mrb[0].mxu0 %v804
        %v1944 = vpop.f32.mrb[0].mxu0
        %v1945 = vadd.f32 %v1672, %v1944
        %v1946 = vpop.f32.mrb[0].mxu0
        %v1947 = vadd.f32 %v1674, %v1946
        %v1948 = vpop.f32.mrb[0].mxu0
        %v1949 = vadd.f32 %v1676, %v1948
        %v1950 = vpop.f32.mrb[0].mxu0
        %v1951 = vadd.f32 %v1678, %v1950
        %1952 = vmatprep.mubr.bf16.mxu0 %v809
        %1953 = vmatmul.mubr.bf16.gmra.mrb[0].mxu0 %v808
        %v1954 = vpop.f32.mrb[0].mxu0
        %v1955 = vadd.f32 %v1682, %v1954
        %v1956 = vpop.f32.mrb[0].mxu0
        %v1957 = vadd.f32 %v1684, %v1956
        %v1958 = vpop.f32.mrb[0].mxu0
        %v1959 = vadd.f32 %v1686, %v1958
        %v1960 = vpop.f32.mrb[0].mxu0
        %v1961 = vadd.f32 %v1688, %v1960
        %1962 = vmatprep.mubr.bf16.mxu0 %v813
        %1963 = vmatmul.mubr.bf16.gmra.mrb[0].mxu0 %v812
        %v1964 = vpop.f32.mrb[0].mxu0
        %v1965 = vadd.f32 %v1692, %v1964
        %v1966 = vpop.f32.mrb[0].mxu0
        %v1967 = vadd.f32 %v1694, %v1966
        %v1968 = vpop.f32.mrb[0].mxu0
        %v1969 = vadd.f32 %v1696, %v1968
        %v1970 = vpop.f32.mrb[0].mxu0
        %v1971 = vadd.f32 %v1698, %v1970
        %1972 = vmatprep.mubr.bf16.mxu0 %v817
        %1973 = vmatmul.mubr.bf16.gmra.mrb[0].mxu0 %v816
        %v1974 = vpop.f32.mrb[0].mxu0
        %v1975 = vadd.f32 %v1702, %v1974
        %v1976 = vpop.f32.mrb[0].mxu0
        %v1977 = vadd.f32 %v1704, %v1976
        %v1978 = vpop.f32.mrb[0].mxu0
        %v1979 = vadd.f32 %v1706, %v1978
        %v1980 = vpop.f32.mrb[0].mxu0
        %v1981 = vadd.f32 %v1708, %v1980
        %1982 = vmatprep.mubr.bf16.mxu0 %v821
        %1983 = vmatmul.mubr.bf16.gmra.mrb[0].mxu0 %v820
        %v1984 = vpop.f32.mrb[0].mxu0
        %v1985 = vadd.f32 %v1712, %v1984
        %v1986 = vpop.f32.mrb[0].mxu0
        %v1987 = vadd.f32 %v1714, %v1986
        %v1988 = vpop.f32.mrb[0].mxu0
        %v1989 = vadd.f32 %v1716, %v1988
        %v1990 = vpop.f32.mrb[0].mxu0
        %v1991 = vadd.f32 %v1718, %v1990
        %1992 = vmatprep.mubr.bf16.mxu0 %v825
        %1993 = vmatmul.mubr.bf16.gmra.mrb[0].mxu0 %v824
        %v1994 = vpop.f32.mrb[0].mxu0
        %v1995 = vadd.f32 %v1722, %v1994
        %v1996 = vpop.f32.mrb[0].mxu0
        %v1997 = vadd.f32 %v1724, %v1996
        %v1998 = vpop.f32.mrb[0].mxu0
        %v1999 = vadd.f32 %v1726, %v1998
        %v2000 = vpop.f32.mrb[0].mxu0
        %v2001 = vadd.f32 %v1728, %v2000
        %2002 = vmatprep.mubr.bf16.mxu0 %v829
        %2003 = vmatmul.mubr.bf16.gmra.mrb[0].mxu0 %v828
        %v2004 = vpop.f32.mrb[0].mxu0
        %v2005 = vadd.f32 %v1732, %v2004
        %v2006 = vpop.f32.mrb[0].mxu0
        %v2007 = vadd.f32 %v1734, %v2006
        %v2008 = vpop.f32.mrb[0].mxu0
        %v2009 = vadd.f32 %v1736, %v2008
        %v2010 = vpop.f32.mrb[0].mxu0
        %v2011 = vadd.f32 %v1738, %v2010
        %2012 = vmatprep.mubr.bf16.mxu0 %v833
        %2013 = vmatmul.mubr.bf16.gmra.mrb[0].mxu0 %v832
        %v2014 = vpop.f32.mrb[0].mxu0
        %v2015 = vadd.f32 %v1742, %v2014
        %v2016 = vpop.f32.mrb[0].mxu0
        %v2017 = vadd.f32 %v1744, %v2016
        %v2018 = vpop.f32.mrb[0].mxu0
        %v2019 = vadd.f32 %v1746, %v2018
        %v2020 = vpop.f32.mrb[0].mxu0
        %v2021 = vadd.f32 %v1748, %v2020
        %2022 = vmatprep.mubr.bf16.mxu0 %v837
        %2023 = vmatmul.mubr.bf16.gmra.mrb[0].mxu0 %v836
        %v2024 = vpop.f32.mrb[0].mxu0
        %v2025 = vadd.f32 %v1752, %v2024
        %v2026 = vpop.f32.mrb[0].mxu0
        %v2027 = vadd.f32 %v1754, %v2026
        %v2028 = vpop.f32.mrb[0].mxu0
        %v2029 = vadd.f32 %v1756, %v2028
        %v2030 = vpop.f32.mrb[0].mxu0
        %v2031 = vadd.f32 %v1758, %v2030
        %2032 = vmatprep.mubr.bf16.mxu0 %v841
        %2033 = vmatmul.mubr.bf16.gmra.mrb[0].mxu0 %v840
        %v2034 = vpop.f32.mrb[0].mxu0
        %v2035 = vadd.f32 %v1762, %v2034
        %v2036 = vpop.f32.mrb[0].mxu0
        %v2037 = vadd.f32 %v1764, %v2036
        %v2038 = vpop.f32.mrb[0].mxu0
        %v2039 = vadd.f32 %v1766, %v2038
        %v2040 = vpop.f32.mrb[0].mxu0
        %v2041 = vadd.f32 %v1768, %v2040
        %2042 = vmatprep.mubr.bf16.mxu0 %v845
        %2043 = vmatmul.mubr.bf16.gmra.mrb[0].mxu0 %v844
        %v2044 = vpop.f32.mrb[0].mxu0
        %v2045 = vadd.f32 %v1772, %v2044
        %v2046 = vpop.f32.mrb[0].mxu0
        %v2047 = vadd.f32 %v1774, %v2046
        %v2048 = vpop.f32.mrb[0].mxu0
        %v2049 = vadd.f32 %v1776, %v2048
        %v2050 = vpop.f32.mrb[0].mxu0
        %v2051 = vadd.f32 %v1778, %v2050
        %2052 = vdwg.mxu0
        %2053 = vmatprep.subr.bf16.mxu0 %v1254
        %2054 = vmatpush1.bf16.msra.mxu0 %v1253
        %2055 = vmatprep.subr.bf16.mxu0 %v1258
        %2056 = vmatpush1.bf16.msra.mxu0 %v1257
        %2057 = vmatprep.subr.bf16.mxu0 %v1262
        %2058 = vmatpush1.bf16.msra.mxu0 %v1261
        %2059 = vmatprep.subr.bf16.mxu0 %v1266
        %2060 = vmatpush1.bf16.msra.mxu0 %v1265
        %2061 = vmatprep.subr.bf16.mxu0 %v1270
        %2062 = vmatpush1.bf16.msra.mxu0 %v1269
        %2063 = vmatprep.subr.bf16.mxu0 %v1274
        %2064 = vmatpush1.bf16.msra.mxu0 %v1273
        %2065 = vmatprep.subr.bf16.mxu0 %v1278
        %2066 = vmatpush1.bf16.msra.mxu0 %v1277
        %2067 = vmatprep.subr.bf16.mxu0 %v1282
        %2068 = vmatpush1.bf16.msra.mxu0 %v1281
        %2069 = vmatprep.subr.bf16.mxu0 %v1286
        %2070 = vmatpush1.bf16.msra.mxu0 %v1285
        %2071 = vmatprep.subr.bf16.mxu0 %v1290
        %2072 = vmatpush1.bf16.msra.mxu0 %v1289
        %2073 = vmatprep.subr.bf16.mxu0 %v1294
        %2074 = vmatpush1.bf16.msra.mxu0 %v1293
        %2075 = vmatprep.subr.bf16.mxu0 %v1298
        %2076 = vmatpush1.bf16.msra.mxu0 %v1297
        %2077 = vmatprep.subr.bf16.mxu0 %v1302
        %2078 = vmatpush1.bf16.msra.mxu0 %v1301
        %2079 = vmatprep.subr.bf16.mxu0 %v1306
        %2080 = vmatpush1.bf16.msra.mxu0 %v1305
        %2081 = vmatprep.subr.bf16.mxu0 %v1310
        %2082 = vmatpush1.bf16.msra.mxu0 %v1309
        %2083 = vmatprep.subr.bf16.mxu0 %v1314
        %2084 = vmatpush1.bf16.msra.mxu0 %v1313
        %2085 = vmatprep.mubr.bf16.mxu0 %v751
        %2086 = vmatmul.mubr.bf16.gmra.mrb[0].mxu0 %v750
        %v2087 = vpop.f32.mrb[0].mxu0
        %v2088 = vadd.f32 %v858, %v2087
        %v2089 = vpop.f32.mrb[0].mxu0
        %v2090 = vadd.f32 %v862, %v2089
        %v2091 = vpop.f32.mrb[0].mxu0
        %v2092 = vadd.f32 %v858, %v2091
        %v2093 = vpop.f32.mrb[0].mxu0
        %v2094 = vadd.f32 %v862, %v2093
        %2095 = vmatprep.mubr.bf16.mxu0 %v755
        %2096 = vmatmul.mubr.bf16.gmra.mrb[0].mxu0 %v754
        %v2097 = vpop.f32.mrb[0].mxu0
        %v2098 = vadd.f32 %v858, %v2097
        %v2099 = vpop.f32.mrb[0].mxu0
        %v2100 = vadd.f32 %v862, %v2099
        %v2101 = vpop.f32.mrb[0].mxu0
        %v2102 = vadd.f32 %v858, %v2101
        %v2103 = vpop.f32.mrb[0].mxu0
        %v2104 = vadd.f32 %v862, %v2103
        %2105 = vmatprep.mubr.bf16.mxu0 %v759
        %2106 = vmatmul.mubr.bf16.gmra.mrb[0].mxu0 %v758
        %v2107 = vpop.f32.mrb[0].mxu0
        %v2108 = vadd.f32 %v858, %v2107
        %v2109 = vpop.f32.mrb[0].mxu0
        %v2110 = vadd.f32 %v862, %v2109
        %v2111 = vpop.f32.mrb[0].mxu0
        %v2112 = vadd.f32 %v858, %v2111
        %v2113 = vpop.f32.mrb[0].mxu0
        %v2114 = vadd.f32 %v862, %v2113
        %2115 = vmatprep.mubr.bf16.mxu0 %v763
        %2116 = vmatmul.mubr.bf16.gmra.mrb[0].mxu0 %v762
        %v2117 = vpop.f32.mrb[0].mxu0
        %v2118 = vadd.f32 %v858, %v2117
        %v2119 = vpop.f32.mrb[0].mxu0
        %v2120 = vadd.f32 %v862, %v2119
        %v2121 = vpop.f32.mrb[0].mxu0
        %v2122 = vadd.f32 %v858, %v2121
        %v2123 = vpop.f32.mrb[0].mxu0
        %v2124 = vadd.f32 %v862, %v2123
        %2125 = vmatprep.mubr.bf16.mxu0 %v767
        %2126 = vmatmul.mubr.bf16.gmra.mrb[0].mxu0 %v766
        %v2127 = vpop.f32.mrb[0].mxu0
        %v2128 = vadd.f32 %v858, %v2127
        %v2129 = vpop.f32.mrb[0].mxu0
        %v2130 = vadd.f32 %v862, %v2129
        %v2131 = vpop.f32.mrb[0].mxu0
        %v2132 = vadd.f32 %v858, %v2131
        %v2133 = vpop.f32.mrb[0].mxu0
        %v2134 = vadd.f32 %v862, %v2133
        %2135 = vmatprep.mubr.bf16.mxu0 %v771
        %2136 = vmatmul.mubr.bf16.gmra.mrb[0].mxu0 %v770
        %v2137 = vpop.f32.mrb[0].mxu0
        %v2138 = vadd.f32 %v858, %v2137
        %v2139 = vpop.f32.mrb[0].mxu0
        %v2140 = vadd.f32 %v862, %v2139
        %v2141 = vpop.f32.mrb[0].mxu0
        %v2142 = vadd.f32 %v858, %v2141
        %v2143 = vpop.f32.mrb[0].mxu0
        %v2144 = vadd.f32 %v862, %v2143
        %2145 = vmatprep.mubr.bf16.mxu0 %v775
        %2146 = vmatmul.mubr.bf16.gmra.mrb[0].mxu0 %v774
        %v2147 = vpop.f32.mrb[0].mxu0
        %v2148 = vadd.f32 %v858, %v2147
        %v2149 = vpop.f32.mrb[0].mxu0
        %v2150 = vadd.f32 %v862, %v2149
        %v2151 = vpop.f32.mrb[0].mxu0
        %v2152 = vadd.f32 %v858, %v2151
        %v2153 = vpop.f32.mrb[0].mxu0
        %v2154 = vadd.f32 %v862, %v2153
        %2155 = vmatprep.mubr.bf16.mxu0 %v779
        %2156 = vmatmul.mubr.bf16.gmra.mrb[0].mxu0 %v778
        %v2157 = vpop.f32.mrb[0].mxu0
        %v2158 = vadd.f32 %v858, %v2157
        %v2159 = vpop.f32.mrb[0].mxu0
        %v2160 = vadd.f32 %v862, %v2159
        %v2161 = vpop.f32.mrb[0].mxu0
        %v2162 = vadd.f32 %v858, %v2161
        %v2163 = vpop.f32.mrb[0].mxu0
        %v2164 = vadd.f32 %v862, %v2163
        %2165 = vmatprep.mubr.bf16.mxu0 %v783
        %2166 = vmatmul.mubr.bf16.gmra.mrb[0].mxu0 %v782
        %v2167 = vpop.f32.mrb[0].mxu0
        %v2168 = vadd.f32 %v858, %v2167
        %v2169 = vpop.f32.mrb[0].mxu0
        %v2170 = vadd.f32 %v862, %v2169
        %v2171 = vpop.f32.mrb[0].mxu0
        %v2172 = vadd.f32 %v858, %v2171
        %v2173 = vpop.f32.mrb[0].mxu0
        %v2174 = vadd.f32 %v862, %v2173
        %2175 = vmatprep.mubr.bf16.mxu0 %v787
        %2176 = vmatmul.mubr.bf16.gmra.mrb[0].mxu0 %v786
        %v2177 = vpop.f32.mrb[0].mxu0
        %v2178 = vadd.f32 %v858, %v2177
        %v2179 = vpop.f32.mrb[0].mxu0
        %v2180 = vadd.f32 %v862, %v2179
        %v2181 = vpop.f32.mrb[0].mxu0
        %v2182 = vadd.f32 %v858, %v2181
        %v2183 = vpop.f32.mrb[0].mxu0
        %v2184 = vadd.f32 %v862, %v2183
        %2185 = vmatprep.mubr.bf16.mxu0 %v791
        %2186 = vmatmul.mubr.bf16.gmra.mrb[0].mxu0 %v790
        %v2187 = vpop.f32.mrb[0].mxu0
        %v2188 = vadd.f32 %v858, %v2187
        %v2189 = vpop.f32.mrb[0].mxu0
        %v2190 = vadd.f32 %v862, %v2189
        %v2191 = vpop.f32.mrb[0].mxu0
        %v2192 = vadd.f32 %v858, %v2191
        %v2193 = vpop.f32.mrb[0].mxu0
        %v2194 = vadd.f32 %v862, %v2193
        %2195 = vmatprep.mubr.bf16.mxu0 %v795
        %2196 = vmatmul.mubr.bf16.gmra.mrb[0].mxu0 %v794
        %v2197 = vpop.f32.mrb[0].mxu0
        %v2198 = vadd.f32 %v858, %v2197
        %v2199 = vpop.f32.mrb[0].mxu0
        %v2200 = vadd.f32 %v862, %v2199
        %v2201 = vpop.f32.mrb[0].mxu0
        %v2202 = vadd.f32 %v858, %v2201
        %v2203 = vpop.f32.mrb[0].mxu0
        %v2204 = vadd.f32 %v862, %v2203
        %2205 = vmatprep.mubr.bf16.mxu0 %v799
        %2206 = vmatmul.mubr.bf16.gmra.mrb[0].mxu0 %v798
        %v2207 = vpop.f32.mrb[0].mxu0
        %v2208 = vadd.f32 %v858, %v2207
        %v2209 = vpop.f32.mrb[0].mxu0
        %v2210 = vadd.f32 %v862, %v2209
        %v2211 = vpop.f32.mrb[0].mxu0
        %v2212 = vadd.f32 %v858, %v2211
        %v2213 = vpop.f32.mrb[0].mxu0
        %v2214 = vadd.f32 %v862, %v2213
        %2215 = vmatprep.mubr.bf16.mxu0 %v803
        %2216 = vmatmul.mubr.bf16.gmra.mrb[0].mxu0 %v802
        %v2217 = vpop.f32.mrb[0].mxu0
        %v2218 = vadd.f32 %v858, %v2217
        %v2219 = vpop.f32.mrb[0].mxu0
        %v2220 = vadd.f32 %v862, %v2219
        %v2221 = vpop.f32.mrb[0].mxu0
        %v2222 = vadd.f32 %v858, %v2221
        %v2223 = vpop.f32.mrb[0].mxu0
        %v2224 = vadd.f32 %v862, %v2223
        %2225 = vmatprep.mubr.bf16.mxu0 %v807
        %2226 = vmatmul.mubr.bf16.gmra.mrb[0].mxu0 %v806
        %v2227 = vpop.f32.mrb[0].mxu0
        %v2228 = vadd.f32 %v858, %v2227
        %v2229 = vpop.f32.mrb[0].mxu0
        %v2230 = vadd.f32 %v862, %v2229
        %v2231 = vpop.f32.mrb[0].mxu0
        %v2232 = vadd.f32 %v858, %v2231
        %v2233 = vpop.f32.mrb[0].mxu0
        %v2234 = vadd.f32 %v862, %v2233
        %2235 = vmatprep.mubr.bf16.mxu0 %v811
        %2236 = vmatmul.mubr.bf16.gmra.mrb[0].mxu0 %v810
        %v2237 = vpop.f32.mrb[0].mxu0
        %v2238 = vadd.f32 %v858, %v2237
        %v2239 = vpop.f32.mrb[0].mxu0
        %v2240 = vadd.f32 %v862, %v2239
        %v2241 = vpop.f32.mrb[0].mxu0
        %v2242 = vadd.f32 %v858, %v2241
        %v2243 = vpop.f32.mrb[0].mxu0
        %v2244 = vadd.f32 %v862, %v2243
        %2245 = vmatprep.mubr.bf16.mxu0 %v815
        %2246 = vmatmul.mubr.bf16.gmra.mrb[0].mxu0 %v814
        %v2247 = vpop.f32.mrb[0].mxu0
        %v2248 = vadd.f32 %v858, %v2247
        %v2249 = vpop.f32.mrb[0].mxu0
        %v2250 = vadd.f32 %v862, %v2249
        %v2251 = vpop.f32.mrb[0].mxu0
        %v2252 = vadd.f32 %v858, %v2251
        %v2253 = vpop.f32.mrb[0].mxu0
        %v2254 = vadd.f32 %v862, %v2253
        %2255 = vmatprep.mubr.bf16.mxu0 %v819
        %2256 = vmatmul.mubr.bf16.gmra.mrb[0].mxu0 %v818
        %v2257 = vpop.f32.mrb[0].mxu0
        %v2258 = vadd.f32 %v858, %v2257
        %v2259 = vpop.f32.mrb[0].mxu0
        %v2260 = vadd.f32 %v862, %v2259
        %v2261 = vpop.f32.mrb[0].mxu0
        %v2262 = vadd.f32 %v858, %v2261
        %v2263 = vpop.f32.mrb[0].mxu0
        %v2264 = vadd.f32 %v862, %v2263
        %2265 = vmatprep.mubr.bf16.mxu0 %v823
        %2266 = vmatmul.mubr.bf16.gmra.mrb[0].mxu0 %v822
        %v2267 = vpop.f32.mrb[0].mxu0
        %v2268 = vadd.f32 %v858, %v2267
        %v2269 = vpop.f32.mrb[0].mxu0
        %v2270 = vadd.f32 %v862, %v2269
        %v2271 = vpop.f32.mrb[0].mxu0
        %v2272 = vadd.f32 %v858, %v2271
        %v2273 = vpop.f32.mrb[0].mxu0
        %v2274 = vadd.f32 %v862, %v2273
        %2275 = vmatprep.mubr.bf16.mxu0 %v827
        %2276 = vmatmul.mubr.bf16.gmra.mrb[0].mxu0 %v826
        %v2277 = vpop.f32.mrb[0].mxu0
        %v2278 = vadd.f32 %v858, %v2277
        %v2279 = vpop.f32.mrb[0].mxu0
        %v2280 = vadd.f32 %v862, %v2279
        %v2281 = vpop.f32.mrb[0].mxu0
        %v2282 = vadd.f32 %v858, %v2281
        %v2283 = vpop.f32.mrb[0].mxu0
        %v2284 = vadd.f32 %v862, %v2283
        %2285 = vmatprep.mubr.bf16.mxu0 %v831
        %2286 = vmatmul.mubr.bf16.gmra.mrb[0].mxu0 %v830
        %v2287 = vpop.f32.mrb[0].mxu0
        %v2288 = vadd.f32 %v858, %v2287
        %v2289 = vpop.f32.mrb[0].mxu0
        %v2290 = vadd.f32 %v862, %v2289
        %v2291 = vpop.f32.mrb[0].mxu0
        %v2292 = vadd.f32 %v858, %v2291
        %v2293 = vpop.f32.mrb[0].mxu0
        %v2294 = vadd.f32 %v862, %v2293
        %2295 = vmatprep.mubr.bf16.mxu0 %v835
        %2296 = vmatmul.mubr.bf16.gmra.mrb[0].mxu0 %v834
        %v2297 = vpop.f32.mrb[0].mxu0
        %v2298 = vadd.f32 %v858, %v2297
        %v2299 = vpop.f32.mrb[0].mxu0
        %v2300 = vadd.f32 %v862, %v2299
        %v2301 = vpop.f32.mrb[0].mxu0
        %v2302 = vadd.f32 %v858, %v2301
        %v2303 = vpop.f32.mrb[0].mxu0
        %v2304 = vadd.f32 %v862, %v2303
        %2305 = vmatprep.mubr.bf16.mxu0 %v839
        %2306 = vmatmul.mubr.bf16.gmra.mrb[0].mxu0 %v838
        %v2307 = vpop.f32.mrb[0].mxu0
        %v2308 = vadd.f32 %v858, %v2307
        %v2309 = vpop.f32.mrb[0].mxu0
        %v2310 = vadd.f32 %v862, %v2309
        %v2311 = vpop.f32.mrb[0].mxu0
        %v2312 = vadd.f32 %v858, %v2311
        %v2313 = vpop.f32.mrb[0].mxu0
        %v2314 = vadd.f32 %v862, %v2313
        %2315 = vmatprep.mubr.bf16.mxu0 %v843
        %2316 = vmatmul.mubr.bf16.gmra.mrb[0].mxu0 %v842
        %v2317 = vpop.f32.mrb[0].mxu0
        %v2318 = vadd.f32 %v858, %v2317
        %v2319 = vpop.f32.mrb[0].mxu0
        %v2320 = vadd.f32 %v862, %v2319
        %v2321 = vpop.f32.mrb[0].mxu0
        %v2322 = vadd.f32 %v858, %v2321
        %v2323 = vpop.f32.mrb[0].mxu0
        %v2324 = vadd.f32 %v862, %v2323
        %2325 = vdwg.mxu0
        %2326 = vmatprep.subr.bf16.mxu0 %v1318
        %2327 = vmatpush1.bf16.msra.mxu0 %v1317
        %2328 = vmatprep.subr.bf16.mxu0 %v1322
        %2329 = vmatpush1.bf16.msra.mxu0 %v1321
        %2330 = vmatprep.subr.bf16.mxu0 %v1326
        %2331 = vmatpush1.bf16.msra.mxu0 %v1325
        %2332 = vmatprep.subr.bf16.mxu0 %v1330
        %2333 = vmatpush1.bf16.msra.mxu0 %v1329
        %2334 = vmatprep.subr.bf16.mxu0 %v1334
        %2335 = vmatpush1.bf16.msra.mxu0 %v1333
        %2336 = vmatprep.subr.bf16.mxu0 %v1338
        %2337 = vmatpush1.bf16.msra.mxu0 %v1337
        %2338 = vmatprep.subr.bf16.mxu0 %v1342
        %2339 = vmatpush1.bf16.msra.mxu0 %v1341
        %2340 = vmatprep.subr.bf16.mxu0 %v1346
        %2341 = vmatpush1.bf16.msra.mxu0 %v1345
        %2342 = vmatprep.subr.bf16.mxu0 %v1350
        %2343 = vmatpush1.bf16.msra.mxu0 %v1349
        %2344 = vmatprep.subr.bf16.mxu0 %v1354
        %2345 = vmatpush1.bf16.msra.mxu0 %v1353
        %2346 = vmatprep.subr.bf16.mxu0 %v1358
        %2347 = vmatpush1.bf16.msra.mxu0 %v1357
        %2348 = vmatprep.subr.bf16.mxu0 %v1362
        %2349 = vmatpush1.bf16.msra.mxu0 %v1361
        %2350 = vmatprep.subr.bf16.mxu0 %v1366
        %2351 = vmatpush1.bf16.msra.mxu0 %v1365
        %2352 = vmatprep.subr.bf16.mxu0 %v1370
        %2353 = vmatpush1.bf16.msra.mxu0 %v1369
        %2354 = vmatprep.subr.bf16.mxu0 %v1374
        %2355 = vmatpush1.bf16.msra.mxu0 %v1373
        %2356 = vmatprep.subr.bf16.mxu0 %v1378
        %2357 = vmatpush1.bf16.msra.mxu0 %v1377
        %2358 = vmatprep.mubr.bf16.mxu0 %v753
        %2359 = vmatmul.mubr.bf16.gmra.mrb[0].mxu0 %v752
        %v2360 = vpop.f32.mrb[0].mxu0
        %v2361 = vadd.f32 %v2088, %v2360
        %v2362 = vpop.f32.mrb[0].mxu0
        %v2363 = vadd.f32 %v2090, %v2362
        %v2364 = vpop.f32.mrb[0].mxu0
        %v2365 = vadd.f32 %v2092, %v2364
        %v2366 = vpop.f32.mrb[0].mxu0
        %v2367 = vadd.f32 %v2094, %v2366
        %2368 = vmatprep.mubr.bf16.mxu0 %v757
        %2369 = vmatmul.mubr.bf16.gmra.mrb[0].mxu0 %v756
        %v2370 = vpop.f32.mrb[0].mxu0
        %v2371 = vadd.f32 %v2098, %v2370
        %v2372 = vpop.f32.mrb[0].mxu0
        %v2373 = vadd.f32 %v2100, %v2372
        %v2374 = vpop.f32.mrb[0].mxu0
        %v2375 = vadd.f32 %v2102, %v2374
        %v2376 = vpop.f32.mrb[0].mxu0
        %v2377 = vadd.f32 %v2104, %v2376
        %2378 = vmatprep.mubr.bf16.mxu0 %v761
        %2379 = vmatmul.mubr.bf16.gmra.mrb[0].mxu0 %v760
        %v2380 = vpop.f32.mrb[0].mxu0
        %v2381 = vadd.f32 %v2108, %v2380
        %v2382 = vpop.f32.mrb[0].mxu0
        %v2383 = vadd.f32 %v2110, %v2382
        %v2384 = vpop.f32.mrb[0].mxu0
        %v2385 = vadd.f32 %v2112, %v2384
        %v2386 = vpop.f32.mrb[0].mxu0
        %v2387 = vadd.f32 %v2114, %v2386
        %2388 = vmatprep.mubr.bf16.mxu0 %v765
        %2389 = vmatmul.mubr.bf16.gmra.mrb[0].mxu0 %v764
        %v2390 = vpop.f32.mrb[0].mxu0
        %v2391 = vadd.f32 %v2118, %v2390
        %v2392 = vpop.f32.mrb[0].mxu0
        %v2393 = vadd.f32 %v2120, %v2392
        %v2394 = vpop.f32.mrb[0].mxu0
        %v2395 = vadd.f32 %v2122, %v2394
        %v2396 = vpop.f32.mrb[0].mxu0
        %v2397 = vadd.f32 %v2124, %v2396
        %2398 = vmatprep.mubr.bf16.mxu0 %v769
        %2399 = vmatmul.mubr.bf16.gmra.mrb[0].mxu0 %v768
        %v2400 = vpop.f32.mrb[0].mxu0
        %v2401 = vadd.f32 %v2128, %v2400
        %v2402 = vpop.f32.mrb[0].mxu0
        %v2403 = vadd.f32 %v2130, %v2402
        %v2404 = vpop.f32.mrb[0].mxu0
        %v2405 = vadd.f32 %v2132, %v2404
        %v2406 = vpop.f32.mrb[0].mxu0
        %v2407 = vadd.f32 %v2134, %v2406
        %2408 = vmatprep.mubr.bf16.mxu0 %v773
        %2409 = vmatmul.mubr.bf16.gmra.mrb[0].mxu0 %v772
        %v2410 = vpop.f32.mrb[0].mxu0
        %v2411 = vadd.f32 %v2138, %v2410
        %v2412 = vpop.f32.mrb[0].mxu0
        %v2413 = vadd.f32 %v2140, %v2412
        %v2414 = vpop.f32.mrb[0].mxu0
        %v2415 = vadd.f32 %v2142, %v2414
        %v2416 = vpop.f32.mrb[0].mxu0
        %v2417 = vadd.f32 %v2144, %v2416
        %2418 = vmatprep.mubr.bf16.mxu0 %v777
        %2419 = vmatmul.mubr.bf16.gmra.mrb[0].mxu0 %v776
        %v2420 = vpop.f32.mrb[0].mxu0
        %v2421 = vadd.f32 %v2148, %v2420
        %v2422 = vpop.f32.mrb[0].mxu0
        %v2423 = vadd.f32 %v2150, %v2422
        %v2424 = vpop.f32.mrb[0].mxu0
        %v2425 = vadd.f32 %v2152, %v2424
        %v2426 = vpop.f32.mrb[0].mxu0
        %v2427 = vadd.f32 %v2154, %v2426
        %2428 = vmatprep.mubr.bf16.mxu0 %v781
        %2429 = vmatmul.mubr.bf16.gmra.mrb[0].mxu0 %v780
        %v2430 = vpop.f32.mrb[0].mxu0
        %v2431 = vadd.f32 %v2158, %v2430
        %v2432 = vpop.f32.mrb[0].mxu0
        %v2433 = vadd.f32 %v2160, %v2432
        %v2434 = vpop.f32.mrb[0].mxu0
        %v2435 = vadd.f32 %v2162, %v2434
        %v2436 = vpop.f32.mrb[0].mxu0
        %v2437 = vadd.f32 %v2164, %v2436
        %2438 = vmatprep.mubr.bf16.mxu0 %v785
        %2439 = vmatmul.mubr.bf16.gmra.mrb[0].mxu0 %v784
        %v2440 = vpop.f32.mrb[0].mxu0
        %v2441 = vadd.f32 %v2168, %v2440
        %v2442 = vpop.f32.mrb[0].mxu0
        %v2443 = vadd.f32 %v2170, %v2442
        %v2444 = vpop.f32.mrb[0].mxu0
        %v2445 = vadd.f32 %v2172, %v2444
        %v2446 = vpop.f32.mrb[0].mxu0
        %v2447 = vadd.f32 %v2174, %v2446
        %2448 = vmatprep.mubr.bf16.mxu0 %v789
        %2449 = vmatmul.mubr.bf16.gmra.mrb[0].mxu0 %v788
        %v2450 = vpop.f32.mrb[0].mxu0
        %v2451 = vadd.f32 %v2178, %v2450
        %v2452 = vpop.f32.mrb[0].mxu0
        %v2453 = vadd.f32 %v2180, %v2452
        %v2454 = vpop.f32.mrb[0].mxu0
        %v2455 = vadd.f32 %v2182, %v2454
        %v2456 = vpop.f32.mrb[0].mxu0
        %v2457 = vadd.f32 %v2184, %v2456
        %2458 = vmatprep.mubr.bf16.mxu0 %v793
        %2459 = vmatmul.mubr.bf16.gmra.mrb[0].mxu0 %v792
        %v2460 = vpop.f32.mrb[0].mxu0
        %v2461 = vadd.f32 %v2188, %v2460
        %v2462 = vpop.f32.mrb[0].mxu0
        %v2463 = vadd.f32 %v2190, %v2462
        %v2464 = vpop.f32.mrb[0].mxu0
        %v2465 = vadd.f32 %v2192, %v2464
        %v2466 = vpop.f32.mrb[0].mxu0
        %v2467 = vadd.f32 %v2194, %v2466
        %2468 = vmatprep.mubr.bf16.mxu0 %v797
        %2469 = vmatmul.mubr.bf16.gmra.mrb[0].mxu0 %v796
        %v2470 = vpop.f32.mrb[0].mxu0
        %v2471 = vadd.f32 %v2198, %v2470
        %v2472 = vpop.f32.mrb[0].mxu0
        %v2473 = vadd.f32 %v2200, %v2472
        %v2474 = vpop.f32.mrb[0].mxu0
        %v2475 = vadd.f32 %v2202, %v2474
        %v2476 = vpop.f32.mrb[0].mxu0
        %v2477 = vadd.f32 %v2204, %v2476
        %2478 = vmatprep.mubr.bf16.mxu0 %v801
        %2479 = vmatmul.mubr.bf16.gmra.mrb[0].mxu0 %v800
        %v2480 = vpop.f32.mrb[0].mxu0
        %v2481 = vadd.f32 %v2208, %v2480
        %v2482 = vpop.f32.mrb[0].mxu0
        %v2483 = vadd.f32 %v2210, %v2482
        %v2484 = vpop.f32.mrb[0].mxu0
        %v2485 = vadd.f32 %v2212, %v2484
        %v2486 = vpop.f32.mrb[0].mxu0
        %v2487 = vadd.f32 %v2214, %v2486
        %2488 = vmatprep.mubr.bf16.mxu0 %v805
        %2489 = vmatmul.mubr.bf16.gmra.mrb[0].mxu0 %v804
        %v2490 = vpop.f32.mrb[0].mxu0
        %v2491 = vadd.f32 %v2218, %v2490
        %v2492 = vpop.f32.mrb[0].mxu0
        %v2493 = vadd.f32 %v2220, %v2492
        %v2494 = vpop.f32.mrb[0].mxu0
        %v2495 = vadd.f32 %v2222, %v2494
        %v2496 = vpop.f32.mrb[0].mxu0
        %v2497 = vadd.f32 %v2224, %v2496
        %2498 = vmatprep.mubr.bf16.mxu0 %v809
        %2499 = vmatmul.mubr.bf16.gmra.mrb[0].mxu0 %v808
        %v2500 = vpop.f32.mrb[0].mxu0
        %v2501 = vadd.f32 %v2228, %v2500
        %v2502 = vpop.f32.mrb[0].mxu0
        %v2503 = vadd.f32 %v2230, %v2502
        %v2504 = vpop.f32.mrb[0].mxu0
        %v2505 = vadd.f32 %v2232, %v2504
        %v2506 = vpop.f32.mrb[0].mxu0
        %v2507 = vadd.f32 %v2234, %v2506
        %2508 = vmatprep.mubr.bf16.mxu0 %v813
        %2509 = vmatmul.mubr.bf16.gmra.mrb[0].mxu0 %v812
        %v2510 = vpop.f32.mrb[0].mxu0
        %v2511 = vadd.f32 %v2238, %v2510
        %v2512 = vpop.f32.mrb[0].mxu0
        %v2513 = vadd.f32 %v2240, %v2512
        %v2514 = vpop.f32.mrb[0].mxu0
        %v2515 = vadd.f32 %v2242, %v2514
        %v2516 = vpop.f32.mrb[0].mxu0
        %v2517 = vadd.f32 %v2244, %v2516
        %2518 = vmatprep.mubr.bf16.mxu0 %v817
        %2519 = vmatmul.mubr.bf16.gmra.mrb[0].mxu0 %v816
        %v2520 = vpop.f32.mrb[0].mxu0
        %v2521 = vadd.f32 %v2248, %v2520
        %v2522 = vpop.f32.mrb[0].mxu0
        %v2523 = vadd.f32 %v2250, %v2522
        %v2524 = vpop.f32.mrb[0].mxu0
        %v2525 = vadd.f32 %v2252, %v2524
        %v2526 = vpop.f32.mrb[0].mxu0
        %v2527 = vadd.f32 %v2254, %v2526
        %2528 = vmatprep.mubr.bf16.mxu0 %v821
        %2529 = vmatmul.mubr.bf16.gmra.mrb[0].mxu0 %v820
        %v2530 = vpop.f32.mrb[0].mxu0
        %v2531 = vadd.f32 %v2258, %v2530
        %v2532 = vpop.f32.mrb[0].mxu0
        %v2533 = vadd.f32 %v2260, %v2532
        %v2534 = vpop.f32.mrb[0].mxu0
        %v2535 = vadd.f32 %v2262, %v2534
        %v2536 = vpop.f32.mrb[0].mxu0
        %v2537 = vadd.f32 %v2264, %v2536
        %2538 = vmatprep.mubr.bf16.mxu0 %v825
        %2539 = vmatmul.mubr.bf16.gmra.mrb[0].mxu0 %v824
        %v2540 = vpop.f32.mrb[0].mxu0
        %v2541 = vadd.f32 %v2268, %v2540
        %v2542 = vpop.f32.mrb[0].mxu0
        %v2543 = vadd.f32 %v2270, %v2542
        %v2544 = vpop.f32.mrb[0].mxu0
        %v2545 = vadd.f32 %v2272, %v2544
        %v2546 = vpop.f32.mrb[0].mxu0
        %v2547 = vadd.f32 %v2274, %v2546
        %2548 = vmatprep.mubr.bf16.mxu0 %v829
        %2549 = vmatmul.mubr.bf16.gmra.mrb[0].mxu0 %v828
        %v2550 = vpop.f32.mrb[0].mxu0
        %v2551 = vadd.f32 %v2278, %v2550
        %v2552 = vpop.f32.mrb[0].mxu0
        %v2553 = vadd.f32 %v2280, %v2552
        %v2554 = vpop.f32.mrb[0].mxu0
        %v2555 = vadd.f32 %v2282, %v2554
        %v2556 = vpop.f32.mrb[0].mxu0
        %v2557 = vadd.f32 %v2284, %v2556
        %2558 = vmatprep.mubr.bf16.mxu0 %v833
        %2559 = vmatmul.mubr.bf16.gmra.mrb[0].mxu0 %v832
        %v2560 = vpop.f32.mrb[0].mxu0
        %v2561 = vadd.f32 %v2288, %v2560
        %v2562 = vpop.f32.mrb[0].mxu0
        %v2563 = vadd.f32 %v2290, %v2562
        %v2564 = vpop.f32.mrb[0].mxu0
        %v2565 = vadd.f32 %v2292, %v2564
        %v2566 = vpop.f32.mrb[0].mxu0
        %v2567 = vadd.f32 %v2294, %v2566
        %2568 = vmatprep.mubr.bf16.mxu0 %v837
        %2569 = vmatmul.mubr.bf16.gmra.mrb[0].mxu0 %v836
        %v2570 = vpop.f32.mrb[0].mxu0
        %v2571 = vadd.f32 %v2298, %v2570
        %v2572 = vpop.f32.mrb[0].mxu0
        %v2573 = vadd.f32 %v2300, %v2572
        %v2574 = vpop.f32.mrb[0].mxu0
        %v2575 = vadd.f32 %v2302, %v2574
        %v2576 = vpop.f32.mrb[0].mxu0
        %v2577 = vadd.f32 %v2304, %v2576
        %2578 = vmatprep.mubr.bf16.mxu0 %v841
        %2579 = vmatmul.mubr.bf16.gmra.mrb[0].mxu0 %v840
        %v2580 = vpop.f32.mrb[0].mxu0
        %v2581 = vadd.f32 %v2308, %v2580
        %v2582 = vpop.f32.mrb[0].mxu0
        %v2583 = vadd.f32 %v2310, %v2582
        %v2584 = vpop.f32.mrb[0].mxu0
        %v2585 = vadd.f32 %v2312, %v2584
        %v2586 = vpop.f32.mrb[0].mxu0
        %v2587 = vadd.f32 %v2314, %v2586
        %2588 = vmatprep.mubr.bf16.mxu0 %v845
        %2589 = vmatmul.mubr.bf16.gmra.mrb[0].mxu0 %v844
        %v2590 = vpop.f32.mrb[0].mxu0
        %v2591 = vadd.f32 %v2318, %v2590
        %v2592 = vpop.f32.mrb[0].mxu0
        %v2593 = vadd.f32 %v2320, %v2592
        %v2594 = vpop.f32.mrb[0].mxu0
        %v2595 = vadd.f32 %v2322, %v2594
        %v2596 = vpop.f32.mrb[0].mxu0
        %v2597 = vadd.f32 %v2324, %v2596
        %2598 = vdwg.mxu0
        %v2599 = vmax.f32 %v1815, 0.0
        %v2600 = vmax.f32 %v1817, 0.0
        %v2601 = vmax.f32 %v2361, 0.0
        %v2602 = vmax.f32 %v2363, 0.0
        %v2603 = vmax.f32 %v1819, 0.0
        %v2604 = vmax.f32 %v1821, 0.0
        %v2605 = vmax.f32 %v2365, 0.0
        %v2606 = vmax.f32 %v2367, 0.0
        %v2607 = vmax.f32 %v1825, 0.0
        %v2608 = vmax.f32 %v1827, 0.0
        %v2609 = vmax.f32 %v2371, 0.0
        %v2610 = vmax.f32 %v2373, 0.0
        %v2611 = vmax.f32 %v1829, 0.0
        %v2612 = vmax.f32 %v1831, 0.0
        %v2613 = vmax.f32 %v2375, 0.0
        %v2614 = vmax.f32 %v2377, 0.0
        %v2615 = vmax.f32 %v1835, 0.0
        %v2616 = vmax.f32 %v1837, 0.0
        %v2617 = vmax.f32 %v2381, 0.0
        %v2618 = vmax.f32 %v2383, 0.0
        %v2619 = vmax.f32 %v1839, 0.0
        %v2620 = vmax.f32 %v1841, 0.0
        %v2621 = vmax.f32 %v2385, 0.0
        %v2622 = vmax.f32 %v2387, 0.0
        %v2623 = vmax.f32 %v1845, 0.0
        %v2624 = vmax.f32 %v1847, 0.0
        %v2625 = vmax.f32 %v2391, 0.0
        %v2626 = vmax.f32 %v2393, 0.0
        %v2627 = vmax.f32 %v1849, 0.0
        %v2628 = vmax.f32 %v1851, 0.0
        %v2629 = vmax.f32 %v2395, 0.0
        %v2630 = vmax.f32 %v2397, 0.0
        %v2631 = vmax.f32 %v1855, 0.0
        %v2632 = vmax.f32 %v1857, 0.0
        %v2633 = vmax.f32 %v2401, 0.0
        %v2634 = vmax.f32 %v2403, 0.0
        %v2635 = vmax.f32 %v1859, 0.0
        %v2636 = vmax.f32 %v1861, 0.0
        %v2637 = vmax.f32 %v2405, 0.0
        %v2638 = vmax.f32 %v2407, 0.0
        %v2639 = vmax.f32 %v1865, 0.0
        %v2640 = vmax.f32 %v1867, 0.0
        %v2641 = vmax.f32 %v2411, 0.0
        %v2642 = vmax.f32 %v2413, 0.0
        %v2643 = vmax.f32 %v1869, 0.0
        %v2644 = vmax.f32 %v1871, 0.0
        %v2645 = vmax.f32 %v2415, 0.0
        %v2646 = vmax.f32 %v2417, 0.0
        %v2647 = vmax.f32 %v1875, 0.0
        %v2648 = vmax.f32 %v1877, 0.0
        %v2649 = vmax.f32 %v2421, 0.0
        %v2650 = vmax.f32 %v2423, 0.0
        %v2651 = vmax.f32 %v1879, 0.0
        %v2652 = vmax.f32 %v1881, 0.0
        %v2653 = vmax.f32 %v2425, 0.0
        %v2654 = vmax.f32 %v2427, 0.0
        %v2655 = vmax.f32 %v1885, 0.0
        %v2656 = vmax.f32 %v1887, 0.0
        %v2657 = vmax.f32 %v2431, 0.0
        %v2658 = vmax.f32 %v2433, 0.0
        %v2659 = vmax.f32 %v1889, 0.0
        %v2660 = vmax.f32 %v1891, 0.0
        %v2661 = vmax.f32 %v2435, 0.0
        %v2662 = vmax.f32 %v2437, 0.0
        %v2663 = vmax.f32 %v1895, 0.0
        %v2664 = vmax.f32 %v1897, 0.0
        %v2665 = vmax.f32 %v2441, 0.0
        %v2666 = vmax.f32 %v2443, 0.0
        %v2667 = vmax.f32 %v1899, 0.0
        %v2668 = vmax.f32 %v1901, 0.0
        %v2669 = vmax.f32 %v2445, 0.0
        %v2670 = vmax.f32 %v2447, 0.0
        %v2671 = vmax.f32 %v1905, 0.0
        %v2672 = vmax.f32 %v1907, 0.0
        %v2673 = vmax.f32 %v2451, 0.0
        %v2674 = vmax.f32 %v2453, 0.0
        %v2675 = vmax.f32 %v1909, 0.0
        %v2676 = vmax.f32 %v1911, 0.0
        %v2677 = vmax.f32 %v2455, 0.0
        %v2678 = vmax.f32 %v2457, 0.0
        %v2679 = vmax.f32 %v1915, 0.0
        %v2680 = vmax.f32 %v1917, 0.0
        %v2681 = vmax.f32 %v2461, 0.0
        %v2682 = vmax.f32 %v2463, 0.0
        %v2683 = vmax.f32 %v1919, 0.0
        %v2684 = vmax.f32 %v1921, 0.0
        %v2685 = vmax.f32 %v2465, 0.0
        %v2686 = vmax.f32 %v2467, 0.0
        %v2687 = vmax.f32 %v1925, 0.0
        %v2688 = vmax.f32 %v1927, 0.0
        %v2689 = vmax.f32 %v2471, 0.0
        %v2690 = vmax.f32 %v2473, 0.0
        %v2691 = vmax.f32 %v1929, 0.0
        %v2692 = vmax.f32 %v1931, 0.0
        %v2693 = vmax.f32 %v2475, 0.0
        %v2694 = vmax.f32 %v2477, 0.0
        %v2695 = vmax.f32 %v1935, 0.0
        %v2696 = vmax.f32 %v1937, 0.0
        %v2697 = vmax.f32 %v2481, 0.0
        %v2698 = vmax.f32 %v2483, 0.0
        %v2699 = vmax.f32 %v1939, 0.0
        %v2700 = vmax.f32 %v1941, 0.0
        %v2701 = vmax.f32 %v2485, 0.0
        %v2702 = vmax.f32 %v2487, 0.0
        %v2703 = vmax.f32 %v1945, 0.0
        %v2704 = vmax.f32 %v1947, 0.0
        %v2705 = vmax.f32 %v2491, 0.0
        %v2706 = vmax.f32 %v2493, 0.0
        %v2707 = vmax.f32 %v1949, 0.0
        %v2708 = vmax.f32 %v1951, 0.0
        %v2709 = vmax.f32 %v2495, 0.0
        %v2710 = vmax.f32 %v2497, 0.0
        %v2711 = vmax.f32 %v1955, 0.0
        %v2712 = vmax.f32 %v1957, 0.0
        %v2713 = vmax.f32 %v2501, 0.0
        %v2714 = vmax.f32 %v2503, 0.0
        %v2715 = vmax.f32 %v1959, 0.0
        %v2716 = vmax.f32 %v1961, 0.0
        %v2717 = vmax.f32 %v2505, 0.0
        %v2718 = vmax.f32 %v2507, 0.0
        %v2719 = vmax.f32 %v1965, 0.0
        %v2720 = vmax.f32 %v1967, 0.0
        %v2721 = vmax.f32 %v2511, 0.0
        %v2722 = vmax.f32 %v2513, 0.0
        %v2723 = vmax.f32 %v1969, 0.0
        %v2724 = vmax.f32 %v1971, 0.0
        %v2725 = vmax.f32 %v2515, 0.0
        %v2726 = vmax.f32 %v2517, 0.0
        %v2727 = vmax.f32 %v1975, 0.0
        %v2728 = vmax.f32 %v1977, 0.0
        %v2729 = vmax.f32 %v2521, 0.0
        %v2730 = vmax.f32 %v2523, 0.0
        %v2731 = vmax.f32 %v1979, 0.0
        %v2732 = vmax.f32 %v1981, 0.0
        %v2733 = vmax.f32 %v2525, 0.0
        %v2734 = vmax.f32 %v2527, 0.0
        %v2735 = vmax.f32 %v1985, 0.0
        %v2736 = vmax.f32 %v1987, 0.0
        %v2737 = vmax.f32 %v2531, 0.0
        %v2738 = vmax.f32 %v2533, 0.0
        %v2739 = vmax.f32 %v1989, 0.0
        %v2740 = vmax.f32 %v1991, 0.0
        %v2741 = vmax.f32 %v2535, 0.0
        %v2742 = vmax.f32 %v2537, 0.0
        %v2743 = vmax.f32 %v1995, 0.0
        %v2744 = vmax.f32 %v1997, 0.0
        %v2745 = vmax.f32 %v2541, 0.0
        %v2746 = vmax.f32 %v2543, 0.0
        %v2747 = vmax.f32 %v1999, 0.0
        %v2748 = vmax.f32 %v2001, 0.0
        %v2749 = vmax.f32 %v2545, 0.0
        %v2750 = vmax.f32 %v2547, 0.0
        %v2751 = vmax.f32 %v2005, 0.0
        %v2752 = vmax.f32 %v2007, 0.0
        %v2753 = vmax.f32 %v2551, 0.0
        %v2754 = vmax.f32 %v2553, 0.0
        %v2755 = vmax.f32 %v2009, 0.0
        %v2756 = vmax.f32 %v2011, 0.0
        %v2757 = vmax.f32 %v2555, 0.0
        %v2758 = vmax.f32 %v2557, 0.0
        %v2759 = vmax.f32 %v2015, 0.0
        %v2760 = vmax.f32 %v2017, 0.0
        %v2761 = vmax.f32 %v2561, 0.0
        %v2762 = vmax.f32 %v2563, 0.0
        %v2763 = vmax.f32 %v2019, 0.0
        %v2764 = vmax.f32 %v2021, 0.0
        %v2765 = vmax.f32 %v2565, 0.0
        %v2766 = vmax.f32 %v2567, 0.0
        %v2767 = vmax.f32 %v2025, 0.0
        %v2768 = vmax.f32 %v2027, 0.0
        %v2769 = vmax.f32 %v2571, 0.0
        %v2770 = vmax.f32 %v2573, 0.0
        %v2771 = vmax.f32 %v2029, 0.0
        %v2772 = vmax.f32 %v2031, 0.0
        %v2773 = vmax.f32 %v2575, 0.0
        %v2774 = vmax.f32 %v2577, 0.0
        %v2775 = vmax.f32 %v2035, 0.0
        %v2776 = vmax.f32 %v2037, 0.0
        %v2777 = vmax.f32 %v2581, 0.0
        %v2778 = vmax.f32 %v2583, 0.0
        %v2779 = vmax.f32 %v2039, 0.0
        %v2780 = vmax.f32 %v2041, 0.0
        %v2781 = vmax.f32 %v2585, 0.0
        %v2782 = vmax.f32 %v2587, 0.0
        %v2783 = vmax.f32 %v2045, 0.0
        %v2784 = vmax.f32 %v2047, 0.0
        %v2785 = vmax.f32 %v2591, 0.0
        %v2786 = vmax.f32 %v2593, 0.0
        %v2787 = vmax.f32 %v2049, 0.0
        %v2788 = vmax.f32 %v2051, 0.0
        %v2789 = vmax.f32 %v2595, 0.0
        %v2790 = vmax.f32 %v2597, 0.0
        %v2791 = vpack.c.bf16 %v2603, %v2599
        %v2792 = vpack.c.bf16 %v2604, %v2600
        %v2793 = vpack.c.bf16 %v2605, %v2601
        %v2794 = vpack.c.bf16 %v2606, %v2602
        %v2795 = vpack.c.bf16 %v2611, %v2607
        %v2796 = vpack.c.bf16 %v2612, %v2608
        %v2797 = vpack.c.bf16 %v2613, %v2609
        %v2798 = vpack.c.bf16 %v2614, %v2610
        %v2799 = vpack.c.bf16 %v2619, %v2615
        %v2800 = vpack.c.bf16 %v2620, %v2616
        %v2801 = vpack.c.bf16 %v2621, %v2617
        %v2802 = vpack.c.bf16 %v2622, %v2618
        %v2803 = vpack.c.bf16 %v2627, %v2623
        %v2804 = vpack.c.bf16 %v2628, %v2624
        %v2805 = vpack.c.bf16 %v2629, %v2625
        %v2806 = vpack.c.bf16 %v2630, %v2626
        %v2807 = vpack.c.bf16 %v2635, %v2631
        %v2808 = vpack.c.bf16 %v2636, %v2632
        %v2809 = vpack.c.bf16 %v2637, %v2633
        %v2810 = vpack.c.bf16 %v2638, %v2634
        %v2811 = vpack.c.bf16 %v2643, %v2639
        %v2812 = vpack.c.bf16 %v2644, %v2640
        %v2813 = vpack.c.bf16 %v2645, %v2641
        %v2814 = vpack.c.bf16 %v2646, %v2642
        %v2815 = vpack.c.bf16 %v2651, %v2647
        %v2816 = vpack.c.bf16 %v2652, %v2648
        %v2817 = vpack.c.bf16 %v2653, %v2649
        %v2818 = vpack.c.bf16 %v2654, %v2650
        %v2819 = vpack.c.bf16 %v2659, %v2655
        %v2820 = vpack.c.bf16 %v2660, %v2656
        %v2821 = vpack.c.bf16 %v2661, %v2657
        %v2822 = vpack.c.bf16 %v2662, %v2658
        %v2823 = vpack.c.bf16 %v2667, %v2663
        %v2824 = vpack.c.bf16 %v2668, %v2664
        %v2825 = vpack.c.bf16 %v2669, %v2665
        %v2826 = vpack.c.bf16 %v2670, %v2666
        %v2827 = vpack.c.bf16 %v2675, %v2671
        %v2828 = vpack.c.bf16 %v2676, %v2672
        %v2829 = vpack.c.bf16 %v2677, %v2673
        %v2830 = vpack.c.bf16 %v2678, %v2674
        %v2831 = vpack.c.bf16 %v2683, %v2679
        %v2832 = vpack.c.bf16 %v2684, %v2680
        %v2833 = vpack.c.bf16 %v2685, %v2681
        %v2834 = vpack.c.bf16 %v2686, %v2682
        %v2835 = vpack.c.bf16 %v2691, %v2687
        %v2836 = vpack.c.bf16 %v2692, %v2688
        %v2837 = vpack.c.bf16 %v2693, %v2689
        %v2838 = vpack.c.bf16 %v2694, %v2690
        %v2839 = vpack.c.bf16 %v2699, %v2695
        %v2840 = vpack.c.bf16 %v2700, %v2696
        %v2841 = vpack.c.bf16 %v2701, %v2697
        %v2842 = vpack.c.bf16 %v2702, %v2698
        %v2843 = vpack.c.bf16 %v2707, %v2703
        %v2844 = vpack.c.bf16 %v2708, %v2704
        %v2845 = vpack.c.bf16 %v2709, %v2705
        %v2846 = vpack.c.bf16 %v2710, %v2706
        %v2847 = vpack.c.bf16 %v2715, %v2711
        %v2848 = vpack.c.bf16 %v2716, %v2712
        %v2849 = vpack.c.bf16 %v2717, %v2713
        %v2850 = vpack.c.bf16 %v2718, %v2714
        %v2851 = vpack.c.bf16 %v2723, %v2719
        %v2852 = vpack.c.bf16 %v2724, %v2720
        %v2853 = vpack.c.bf16 %v2725, %v2721
        %v2854 = vpack.c.bf16 %v2726, %v2722
        %v2855 = vpack.c.bf16 %v2731, %v2727
        %v2856 = vpack.c.bf16 %v2732, %v2728
        %v2857 = vpack.c.bf16 %v2733, %v2729
        %v2858 = vpack.c.bf16 %v2734, %v2730
        %v2859 = vpack.c.bf16 %v2739, %v2735
        %v2860 = vpack.c.bf16 %v2740, %v2736
        %v2861 = vpack.c.bf16 %v2741, %v2737
        %v2862 = vpack.c.bf16 %v2742, %v2738
        %v2863 = vpack.c.bf16 %v2747, %v2743
        %v2864 = vpack.c.bf16 %v2748, %v2744
        %v2865 = vpack.c.bf16 %v2749, %v2745
        %v2866 = vpack.c.bf16 %v2750, %v2746
        %v2867 = vpack.c.bf16 %v2755, %v2751
        %v2868 = vpack.c.bf16 %v2756, %v2752
        %v2869 = vpack.c.bf16 %v2757, %v2753
        %v2870 = vpack.c.bf16 %v2758, %v2754
        %v2871 = vpack.c.bf16 %v2763, %v2759
        %v2872 = vpack.c.bf16 %v2764, %v2760
        %v2873 = vpack.c.bf16 %v2765, %v2761
        %v2874 = vpack.c.bf16 %v2766, %v2762
        %v2875 = vpack.c.bf16 %v2771, %v2767
        %v2876 = vpack.c.bf16 %v2772, %v2768
        %v2877 = vpack.c.bf16 %v2773, %v2769
        %v2878 = vpack.c.bf16 %v2774, %v2770
        %v2879 = vpack.c.bf16 %v2779, %v2775
        %v2880 = vpack.c.bf16 %v2780, %v2776
        %v2881 = vpack.c.bf16 %v2781, %v2777
        %v2882 = vpack.c.bf16 %v2782, %v2778
        %v2883 = vpack.c.bf16 %v2787, %v2783
        %v2884 = vpack.c.bf16 %v2788, %v2784
        %v2885 = vpack.c.bf16 %v2789, %v2785
        %v2886 = vpack.c.bf16 %v2790, %v2786
        %v2888 = vlaneseq
        %v2889 = vshrl.u32 %v2888, 7
        %v2890 = vsub.s32 0, %v2889
        %v2891 = vrot.slane %v749, %v2890
        %v2892 = vlaneseq
        %v2893 = vshrl.u32 %v2892, 7
        %v2894 = vsub.s32 1, %v2893
        %v2895 = vrot.slane %v749, %v2894
        %v2896 = vlaneseq
        %v2897 = vshrl.u32 %v2896, 7
        %v2898 = vsub.s32 2, %v2897
        %v2899 = vrot.slane %v749, %v2898
        %v2900 = vlaneseq
        %v2901 = vshrl.u32 %v2900, 7
        %v2902 = vsub.s32 3, %v2901
        %v2903 = vrot.slane %v749, %v2902
        %v3036 = vunpack.c.l.b16 %v621
        %v3037 = vunpack.c.h.b16 %v621
        %v3038 = vunpack.c.l.b16 %v622
        %v3039 = vunpack.c.h.b16 %v622
        %v3040 = vunpack.c.l.b16 %v623
        %v3041 = vunpack.c.h.b16 %v623
        %v3042 = vunpack.c.l.b16 %v624
        %v3043 = vunpack.c.h.b16 %v624
        %v3044 = vunpack.c.l.b16 %v625
        %v3045 = vunpack.c.h.b16 %v625
        %v3046 = vunpack.c.l.b16 %v626
        %v3047 = vunpack.c.h.b16 %v626
        %v3048 = vunpack.c.l.b16 %v627
        %v3049 = vunpack.c.h.b16 %v627
        %v3050 = vunpack.c.l.b16 %v628
        %v3051 = vunpack.c.h.b16 %v628
        %v3052 = vunpack.c.l.b16 %v629
        %v3053 = vunpack.c.h.b16 %v629
        %v3054 = vunpack.c.l.b16 %v630
        %v3055 = vunpack.c.h.b16 %v630
        %v3056 = vunpack.c.l.b16 %v631
        %v3057 = vunpack.c.h.b16 %v631
        %v3058 = vunpack.c.l.b16 %v632
        %v3059 = vunpack.c.h.b16 %v632
        %v3060 = vunpack.c.l.b16 %v633
        %v3061 = vunpack.c.h.b16 %v633
        %v3062 = vunpack.c.l.b16 %v634
        %v3063 = vunpack.c.h.b16 %v634
        %v3064 = vunpack.c.l.b16 %v635
        %v3065 = vunpack.c.h.b16 %v635
        %v3066 = vunpack.c.l.b16 %v636
        %v3067 = vunpack.c.h.b16 %v636
        %v3068 = vunpack.c.l.b16 %v637
        %v3069 = vunpack.c.h.b16 %v637
        %v3070 = vunpack.c.l.b16 %v638
        %v3071 = vunpack.c.h.b16 %v638
        %v3072 = vunpack.c.l.b16 %v639
        %v3073 = vunpack.c.h.b16 %v639
        %v3074 = vunpack.c.l.b16 %v640
        %v3075 = vunpack.c.h.b16 %v640
        %v3076 = vunpack.c.l.b16 %v641
        %v3077 = vunpack.c.h.b16 %v641
        %v3078 = vunpack.c.l.b16 %v642
        %v3079 = vunpack.c.h.b16 %v642
        %v3080 = vunpack.c.l.b16 %v643
        %v3081 = vunpack.c.h.b16 %v643
        %v3082 = vunpack.c.l.b16 %v644
        %v3083 = vunpack.c.h.b16 %v644
        %v3084 = vunpack.c.l.b16 %v645
        %v3085 = vunpack.c.h.b16 %v645
        %v3086 = vunpack.c.l.b16 %v646
        %v3087 = vunpack.c.h.b16 %v646
        %v3088 = vunpack.c.l.b16 %v647
        %v3089 = vunpack.c.h.b16 %v647
        %v3090 = vunpack.c.l.b16 %v648
        %v3091 = vunpack.c.h.b16 %v648
        %v3092 = vunpack.c.l.b16 %v649
        %v3093 = vunpack.c.h.b16 %v649
        %v3094 = vunpack.c.l.b16 %v650
        %v3095 = vunpack.c.h.b16 %v650
        %v3096 = vunpack.c.l.b16 %v651
        %v3097 = vunpack.c.h.b16 %v651
        %v3098 = vunpack.c.l.b16 %v652
        %v3099 = vunpack.c.h.b16 %v652
        %v3100 = vunpack.c.l.b16 %v653
        %v3101 = vunpack.c.h.b16 %v653
        %v3102 = vunpack.c.l.b16 %v654
        %v3103 = vunpack.c.h.b16 %v654
        %v3104 = vunpack.c.l.b16 %v655
        %v3105 = vunpack.c.h.b16 %v655
        %v3106 = vunpack.c.l.b16 %v656
        %v3107 = vunpack.c.h.b16 %v656
        %v3108 = vunpack.c.l.b16 %v657
        %v3109 = vunpack.c.h.b16 %v657
        %v3110 = vunpack.c.l.b16 %v658
        %v3111 = vunpack.c.h.b16 %v658
        %v3112 = vunpack.c.l.b16 %v659
        %v3113 = vunpack.c.h.b16 %v659
        %v3114 = vunpack.c.l.b16 %v660
        %v3115 = vunpack.c.h.b16 %v660
        %v3116 = vunpack.c.l.b16 %v661
        %v3117 = vunpack.c.h.b16 %v661
        %v3118 = vunpack.c.l.b16 %v662
        %v3119 = vunpack.c.h.b16 %v662
        %v3120 = vunpack.c.l.b16 %v663
        %v3121 = vunpack.c.h.b16 %v663
        %v3122 = vunpack.c.l.b16 %v664
        %v3123 = vunpack.c.h.b16 %v664
        %v3124 = vunpack.c.l.b16 %v665
        %v3125 = vunpack.c.h.b16 %v665
        %v3126 = vunpack.c.l.b16 %v666
        %v3127 = vunpack.c.h.b16 %v666
        %v3128 = vunpack.c.l.b16 %v667
        %v3129 = vunpack.c.h.b16 %v667
        %v3130 = vunpack.c.l.b16 %v668
        %v3131 = vunpack.c.h.b16 %v668
        %v3132 = vunpack.c.l.b16 %v669
        %v3133 = vunpack.c.h.b16 %v669
        %v3134 = vunpack.c.l.b16 %v670
        %v3135 = vunpack.c.h.b16 %v670
        %v3136 = vunpack.c.l.b16 %v671
        %v3137 = vunpack.c.h.b16 %v671
        %v3138 = vunpack.c.l.b16 %v672
        %v3139 = vunpack.c.h.b16 %v672
        %v3140 = vunpack.c.l.b16 %v673
        %v3141 = vunpack.c.h.b16 %v673
        %v3142 = vunpack.c.l.b16 %v674
        %v3143 = vunpack.c.h.b16 %v674
        %v3144 = vunpack.c.l.b16 %v675
        %v3145 = vunpack.c.h.b16 %v675
        %v3146 = vunpack.c.l.b16 %v676
        %v3147 = vunpack.c.h.b16 %v676
        %v3148 = vunpack.c.l.b16 %v677
        %v3149 = vunpack.c.h.b16 %v677
        %v3150 = vunpack.c.l.b16 %v678
        %v3151 = vunpack.c.h.b16 %v678
        %v3152 = vunpack.c.l.b16 %v679
        %v3153 = vunpack.c.h.b16 %v679
        %v3154 = vunpack.c.l.b16 %v680
        %v3155 = vunpack.c.h.b16 %v680
        %v3156 = vunpack.c.l.b16 %v681
        %v3157 = vunpack.c.h.b16 %v681
        %v3158 = vunpack.c.l.b16 %v682
        %v3159 = vunpack.c.h.b16 %v682
        %v3160 = vunpack.c.l.b16 %v683
        %v3161 = vunpack.c.h.b16 %v683
        %v3162 = vunpack.c.l.b16 %v684
        %v3163 = vunpack.c.h.b16 %v684
        %v3164 = vunpack.c.l.b16 %v685
        %v3165 = vunpack.c.h.b16 %v685
        %v3166 = vunpack.c.l.b16 %v686
        %v3167 = vunpack.c.h.b16 %v686
        %v3168 = vunpack.c.l.b16 %v687
        %v3169 = vunpack.c.h.b16 %v687
        %v3170 = vunpack.c.l.b16 %v688
        %v3171 = vunpack.c.h.b16 %v688
        %v3172 = vunpack.c.l.b16 %v689
        %v3173 = vunpack.c.h.b16 %v689
        %v3174 = vunpack.c.l.b16 %v690
        %v3175 = vunpack.c.h.b16 %v690
        %v3176 = vunpack.c.l.b16 %v691
        %v3177 = vunpack.c.h.b16 %v691
        %v3178 = vunpack.c.l.b16 %v692
        %v3179 = vunpack.c.h.b16 %v692
        %v3180 = vunpack.c.l.b16 %v693
        %v3181 = vunpack.c.h.b16 %v693
        %v3182 = vunpack.c.l.b16 %v694
        %v3183 = vunpack.c.h.b16 %v694
        %v3184 = vunpack.c.l.b16 %v695
        %v3185 = vunpack.c.h.b16 %v695
        %v3186 = vunpack.c.l.b16 %v696
        %v3187 = vunpack.c.h.b16 %v696
        %v3188 = vunpack.c.l.b16 %v697
        %v3189 = vunpack.c.h.b16 %v697
        %v3190 = vunpack.c.l.b16 %v698
        %v3191 = vunpack.c.h.b16 %v698
        %v3192 = vunpack.c.l.b16 %v699
        %v3193 = vunpack.c.h.b16 %v699
        %v3194 = vunpack.c.l.b16 %v700
        %v3195 = vunpack.c.h.b16 %v700
        %v3196 = vunpack.c.l.b16 %v701
        %v3197 = vunpack.c.h.b16 %v701
        %v3198 = vunpack.c.l.b16 %v702
        %v3199 = vunpack.c.h.b16 %v702
        %v3200 = vunpack.c.l.b16 %v703
        %v3201 = vunpack.c.h.b16 %v703
        %v3202 = vunpack.c.l.b16 %v704
        %v3203 = vunpack.c.h.b16 %v704
        %v3204 = vunpack.c.l.b16 %v705
        %v3205 = vunpack.c.h.b16 %v705
        %v3206 = vunpack.c.l.b16 %v706
        %v3207 = vunpack.c.h.b16 %v706
        %v3208 = vunpack.c.l.b16 %v707
        %v3209 = vunpack.c.h.b16 %v707
        %v3210 = vunpack.c.l.b16 %v708
        %v3211 = vunpack.c.h.b16 %v708
        %v3212 = vunpack.c.l.b16 %v709
        %v3213 = vunpack.c.h.b16 %v709
        %v3214 = vunpack.c.l.b16 %v710
        %v3215 = vunpack.c.h.b16 %v710
        %v3216 = vunpack.c.l.b16 %v711
        %v3217 = vunpack.c.h.b16 %v711
        %v3218 = vunpack.c.l.b16 %v712
        %v3219 = vunpack.c.h.b16 %v712
        %v3220 = vunpack.c.l.b16 %v713
        %v3221 = vunpack.c.h.b16 %v713
        %v3222 = vunpack.c.l.b16 %v714
        %v3223 = vunpack.c.h.b16 %v714
        %v3224 = vunpack.c.l.b16 %v715
        %v3225 = vunpack.c.h.b16 %v715
        %v3226 = vunpack.c.l.b16 %v716
        %v3227 = vunpack.c.h.b16 %v716
        %v3228 = vunpack.c.l.b16 %v717
        %v3229 = vunpack.c.h.b16 %v717
        %v3230 = vunpack.c.l.b16 %v718
        %v3231 = vunpack.c.h.b16 %v718
        %v3232 = vunpack.c.l.b16 %v719
        %v3233 = vunpack.c.h.b16 %v719
        %v3234 = vunpack.c.l.b16 %v720
        %v3235 = vunpack.c.h.b16 %v720
        %v3236 = vunpack.c.l.b16 %v721
        %v3237 = vunpack.c.h.b16 %v721
        %v3238 = vunpack.c.l.b16 %v722
        %v3239 = vunpack.c.h.b16 %v722
        %v3240 = vunpack.c.l.b16 %v723
        %v3241 = vunpack.c.h.b16 %v723
        %v3242 = vunpack.c.l.b16 %v724
        %v3243 = vunpack.c.h.b16 %v724
        %v3244 = vunpack.c.l.b16 %v725
        %v3245 = vunpack.c.h.b16 %v725
        %v3246 = vunpack.c.l.b16 %v726
        %v3247 = vunpack.c.h.b16 %v726
        %v3248 = vunpack.c.l.b16 %v727
        %v3249 = vunpack.c.h.b16 %v727
        %v3250 = vunpack.c.l.b16 %v728
        %v3251 = vunpack.c.h.b16 %v728
        %v3252 = vunpack.c.l.b16 %v729
        %v3253 = vunpack.c.h.b16 %v729
        %v3254 = vunpack.c.l.b16 %v730
        %v3255 = vunpack.c.h.b16 %v730
        %v3256 = vunpack.c.l.b16 %v731
        %v3257 = vunpack.c.h.b16 %v731
        %v3258 = vunpack.c.l.b16 %v732
        %v3259 = vunpack.c.h.b16 %v732
        %v3260 = vunpack.c.l.b16 %v733
        %v3261 = vunpack.c.h.b16 %v733
        %v3262 = vunpack.c.l.b16 %v734
        %v3263 = vunpack.c.h.b16 %v734
        %v3264 = vunpack.c.l.b16 %v735
        %v3265 = vunpack.c.h.b16 %v735
        %v3266 = vunpack.c.l.b16 %v736
        %v3267 = vunpack.c.h.b16 %v736
        %v3268 = vunpack.c.l.b16 %v737
        %v3269 = vunpack.c.h.b16 %v737
        %v3270 = vunpack.c.l.b16 %v738
        %v3271 = vunpack.c.h.b16 %v738
        %v3272 = vunpack.c.l.b16 %v739
        %v3273 = vunpack.c.h.b16 %v739
        %v3274 = vunpack.c.l.b16 %v740
        %v3275 = vunpack.c.h.b16 %v740
        %v3276 = vunpack.c.l.b16 %v741
        %v3277 = vunpack.c.h.b16 %v741
        %v3278 = vunpack.c.l.b16 %v742
        %v3279 = vunpack.c.h.b16 %v742
        %v3280 = vunpack.c.l.b16 %v743
        %v3281 = vunpack.c.h.b16 %v743
        %v3282 = vunpack.c.l.b16 %v744
        %v3283 = vunpack.c.h.b16 %v744
        %v3284 = vunpack.c.l.b16 %v745
        %v3285 = vunpack.c.h.b16 %v745
        %v3286 = vunpack.c.l.b16 %v746
        %v3287 = vunpack.c.h.b16 %v746
        %v3288 = vunpack.c.l.b16 %v747
        %v3289 = vunpack.c.h.b16 %v747
        %v3290 = vunpack.c.l.b16 %v748
        %v3291 = vunpack.c.h.b16 %v748
        %v3292 = vpack.c.b16 %v3040, %v3036
        %v3293 = vpack.c.b16 %v3041, %v3037
        %v3294 = vpack.c.b16 %v3042, %v3038
        %v3295 = vpack.c.b16 %v3043, %v3039
        %v3296 = vpack.c.b16 %v3048, %v3044
        %v3297 = vpack.c.b16 %v3049, %v3045
        %v3298 = vpack.c.b16 %v3050, %v3046
        %v3299 = vpack.c.b16 %v3051, %v3047
        %v3300 = vpack.c.b16 %v3056, %v3052
        %v3301 = vpack.c.b16 %v3057, %v3053
        %v3302 = vpack.c.b16 %v3058, %v3054
        %v3303 = vpack.c.b16 %v3059, %v3055
        %v3304 = vpack.c.b16 %v3064, %v3060
        %v3305 = vpack.c.b16 %v3065, %v3061
        %v3306 = vpack.c.b16 %v3066, %v3062
        %v3307 = vpack.c.b16 %v3067, %v3063
        %v3308 = vpack.c.b16 %v3072, %v3068
        %v3309 = vpack.c.b16 %v3073, %v3069
        %v3310 = vpack.c.b16 %v3074, %v3070
        %v3311 = vpack.c.b16 %v3075, %v3071
        %v3312 = vpack.c.b16 %v3080, %v3076
        %v3313 = vpack.c.b16 %v3081, %v3077
        %v3314 = vpack.c.b16 %v3082, %v3078
        %v3315 = vpack.c.b16 %v3083, %v3079
        %v3316 = vpack.c.b16 %v3088, %v3084
        %v3317 = vpack.c.b16 %v3089, %v3085
        %v3318 = vpack.c.b16 %v3090, %v3086
        %v3319 = vpack.c.b16 %v3091, %v3087
        %v3320 = vpack.c.b16 %v3096, %v3092
        %v3321 = vpack.c.b16 %v3097, %v3093
        %v3322 = vpack.c.b16 %v3098, %v3094
        %v3323 = vpack.c.b16 %v3099, %v3095
        %v3324 = vpack.c.b16 %v3104, %v3100
        %v3325 = vpack.c.b16 %v3105, %v3101
        %v3326 = vpack.c.b16 %v3106, %v3102
        %v3327 = vpack.c.b16 %v3107, %v3103
        %v3328 = vpack.c.b16 %v3112, %v3108
        %v3329 = vpack.c.b16 %v3113, %v3109
        %v3330 = vpack.c.b16 %v3114, %v3110
        %v3331 = vpack.c.b16 %v3115, %v3111
        %v3332 = vpack.c.b16 %v3120, %v3116
        %v3333 = vpack.c.b16 %v3121, %v3117
        %v3334 = vpack.c.b16 %v3122, %v3118
        %v3335 = vpack.c.b16 %v3123, %v3119
        %v3336 = vpack.c.b16 %v3128, %v3124
        %v3337 = vpack.c.b16 %v3129, %v3125
        %v3338 = vpack.c.b16 %v3130, %v3126
        %v3339 = vpack.c.b16 %v3131, %v3127
        %v3340 = vpack.c.b16 %v3136, %v3132
        %v3341 = vpack.c.b16 %v3137, %v3133
        %v3342 = vpack.c.b16 %v3138, %v3134
        %v3343 = vpack.c.b16 %v3139, %v3135
        %v3344 = vpack.c.b16 %v3144, %v3140
        %v3345 = vpack.c.b16 %v3145, %v3141
        %v3346 = vpack.c.b16 %v3146, %v3142
        %v3347 = vpack.c.b16 %v3147, %v3143
        %v3348 = vpack.c.b16 %v3152, %v3148
        %v3349 = vpack.c.b16 %v3153, %v3149
        %v3350 = vpack.c.b16 %v3154, %v3150
        %v3351 = vpack.c.b16 %v3155, %v3151
        %v3352 = vpack.c.b16 %v3160, %v3156
        %v3353 = vpack.c.b16 %v3161, %v3157
        %v3354 = vpack.c.b16 %v3162, %v3158
        %v3355 = vpack.c.b16 %v3163, %v3159
        %v3356 = vpack.c.b16 %v3168, %v3164
        %v3357 = vpack.c.b16 %v3169, %v3165
        %v3358 = vpack.c.b16 %v3170, %v3166
        %v3359 = vpack.c.b16 %v3171, %v3167
        %v3360 = vpack.c.b16 %v3176, %v3172
        %v3361 = vpack.c.b16 %v3177, %v3173
        %v3362 = vpack.c.b16 %v3178, %v3174
        %v3363 = vpack.c.b16 %v3179, %v3175
        %v3364 = vpack.c.b16 %v3184, %v3180
        %v3365 = vpack.c.b16 %v3185, %v3181
        %v3366 = vpack.c.b16 %v3186, %v3182
        %v3367 = vpack.c.b16 %v3187, %v3183
        %v3368 = vpack.c.b16 %v3192, %v3188
        %v3369 = vpack.c.b16 %v3193, %v3189
        %v3370 = vpack.c.b16 %v3194, %v3190
        %v3371 = vpack.c.b16 %v3195, %v3191
        %v3372 = vpack.c.b16 %v3200, %v3196
        %v3373 = vpack.c.b16 %v3201, %v3197
        %v3374 = vpack.c.b16 %v3202, %v3198
        %v3375 = vpack.c.b16 %v3203, %v3199
        %v3376 = vpack.c.b16 %v3208, %v3204
        %v3377 = vpack.c.b16 %v3209, %v3205
        %v3378 = vpack.c.b16 %v3210, %v3206
        %v3379 = vpack.c.b16 %v3211, %v3207
        %v3380 = vpack.c.b16 %v3216, %v3212
        %v3381 = vpack.c.b16 %v3217, %v3213
        %v3382 = vpack.c.b16 %v3218, %v3214
        %v3383 = vpack.c.b16 %v3219, %v3215
        %v3384 = vpack.c.b16 %v3224, %v3220
        %v3385 = vpack.c.b16 %v3225, %v3221
        %v3386 = vpack.c.b16 %v3226, %v3222
        %v3387 = vpack.c.b16 %v3227, %v3223
        %v3388 = vpack.c.b16 %v3232, %v3228
        %v3389 = vpack.c.b16 %v3233, %v3229
        %v3390 = vpack.c.b16 %v3234, %v3230
        %v3391 = vpack.c.b16 %v3235, %v3231
        %v3392 = vpack.c.b16 %v3240, %v3236
        %v3393 = vpack.c.b16 %v3241, %v3237
        %v3394 = vpack.c.b16 %v3242, %v3238
        %v3395 = vpack.c.b16 %v3243, %v3239
        %v3396 = vpack.c.b16 %v3248, %v3244
        %v3397 = vpack.c.b16 %v3249, %v3245
        %v3398 = vpack.c.b16 %v3250, %v3246
        %v3399 = vpack.c.b16 %v3251, %v3247
        %v3400 = vpack.c.b16 %v3256, %v3252
        %v3401 = vpack.c.b16 %v3257, %v3253
        %v3402 = vpack.c.b16 %v3258, %v3254
        %v3403 = vpack.c.b16 %v3259, %v3255
        %v3404 = vpack.c.b16 %v3264, %v3260
        %v3405 = vpack.c.b16 %v3265, %v3261
        %v3406 = vpack.c.b16 %v3266, %v3262
        %v3407 = vpack.c.b16 %v3267, %v3263
        %v3408 = vpack.c.b16 %v3272, %v3268
        %v3409 = vpack.c.b16 %v3273, %v3269
        %v3410 = vpack.c.b16 %v3274, %v3270
        %v3411 = vpack.c.b16 %v3275, %v3271
        %v3412 = vpack.c.b16 %v3280, %v3276
        %v3413 = vpack.c.b16 %v3281, %v3277
        %v3414 = vpack.c.b16 %v3282, %v3278
        %v3415 = vpack.c.b16 %v3283, %v3279
        %v3416 = vpack.c.b16 %v3288, %v3284
        %v3417 = vpack.c.b16 %v3289, %v3285
        %v3418 = vpack.c.b16 %v3290, %v3286
        %v3419 = vpack.c.b16 %v3291, %v3287
        %3548 = vmatprep.subr.bf16.mxu0 %v3293
        %3549 = vmatpush1.bf16.msra.mxu0 %v3292
        %3550 = vmatprep.subr.bf16.mxu0 %v3297
        %3551 = vmatpush1.bf16.msra.mxu0 %v3296
        %3552 = vmatprep.subr.bf16.mxu0 %v3301
        %3553 = vmatpush1.bf16.msra.mxu0 %v3300
        %3554 = vmatprep.subr.bf16.mxu0 %v3305
        %3555 = vmatpush1.bf16.msra.mxu0 %v3304
        %3556 = vmatprep.subr.bf16.mxu0 %v3309
        %3557 = vmatpush1.bf16.msra.mxu0 %v3308
        %3558 = vmatprep.subr.bf16.mxu0 %v3313
        %3559 = vmatpush1.bf16.msra.mxu0 %v3312
        %3560 = vmatprep.subr.bf16.mxu0 %v3317
        %3561 = vmatpush1.bf16.msra.mxu0 %v3316
        %3562 = vmatprep.subr.bf16.mxu0 %v3321
        %3563 = vmatpush1.bf16.msra.mxu0 %v3320
        %3564 = vmatprep.subr.bf16.mxu0 %v3325
        %3565 = vmatpush1.bf16.msra.mxu0 %v3324
        %3566 = vmatprep.subr.bf16.mxu0 %v3329
        %3567 = vmatpush1.bf16.msra.mxu0 %v3328
        %3568 = vmatprep.subr.bf16.mxu0 %v3333
        %3569 = vmatpush1.bf16.msra.mxu0 %v3332
        %3570 = vmatprep.subr.bf16.mxu0 %v3337
        %3571 = vmatpush1.bf16.msra.mxu0 %v3336
        %3572 = vmatprep.subr.bf16.mxu0 %v3341
        %3573 = vmatpush1.bf16.msra.mxu0 %v3340
        %3574 = vmatprep.subr.bf16.mxu0 %v3345
        %3575 = vmatpush1.bf16.msra.mxu0 %v3344
        %3576 = vmatprep.subr.bf16.mxu0 %v3349
        %3577 = vmatpush1.bf16.msra.mxu0 %v3348
        %3578 = vmatprep.subr.bf16.mxu0 %v3353
        %3579 = vmatpush1.bf16.msra.mxu0 %v3352
        %3580 = vmatprep.mubr.bf16.mxu0 %v2792
        %3581 = vmatmul.mubr.bf16.gmra.mrb[0].mxu0 %v2791
        %v3582 = vpop.f32.mrb[0].mxu0
        %v3583 = vadd.f32 %v2891, %v3582
        %v3584 = vpop.f32.mrb[0].mxu0
        %v3585 = vadd.f32 %v2895, %v3584
        %v3586 = vpop.f32.mrb[0].mxu0
        %v3587 = vadd.f32 %v2891, %v3586
        %v3588 = vpop.f32.mrb[0].mxu0
        %v3589 = vadd.f32 %v2895, %v3588
        %3590 = vmatprep.mubr.bf16.mxu0 %v2796
        %3591 = vmatmul.mubr.bf16.gmra.mrb[0].mxu0 %v2795
        %v3592 = vpop.f32.mrb[0].mxu0
        %v3593 = vadd.f32 %v2891, %v3592
        %v3594 = vpop.f32.mrb[0].mxu0
        %v3595 = vadd.f32 %v2895, %v3594
        %v3596 = vpop.f32.mrb[0].mxu0
        %v3597 = vadd.f32 %v2891, %v3596
        %v3598 = vpop.f32.mrb[0].mxu0
        %v3599 = vadd.f32 %v2895, %v3598
        %3600 = vmatprep.mubr.bf16.mxu0 %v2800
        %3601 = vmatmul.mubr.bf16.gmra.mrb[0].mxu0 %v2799
        %v3602 = vpop.f32.mrb[0].mxu0
        %v3603 = vadd.f32 %v2891, %v3602
        %v3604 = vpop.f32.mrb[0].mxu0
        %v3605 = vadd.f32 %v2895, %v3604
        %v3606 = vpop.f32.mrb[0].mxu0
        %v3607 = vadd.f32 %v2891, %v3606
        %v3608 = vpop.f32.mrb[0].mxu0
        %v3609 = vadd.f32 %v2895, %v3608
        %3610 = vmatprep.mubr.bf16.mxu0 %v2804
        %3611 = vmatmul.mubr.bf16.gmra.mrb[0].mxu0 %v2803
        %v3612 = vpop.f32.mrb[0].mxu0
        %v3613 = vadd.f32 %v2891, %v3612
        %v3614 = vpop.f32.mrb[0].mxu0
        %v3615 = vadd.f32 %v2895, %v3614
        %v3616 = vpop.f32.mrb[0].mxu0
        %v3617 = vadd.f32 %v2891, %v3616
        %v3618 = vpop.f32.mrb[0].mxu0
        %v3619 = vadd.f32 %v2895, %v3618
        %3620 = vmatprep.mubr.bf16.mxu0 %v2808
        %3621 = vmatmul.mubr.bf16.gmra.mrb[0].mxu0 %v2807
        %v3622 = vpop.f32.mrb[0].mxu0
        %v3623 = vadd.f32 %v2891, %v3622
        %v3624 = vpop.f32.mrb[0].mxu0
        %v3625 = vadd.f32 %v2895, %v3624
        %v3626 = vpop.f32.mrb[0].mxu0
        %v3627 = vadd.f32 %v2891, %v3626
        %v3628 = vpop.f32.mrb[0].mxu0
        %v3629 = vadd.f32 %v2895, %v3628
        %3630 = vmatprep.mubr.bf16.mxu0 %v2812
        %3631 = vmatmul.mubr.bf16.gmra.mrb[0].mxu0 %v2811
        %v3632 = vpop.f32.mrb[0].mxu0
        %v3633 = vadd.f32 %v2891, %v3632
        %v3634 = vpop.f32.mrb[0].mxu0
        %v3635 = vadd.f32 %v2895, %v3634
        %v3636 = vpop.f32.mrb[0].mxu0
        %v3637 = vadd.f32 %v2891, %v3636
        %v3638 = vpop.f32.mrb[0].mxu0
        %v3639 = vadd.f32 %v2895, %v3638
        %3640 = vmatprep.mubr.bf16.mxu0 %v2816
        %3641 = vmatmul.mubr.bf16.gmra.mrb[0].mxu0 %v2815
        %v3642 = vpop.f32.mrb[0].mxu0
        %v3643 = vadd.f32 %v2891, %v3642
        %v3644 = vpop.f32.mrb[0].mxu0
        %v3645 = vadd.f32 %v2895, %v3644
        %v3646 = vpop.f32.mrb[0].mxu0
        %v3647 = vadd.f32 %v2891, %v3646
        %v3648 = vpop.f32.mrb[0].mxu0
        %v3649 = vadd.f32 %v2895, %v3648
        %3650 = vmatprep.mubr.bf16.mxu0 %v2820
        %3651 = vmatmul.mubr.bf16.gmra.mrb[0].mxu0 %v2819
        %v3652 = vpop.f32.mrb[0].mxu0
        %v3653 = vadd.f32 %v2891, %v3652
        %v3654 = vpop.f32.mrb[0].mxu0
        %v3655 = vadd.f32 %v2895, %v3654
        %v3656 = vpop.f32.mrb[0].mxu0
        %v3657 = vadd.f32 %v2891, %v3656
        %v3658 = vpop.f32.mrb[0].mxu0
        %v3659 = vadd.f32 %v2895, %v3658
        %3660 = vmatprep.mubr.bf16.mxu0 %v2824
        %3661 = vmatmul.mubr.bf16.gmra.mrb[0].mxu0 %v2823
        %v3662 = vpop.f32.mrb[0].mxu0
        %v3663 = vadd.f32 %v2891, %v3662
        %v3664 = vpop.f32.mrb[0].mxu0
        %v3665 = vadd.f32 %v2895, %v3664
        %v3666 = vpop.f32.mrb[0].mxu0
        %v3667 = vadd.f32 %v2891, %v3666
        %v3668 = vpop.f32.mrb[0].mxu0
        %v3669 = vadd.f32 %v2895, %v3668
        %3670 = vmatprep.mubr.bf16.mxu0 %v2828
        %3671 = vmatmul.mubr.bf16.gmra.mrb[0].mxu0 %v2827
        %v3672 = vpop.f32.mrb[0].mxu0
        %v3673 = vadd.f32 %v2891, %v3672
        %v3674 = vpop.f32.mrb[0].mxu0
        %v3675 = vadd.f32 %v2895, %v3674
        %v3676 = vpop.f32.mrb[0].mxu0
        %v3677 = vadd.f32 %v2891, %v3676
        %v3678 = vpop.f32.mrb[0].mxu0
        %v3679 = vadd.f32 %v2895, %v3678
        %3680 = vmatprep.mubr.bf16.mxu0 %v2832
        %3681 = vmatmul.mubr.bf16.gmra.mrb[0].mxu0 %v2831
        %v3682 = vpop.f32.mrb[0].mxu0
        %v3683 = vadd.f32 %v2891, %v3682
        %v3684 = vpop.f32.mrb[0].mxu0
        %v3685 = vadd.f32 %v2895, %v3684
        %v3686 = vpop.f32.mrb[0].mxu0
        %v3687 = vadd.f32 %v2891, %v3686
        %v3688 = vpop.f32.mrb[0].mxu0
        %v3689 = vadd.f32 %v2895, %v3688
        %3690 = vmatprep.mubr.bf16.mxu0 %v2836
        %3691 = vmatmul.mubr.bf16.gmra.mrb[0].mxu0 %v2835
        %v3692 = vpop.f32.mrb[0].mxu0
        %v3693 = vadd.f32 %v2891, %v3692
        %v3694 = vpop.f32.mrb[0].mxu0
        %v3695 = vadd.f32 %v2895, %v3694
        %v3696 = vpop.f32.mrb[0].mxu0
        %v3697 = vadd.f32 %v2891, %v3696
        %v3698 = vpop.f32.mrb[0].mxu0
        %v3699 = vadd.f32 %v2895, %v3698
        %3700 = vmatprep.mubr.bf16.mxu0 %v2840
        %3701 = vmatmul.mubr.bf16.gmra.mrb[0].mxu0 %v2839
        %v3702 = vpop.f32.mrb[0].mxu0
        %v3703 = vadd.f32 %v2891, %v3702
        %v3704 = vpop.f32.mrb[0].mxu0
        %v3705 = vadd.f32 %v2895, %v3704
        %v3706 = vpop.f32.mrb[0].mxu0
        %v3707 = vadd.f32 %v2891, %v3706
        %v3708 = vpop.f32.mrb[0].mxu0
        %v3709 = vadd.f32 %v2895, %v3708
        %3710 = vmatprep.mubr.bf16.mxu0 %v2844
        %3711 = vmatmul.mubr.bf16.gmra.mrb[0].mxu0 %v2843
        %v3712 = vpop.f32.mrb[0].mxu0
        %v3713 = vadd.f32 %v2891, %v3712
        %v3714 = vpop.f32.mrb[0].mxu0
        %v3715 = vadd.f32 %v2895, %v3714
        %v3716 = vpop.f32.mrb[0].mxu0
        %v3717 = vadd.f32 %v2891, %v3716
        %v3718 = vpop.f32.mrb[0].mxu0
        %v3719 = vadd.f32 %v2895, %v3718
        %3720 = vmatprep.mubr.bf16.mxu0 %v2848
        %3721 = vmatmul.mubr.bf16.gmra.mrb[0].mxu0 %v2847
        %v3722 = vpop.f32.mrb[0].mxu0
        %v3723 = vadd.f32 %v2891, %v3722
        %v3724 = vpop.f32.mrb[0].mxu0
        %v3725 = vadd.f32 %v2895, %v3724
        %v3726 = vpop.f32.mrb[0].mxu0
        %v3727 = vadd.f32 %v2891, %v3726
        %v3728 = vpop.f32.mrb[0].mxu0
        %v3729 = vadd.f32 %v2895, %v3728
        %3730 = vmatprep.mubr.bf16.mxu0 %v2852
        %3731 = vmatmul.mubr.bf16.gmra.mrb[0].mxu0 %v2851
        %v3732 = vpop.f32.mrb[0].mxu0
        %v3733 = vadd.f32 %v2891, %v3732
        %v3734 = vpop.f32.mrb[0].mxu0
        %v3735 = vadd.f32 %v2895, %v3734
        %v3736 = vpop.f32.mrb[0].mxu0
        %v3737 = vadd.f32 %v2891, %v3736
        %v3738 = vpop.f32.mrb[0].mxu0
        %v3739 = vadd.f32 %v2895, %v3738
        %3740 = vmatprep.mubr.bf16.mxu0 %v2856
        %3741 = vmatmul.mubr.bf16.gmra.mrb[0].mxu0 %v2855
        %v3742 = vpop.f32.mrb[0].mxu0
        %v3743 = vadd.f32 %v2891, %v3742
        %v3744 = vpop.f32.mrb[0].mxu0
        %v3745 = vadd.f32 %v2895, %v3744
        %v3746 = vpop.f32.mrb[0].mxu0
        %v3747 = vadd.f32 %v2891, %v3746
        %v3748 = vpop.f32.mrb[0].mxu0
        %v3749 = vadd.f32 %v2895, %v3748
        %3750 = vmatprep.mubr.bf16.mxu0 %v2860
        %3751 = vmatmul.mubr.bf16.gmra.mrb[0].mxu0 %v2859
        %v3752 = vpop.f32.mrb[0].mxu0
        %v3753 = vadd.f32 %v2891, %v3752
        %v3754 = vpop.f32.mrb[0].mxu0
        %v3755 = vadd.f32 %v2895, %v3754
        %v3756 = vpop.f32.mrb[0].mxu0
        %v3757 = vadd.f32 %v2891, %v3756
        %v3758 = vpop.f32.mrb[0].mxu0
        %v3759 = vadd.f32 %v2895, %v3758
        %3760 = vmatprep.mubr.bf16.mxu0 %v2864
        %3761 = vmatmul.mubr.bf16.gmra.mrb[0].mxu0 %v2863
        %v3762 = vpop.f32.mrb[0].mxu0
        %v3763 = vadd.f32 %v2891, %v3762
        %v3764 = vpop.f32.mrb[0].mxu0
        %v3765 = vadd.f32 %v2895, %v3764
        %v3766 = vpop.f32.mrb[0].mxu0
        %v3767 = vadd.f32 %v2891, %v3766
        %v3768 = vpop.f32.mrb[0].mxu0
        %v3769 = vadd.f32 %v2895, %v3768
        %3770 = vmatprep.mubr.bf16.mxu0 %v2868
        %3771 = vmatmul.mubr.bf16.gmra.mrb[0].mxu0 %v2867
        %v3772 = vpop.f32.mrb[0].mxu0
        %v3773 = vadd.f32 %v2891, %v3772
        %v3774 = vpop.f32.mrb[0].mxu0
        %v3775 = vadd.f32 %v2895, %v3774
        %v3776 = vpop.f32.mrb[0].mxu0
        %v3777 = vadd.f32 %v2891, %v3776
        %v3778 = vpop.f32.mrb[0].mxu0
        %v3779 = vadd.f32 %v2895, %v3778
        %3780 = vmatprep.mubr.bf16.mxu0 %v2872
        %3781 = vmatmul.mubr.bf16.gmra.mrb[0].mxu0 %v2871
        %v3782 = vpop.f32.mrb[0].mxu0
        %v3783 = vadd.f32 %v2891, %v3782
        %v3784 = vpop.f32.mrb[0].mxu0
        %v3785 = vadd.f32 %v2895, %v3784
        %v3786 = vpop.f32.mrb[0].mxu0
        %v3787 = vadd.f32 %v2891, %v3786
        %v3788 = vpop.f32.mrb[0].mxu0
        %v3789 = vadd.f32 %v2895, %v3788
        %3790 = vmatprep.mubr.bf16.mxu0 %v2876
        %3791 = vmatmul.mubr.bf16.gmra.mrb[0].mxu0 %v2875
        %v3792 = vpop.f32.mrb[0].mxu0
        %v3793 = vadd.f32 %v2891, %v3792
        %v3794 = vpop.f32.mrb[0].mxu0
        %v3795 = vadd.f32 %v2895, %v3794
        %v3796 = vpop.f32.mrb[0].mxu0
        %v3797 = vadd.f32 %v2891, %v3796
        %v3798 = vpop.f32.mrb[0].mxu0
        %v3799 = vadd.f32 %v2895, %v3798
        %3800 = vmatprep.mubr.bf16.mxu0 %v2880
        %3801 = vmatmul.mubr.bf16.gmra.mrb[0].mxu0 %v2879
        %v3802 = vpop.f32.mrb[0].mxu0
        %v3803 = vadd.f32 %v2891, %v3802
        %v3804 = vpop.f32.mrb[0].mxu0
        %v3805 = vadd.f32 %v2895, %v3804
        %v3806 = vpop.f32.mrb[0].mxu0
        %v3807 = vadd.f32 %v2891, %v3806
        %v3808 = vpop.f32.mrb[0].mxu0
        %v3809 = vadd.f32 %v2895, %v3808
        %3810 = vmatprep.mubr.bf16.mxu0 %v2884
        %3811 = vmatmul.mubr.bf16.gmra.mrb[0].mxu0 %v2883
        %v3812 = vpop.f32.mrb[0].mxu0
        %v3813 = vadd.f32 %v2891, %v3812
        %v3814 = vpop.f32.mrb[0].mxu0
        %v3815 = vadd.f32 %v2895, %v3814
        %v3816 = vpop.f32.mrb[0].mxu0
        %v3817 = vadd.f32 %v2891, %v3816
        %v3818 = vpop.f32.mrb[0].mxu0
        %v3819 = vadd.f32 %v2895, %v3818
        %3820 = vdwg.mxu0
        %3821 = vmatprep.subr.bf16.mxu0 %v3357
        %3822 = vmatpush1.bf16.msra.mxu0 %v3356
        %3823 = vmatprep.subr.bf16.mxu0 %v3361
        %3824 = vmatpush1.bf16.msra.mxu0 %v3360
        %3825 = vmatprep.subr.bf16.mxu0 %v3365
        %3826 = vmatpush1.bf16.msra.mxu0 %v3364
        %3827 = vmatprep.subr.bf16.mxu0 %v3369
        %3828 = vmatpush1.bf16.msra.mxu0 %v3368
        %3829 = vmatprep.subr.bf16.mxu0 %v3373
        %3830 = vmatpush1.bf16.msra.mxu0 %v3372
        %3831 = vmatprep.subr.bf16.mxu0 %v3377
        %3832 = vmatpush1.bf16.msra.mxu0 %v3376
        %3833 = vmatprep.subr.bf16.mxu0 %v3381
        %3834 = vmatpush1.bf16.msra.mxu0 %v3380
        %3835 = vmatprep.subr.bf16.mxu0 %v3385
        %3836 = vmatpush1.bf16.msra.mxu0 %v3384
        %3837 = vmatprep.subr.bf16.mxu0 %v3389
        %3838 = vmatpush1.bf16.msra.mxu0 %v3388
        %3839 = vmatprep.subr.bf16.mxu0 %v3393
        %3840 = vmatpush1.bf16.msra.mxu0 %v3392
        %3841 = vmatprep.subr.bf16.mxu0 %v3397
        %3842 = vmatpush1.bf16.msra.mxu0 %v3396
        %3843 = vmatprep.subr.bf16.mxu0 %v3401
        %3844 = vmatpush1.bf16.msra.mxu0 %v3400
        %3845 = vmatprep.subr.bf16.mxu0 %v3405
        %3846 = vmatpush1.bf16.msra.mxu0 %v3404
        %3847 = vmatprep.subr.bf16.mxu0 %v3409
        %3848 = vmatpush1.bf16.msra.mxu0 %v3408
        %3849 = vmatprep.subr.bf16.mxu0 %v3413
        %3850 = vmatpush1.bf16.msra.mxu0 %v3412
        %3851 = vmatprep.subr.bf16.mxu0 %v3417
        %3852 = vmatpush1.bf16.msra.mxu0 %v3416
        %3853 = vmatprep.mubr.bf16.mxu0 %v2794
        %3854 = vmatmul.mubr.bf16.gmra.mrb[0].mxu0 %v2793
        %v3855 = vpop.f32.mrb[0].mxu0
        %v3856 = vadd.f32 %v3583, %v3855
        %v3857 = vpop.f32.mrb[0].mxu0
        %v3858 = vadd.f32 %v3585, %v3857
        %v3859 = vpop.f32.mrb[0].mxu0
        %v3860 = vadd.f32 %v3587, %v3859
        %v3861 = vpop.f32.mrb[0].mxu0
        %v3862 = vadd.f32 %v3589, %v3861
        %3863 = vmatprep.mubr.bf16.mxu0 %v2798
        %3864 = vmatmul.mubr.bf16.gmra.mrb[0].mxu0 %v2797
        %v3865 = vpop.f32.mrb[0].mxu0
        %v3866 = vadd.f32 %v3593, %v3865
        %v3867 = vpop.f32.mrb[0].mxu0
        %v3868 = vadd.f32 %v3595, %v3867
        %v3869 = vpop.f32.mrb[0].mxu0
        %v3870 = vadd.f32 %v3597, %v3869
        %v3871 = vpop.f32.mrb[0].mxu0
        %v3872 = vadd.f32 %v3599, %v3871
        %3873 = vmatprep.mubr.bf16.mxu0 %v2802
        %3874 = vmatmul.mubr.bf16.gmra.mrb[0].mxu0 %v2801
        %v3875 = vpop.f32.mrb[0].mxu0
        %v3876 = vadd.f32 %v3603, %v3875
        %v3877 = vpop.f32.mrb[0].mxu0
        %v3878 = vadd.f32 %v3605, %v3877
        %v3879 = vpop.f32.mrb[0].mxu0
        %v3880 = vadd.f32 %v3607, %v3879
        %v3881 = vpop.f32.mrb[0].mxu0
        %v3882 = vadd.f32 %v3609, %v3881
        %3883 = vmatprep.mubr.bf16.mxu0 %v2806
        %3884 = vmatmul.mubr.bf16.gmra.mrb[0].mxu0 %v2805
        %v3885 = vpop.f32.mrb[0].mxu0
        %v3886 = vadd.f32 %v3613, %v3885
        %v3887 = vpop.f32.mrb[0].mxu0
        %v3888 = vadd.f32 %v3615, %v3887
        %v3889 = vpop.f32.mrb[0].mxu0
        %v3890 = vadd.f32 %v3617, %v3889
        %v3891 = vpop.f32.mrb[0].mxu0
        %v3892 = vadd.f32 %v3619, %v3891
        %3893 = vmatprep.mubr.bf16.mxu0 %v2810
        %3894 = vmatmul.mubr.bf16.gmra.mrb[0].mxu0 %v2809
        %v3895 = vpop.f32.mrb[0].mxu0
        %v3896 = vadd.f32 %v3623, %v3895
        %v3897 = vpop.f32.mrb[0].mxu0
        %v3898 = vadd.f32 %v3625, %v3897
        %v3899 = vpop.f32.mrb[0].mxu0
        %v3900 = vadd.f32 %v3627, %v3899
        %v3901 = vpop.f32.mrb[0].mxu0
        %v3902 = vadd.f32 %v3629, %v3901
        %3903 = vmatprep.mubr.bf16.mxu0 %v2814
        %3904 = vmatmul.mubr.bf16.gmra.mrb[0].mxu0 %v2813
        %v3905 = vpop.f32.mrb[0].mxu0
        %v3906 = vadd.f32 %v3633, %v3905
        %v3907 = vpop.f32.mrb[0].mxu0
        %v3908 = vadd.f32 %v3635, %v3907
        %v3909 = vpop.f32.mrb[0].mxu0
        %v3910 = vadd.f32 %v3637, %v3909
        %v3911 = vpop.f32.mrb[0].mxu0
        %v3912 = vadd.f32 %v3639, %v3911
        %3913 = vmatprep.mubr.bf16.mxu0 %v2818
        %3914 = vmatmul.mubr.bf16.gmra.mrb[0].mxu0 %v2817
        %v3915 = vpop.f32.mrb[0].mxu0
        %v3916 = vadd.f32 %v3643, %v3915
        %v3917 = vpop.f32.mrb[0].mxu0
        %v3918 = vadd.f32 %v3645, %v3917
        %v3919 = vpop.f32.mrb[0].mxu0
        %v3920 = vadd.f32 %v3647, %v3919
        %v3921 = vpop.f32.mrb[0].mxu0
        %v3922 = vadd.f32 %v3649, %v3921
        %3923 = vmatprep.mubr.bf16.mxu0 %v2822
        %3924 = vmatmul.mubr.bf16.gmra.mrb[0].mxu0 %v2821
        %v3925 = vpop.f32.mrb[0].mxu0
        %v3926 = vadd.f32 %v3653, %v3925
        %v3927 = vpop.f32.mrb[0].mxu0
        %v3928 = vadd.f32 %v3655, %v3927
        %v3929 = vpop.f32.mrb[0].mxu0
        %v3930 = vadd.f32 %v3657, %v3929
        %v3931 = vpop.f32.mrb[0].mxu0
        %v3932 = vadd.f32 %v3659, %v3931
        %3933 = vmatprep.mubr.bf16.mxu0 %v2826
        %3934 = vmatmul.mubr.bf16.gmra.mrb[0].mxu0 %v2825
        %v3935 = vpop.f32.mrb[0].mxu0
        %v3936 = vadd.f32 %v3663, %v3935
        %v3937 = vpop.f32.mrb[0].mxu0
        %v3938 = vadd.f32 %v3665, %v3937
        %v3939 = vpop.f32.mrb[0].mxu0
        %v3940 = vadd.f32 %v3667, %v3939
        %v3941 = vpop.f32.mrb[0].mxu0
        %v3942 = vadd.f32 %v3669, %v3941
        %3943 = vmatprep.mubr.bf16.mxu0 %v2830
        %3944 = vmatmul.mubr.bf16.gmra.mrb[0].mxu0 %v2829
        %v3945 = vpop.f32.mrb[0].mxu0
        %v3946 = vadd.f32 %v3673, %v3945
        %v3947 = vpop.f32.mrb[0].mxu0
        %v3948 = vadd.f32 %v3675, %v3947
        %v3949 = vpop.f32.mrb[0].mxu0
        %v3950 = vadd.f32 %v3677, %v3949
        %v3951 = vpop.f32.mrb[0].mxu0
        %v3952 = vadd.f32 %v3679, %v3951
        %3953 = vmatprep.mubr.bf16.mxu0 %v2834
        %3954 = vmatmul.mubr.bf16.gmra.mrb[0].mxu0 %v2833
        %v3955 = vpop.f32.mrb[0].mxu0
        %v3956 = vadd.f32 %v3683, %v3955
        %v3957 = vpop.f32.mrb[0].mxu0
        %v3958 = vadd.f32 %v3685, %v3957
        %v3959 = vpop.f32.mrb[0].mxu0
        %v3960 = vadd.f32 %v3687, %v3959
        %v3961 = vpop.f32.mrb[0].mxu0
        %v3962 = vadd.f32 %v3689, %v3961
        %3963 = vmatprep.mubr.bf16.mxu0 %v2838
        %3964 = vmatmul.mubr.bf16.gmra.mrb[0].mxu0 %v2837
        %v3965 = vpop.f32.mrb[0].mxu0
        %v3966 = vadd.f32 %v3693, %v3965
        %v3967 = vpop.f32.mrb[0].mxu0
        %v3968 = vadd.f32 %v3695, %v3967
        %v3969 = vpop.f32.mrb[0].mxu0
        %v3970 = vadd.f32 %v3697, %v3969
        %v3971 = vpop.f32.mrb[0].mxu0
        %v3972 = vadd.f32 %v3699, %v3971
        %3973 = vmatprep.mubr.bf16.mxu0 %v2842
        %3974 = vmatmul.mubr.bf16.gmra.mrb[0].mxu0 %v2841
        %v3975 = vpop.f32.mrb[0].mxu0
        %v3976 = vadd.f32 %v3703, %v3975
        %v3977 = vpop.f32.mrb[0].mxu0
        %v3978 = vadd.f32 %v3705, %v3977
        %v3979 = vpop.f32.mrb[0].mxu0
        %v3980 = vadd.f32 %v3707, %v3979
        %v3981 = vpop.f32.mrb[0].mxu0
        %v3982 = vadd.f32 %v3709, %v3981
        %3983 = vmatprep.mubr.bf16.mxu0 %v2846
        %3984 = vmatmul.mubr.bf16.gmra.mrb[0].mxu0 %v2845
        %v3985 = vpop.f32.mrb[0].mxu0
        %v3986 = vadd.f32 %v3713, %v3985
        %v3987 = vpop.f32.mrb[0].mxu0
        %v3988 = vadd.f32 %v3715, %v3987
        %v3989 = vpop.f32.mrb[0].mxu0
        %v3990 = vadd.f32 %v3717, %v3989
        %v3991 = vpop.f32.mrb[0].mxu0
        %v3992 = vadd.f32 %v3719, %v3991
        %3993 = vmatprep.mubr.bf16.mxu0 %v2850
        %3994 = vmatmul.mubr.bf16.gmra.mrb[0].mxu0 %v2849
        %v3995 = vpop.f32.mrb[0].mxu0
        %v3996 = vadd.f32 %v3723, %v3995
        %v3997 = vpop.f32.mrb[0].mxu0
        %v3998 = vadd.f32 %v3725, %v3997
        %v3999 = vpop.f32.mrb[0].mxu0
        %v4000 = vadd.f32 %v3727, %v3999
        %v4001 = vpop.f32.mrb[0].mxu0
        %v4002 = vadd.f32 %v3729, %v4001
        %4003 = vmatprep.mubr.bf16.mxu0 %v2854
        %4004 = vmatmul.mubr.bf16.gmra.mrb[0].mxu0 %v2853
        %v4005 = vpop.f32.mrb[0].mxu0
        %v4006 = vadd.f32 %v3733, %v4005
        %v4007 = vpop.f32.mrb[0].mxu0
        %v4008 = vadd.f32 %v3735, %v4007
        %v4009 = vpop.f32.mrb[0].mxu0
        %v4010 = vadd.f32 %v3737, %v4009
        %v4011 = vpop.f32.mrb[0].mxu0
        %v4012 = vadd.f32 %v3739, %v4011
        %4013 = vmatprep.mubr.bf16.mxu0 %v2858
        %4014 = vmatmul.mubr.bf16.gmra.mrb[0].mxu0 %v2857
        %v4015 = vpop.f32.mrb[0].mxu0
        %v4016 = vadd.f32 %v3743, %v4015
        %v4017 = vpop.f32.mrb[0].mxu0
        %v4018 = vadd.f32 %v3745, %v4017
        %v4019 = vpop.f32.mrb[0].mxu0
        %v4020 = vadd.f32 %v3747, %v4019
        %v4021 = vpop.f32.mrb[0].mxu0
        %v4022 = vadd.f32 %v3749, %v4021
        %4023 = vmatprep.mubr.bf16.mxu0 %v2862
        %4024 = vmatmul.mubr.bf16.gmra.mrb[0].mxu0 %v2861
        %v4025 = vpop.f32.mrb[0].mxu0
        %v4026 = vadd.f32 %v3753, %v4025
        %v4027 = vpop.f32.mrb[0].mxu0
        %v4028 = vadd.f32 %v3755, %v4027
        %v4029 = vpop.f32.mrb[0].mxu0
        %v4030 = vadd.f32 %v3757, %v4029
        %v4031 = vpop.f32.mrb[0].mxu0
        %v4032 = vadd.f32 %v3759, %v4031
        %4033 = vmatprep.mubr.bf16.mxu0 %v2866
        %4034 = vmatmul.mubr.bf16.gmra.mrb[0].mxu0 %v2865
        %v4035 = vpop.f32.mrb[0].mxu0
        %v4036 = vadd.f32 %v3763, %v4035
        %v4037 = vpop.f32.mrb[0].mxu0
        %v4038 = vadd.f32 %v3765, %v4037
        %v4039 = vpop.f32.mrb[0].mxu0
        %v4040 = vadd.f32 %v3767, %v4039
        %v4041 = vpop.f32.mrb[0].mxu0
        %v4042 = vadd.f32 %v3769, %v4041
        %4043 = vmatprep.mubr.bf16.mxu0 %v2870
        %4044 = vmatmul.mubr.bf16.gmra.mrb[0].mxu0 %v2869
        %v4045 = vpop.f32.mrb[0].mxu0
        %v4046 = vadd.f32 %v3773, %v4045
        %v4047 = vpop.f32.mrb[0].mxu0
        %v4048 = vadd.f32 %v3775, %v4047
        %v4049 = vpop.f32.mrb[0].mxu0
        %v4050 = vadd.f32 %v3777, %v4049
        %v4051 = vpop.f32.mrb[0].mxu0
        %v4052 = vadd.f32 %v3779, %v4051
        %4053 = vmatprep.mubr.bf16.mxu0 %v2874
        %4054 = vmatmul.mubr.bf16.gmra.mrb[0].mxu0 %v2873
        %v4055 = vpop.f32.mrb[0].mxu0
        %v4056 = vadd.f32 %v3783, %v4055
        %v4057 = vpop.f32.mrb[0].mxu0
        %v4058 = vadd.f32 %v3785, %v4057
        %v4059 = vpop.f32.mrb[0].mxu0
        %v4060 = vadd.f32 %v3787, %v4059
        %v4061 = vpop.f32.mrb[0].mxu0
        %v4062 = vadd.f32 %v3789, %v4061
        %4063 = vmatprep.mubr.bf16.mxu0 %v2878
        %4064 = vmatmul.mubr.bf16.gmra.mrb[0].mxu0 %v2877
        %v4065 = vpop.f32.mrb[0].mxu0
        %v4066 = vadd.f32 %v3793, %v4065
        %v4067 = vpop.f32.mrb[0].mxu0
        %v4068 = vadd.f32 %v3795, %v4067
        %v4069 = vpop.f32.mrb[0].mxu0
        %v4070 = vadd.f32 %v3797, %v4069
        %v4071 = vpop.f32.mrb[0].mxu0
        %v4072 = vadd.f32 %v3799, %v4071
        %4073 = vmatprep.mubr.bf16.mxu0 %v2882
        %4074 = vmatmul.mubr.bf16.gmra.mrb[0].mxu0 %v2881
        %v4075 = vpop.f32.mrb[0].mxu0
        %v4076 = vadd.f32 %v3803, %v4075
        %v4077 = vpop.f32.mrb[0].mxu0
        %v4078 = vadd.f32 %v3805, %v4077
        %v4079 = vpop.f32.mrb[0].mxu0
        %v4080 = vadd.f32 %v3807, %v4079
        %v4081 = vpop.f32.mrb[0].mxu0
        %v4082 = vadd.f32 %v3809, %v4081
        %4083 = vmatprep.mubr.bf16.mxu0 %v2886
        %4084 = vmatmul.mubr.bf16.gmra.mrb[0].mxu0 %v2885
        %v4085 = vpop.f32.mrb[0].mxu0
        %v4086 = vadd.f32 %v3813, %v4085
        %v4087 = vpop.f32.mrb[0].mxu0
        %v4088 = vadd.f32 %v3815, %v4087
        %v4089 = vpop.f32.mrb[0].mxu0
        %v4090 = vadd.f32 %v3817, %v4089
        %v4091 = vpop.f32.mrb[0].mxu0
        %v4092 = vadd.f32 %v3819, %v4091
        %4093 = vdwg.mxu0
        %4094 = vmatprep.subr.bf16.mxu0 %v3295
        %4095 = vmatpush1.bf16.msra.mxu0 %v3294
        %4096 = vmatprep.subr.bf16.mxu0 %v3299
        %4097 = vmatpush1.bf16.msra.mxu0 %v3298
        %4098 = vmatprep.subr.bf16.mxu0 %v3303
        %4099 = vmatpush1.bf16.msra.mxu0 %v3302
        %4100 = vmatprep.subr.bf16.mxu0 %v3307
        %4101 = vmatpush1.bf16.msra.mxu0 %v3306
        %4102 = vmatprep.subr.bf16.mxu0 %v3311
        %4103 = vmatpush1.bf16.msra.mxu0 %v3310
        %4104 = vmatprep.subr.bf16.mxu0 %v3315
        %4105 = vmatpush1.bf16.msra.mxu0 %v3314
        %4106 = vmatprep.subr.bf16.mxu0 %v3319
        %4107 = vmatpush1.bf16.msra.mxu0 %v3318
        %4108 = vmatprep.subr.bf16.mxu0 %v3323
        %4109 = vmatpush1.bf16.msra.mxu0 %v3322
        %4110 = vmatprep.subr.bf16.mxu0 %v3327
        %4111 = vmatpush1.bf16.msra.mxu0 %v3326
        %4112 = vmatprep.subr.bf16.mxu0 %v3331
        %4113 = vmatpush1.bf16.msra.mxu0 %v3330
        %4114 = vmatprep.subr.bf16.mxu0 %v3335
        %4115 = vmatpush1.bf16.msra.mxu0 %v3334
        %4116 = vmatprep.subr.bf16.mxu0 %v3339
        %4117 = vmatpush1.bf16.msra.mxu0 %v3338
        %4118 = vmatprep.subr.bf16.mxu0 %v3343
        %4119 = vmatpush1.bf16.msra.mxu0 %v3342
        %4120 = vmatprep.subr.bf16.mxu0 %v3347
        %4121 = vmatpush1.bf16.msra.mxu0 %v3346
        %4122 = vmatprep.subr.bf16.mxu0 %v3351
        %4123 = vmatpush1.bf16.msra.mxu0 %v3350
        %4124 = vmatprep.subr.bf16.mxu0 %v3355
        %4125 = vmatpush1.bf16.msra.mxu0 %v3354
        %4126 = vmatprep.mubr.bf16.mxu0 %v2792
        %4127 = vmatmul.mubr.bf16.gmra.mrb[0].mxu0 %v2791
        %v4128 = vpop.f32.mrb[0].mxu0
        %v4129 = vadd.f32 %v2899, %v4128
        %v4130 = vpop.f32.mrb[0].mxu0
        %v4131 = vadd.f32 %v2903, %v4130
        %v4132 = vpop.f32.mrb[0].mxu0
        %v4133 = vadd.f32 %v2899, %v4132
        %v4134 = vpop.f32.mrb[0].mxu0
        %v4135 = vadd.f32 %v2903, %v4134
        %4136 = vmatprep.mubr.bf16.mxu0 %v2796
        %4137 = vmatmul.mubr.bf16.gmra.mrb[0].mxu0 %v2795
        %v4138 = vpop.f32.mrb[0].mxu0
        %v4139 = vadd.f32 %v2899, %v4138
        %v4140 = vpop.f32.mrb[0].mxu0
        %v4141 = vadd.f32 %v2903, %v4140
        %v4142 = vpop.f32.mrb[0].mxu0
        %v4143 = vadd.f32 %v2899, %v4142
        %v4144 = vpop.f32.mrb[0].mxu0
        %v4145 = vadd.f32 %v2903, %v4144
        %4146 = vmatprep.mubr.bf16.mxu0 %v2800
        %4147 = vmatmul.mubr.bf16.gmra.mrb[0].mxu0 %v2799
        %v4148 = vpop.f32.mrb[0].mxu0
        %v4149 = vadd.f32 %v2899, %v4148
        %v4150 = vpop.f32.mrb[0].mxu0
        %v4151 = vadd.f32 %v2903, %v4150
        %v4152 = vpop.f32.mrb[0].mxu0
        %v4153 = vadd.f32 %v2899, %v4152
        %v4154 = vpop.f32.mrb[0].mxu0
        %v4155 = vadd.f32 %v2903, %v4154
        %4156 = vmatprep.mubr.bf16.mxu0 %v2804
        %4157 = vmatmul.mubr.bf16.gmra.mrb[0].mxu0 %v2803
        %v4158 = vpop.f32.mrb[0].mxu0
        %v4159 = vadd.f32 %v2899, %v4158
        %v4160 = vpop.f32.mrb[0].mxu0
        %v4161 = vadd.f32 %v2903, %v4160
        %v4162 = vpop.f32.mrb[0].mxu0
        %v4163 = vadd.f32 %v2899, %v4162
        %v4164 = vpop.f32.mrb[0].mxu0
        %v4165 = vadd.f32 %v2903, %v4164
        %4166 = vmatprep.mubr.bf16.mxu0 %v2808
        %4167 = vmatmul.mubr.bf16.gmra.mrb[0].mxu0 %v2807
        %v4168 = vpop.f32.mrb[0].mxu0
        %v4169 = vadd.f32 %v2899, %v4168
        %v4170 = vpop.f32.mrb[0].mxu0
        %v4171 = vadd.f32 %v2903, %v4170
        %v4172 = vpop.f32.mrb[0].mxu0
        %v4173 = vadd.f32 %v2899, %v4172
        %v4174 = vpop.f32.mrb[0].mxu0
        %v4175 = vadd.f32 %v2903, %v4174
        %4176 = vmatprep.mubr.bf16.mxu0 %v2812
        %4177 = vmatmul.mubr.bf16.gmra.mrb[0].mxu0 %v2811
        %v4178 = vpop.f32.mrb[0].mxu0
        %v4179 = vadd.f32 %v2899, %v4178
        %v4180 = vpop.f32.mrb[0].mxu0
        %v4181 = vadd.f32 %v2903, %v4180
        %v4182 = vpop.f32.mrb[0].mxu0
        %v4183 = vadd.f32 %v2899, %v4182
        %v4184 = vpop.f32.mrb[0].mxu0
        %v4185 = vadd.f32 %v2903, %v4184
        %4186 = vmatprep.mubr.bf16.mxu0 %v2816
        %4187 = vmatmul.mubr.bf16.gmra.mrb[0].mxu0 %v2815
        %v4188 = vpop.f32.mrb[0].mxu0
        %v4189 = vadd.f32 %v2899, %v4188
        %v4190 = vpop.f32.mrb[0].mxu0
        %v4191 = vadd.f32 %v2903, %v4190
        %v4192 = vpop.f32.mrb[0].mxu0
        %v4193 = vadd.f32 %v2899, %v4192
        %v4194 = vpop.f32.mrb[0].mxu0
        %v4195 = vadd.f32 %v2903, %v4194
        %4196 = vmatprep.mubr.bf16.mxu0 %v2820
        %4197 = vmatmul.mubr.bf16.gmra.mrb[0].mxu0 %v2819
        %v4198 = vpop.f32.mrb[0].mxu0
        %v4199 = vadd.f32 %v2899, %v4198
        %v4200 = vpop.f32.mrb[0].mxu0
        %v4201 = vadd.f32 %v2903, %v4200
        %v4202 = vpop.f32.mrb[0].mxu0
        %v4203 = vadd.f32 %v2899, %v4202
        %v4204 = vpop.f32.mrb[0].mxu0
        %v4205 = vadd.f32 %v2903, %v4204
        %4206 = vmatprep.mubr.bf16.mxu0 %v2824
        %4207 = vmatmul.mubr.bf16.gmra.mrb[0].mxu0 %v2823
        %v4208 = vpop.f32.mrb[0].mxu0
        %v4209 = vadd.f32 %v2899, %v4208
        %v4210 = vpop.f32.mrb[0].mxu0
        %v4211 = vadd.f32 %v2903, %v4210
        %v4212 = vpop.f32.mrb[0].mxu0
        %v4213 = vadd.f32 %v2899, %v4212
        %v4214 = vpop.f32.mrb[0].mxu0
        %v4215 = vadd.f32 %v2903, %v4214
        %4216 = vmatprep.mubr.bf16.mxu0 %v2828
        %4217 = vmatmul.mubr.bf16.gmra.mrb[0].mxu0 %v2827
        %v4218 = vpop.f32.mrb[0].mxu0
        %v4219 = vadd.f32 %v2899, %v4218
        %v4220 = vpop.f32.mrb[0].mxu0
        %v4221 = vadd.f32 %v2903, %v4220
        %v4222 = vpop.f32.mrb[0].mxu0
        %v4223 = vadd.f32 %v2899, %v4222
        %v4224 = vpop.f32.mrb[0].mxu0
        %v4225 = vadd.f32 %v2903, %v4224
        %4226 = vmatprep.mubr.bf16.mxu0 %v2832
        %4227 = vmatmul.mubr.bf16.gmra.mrb[0].mxu0 %v2831
        %v4228 = vpop.f32.mrb[0].mxu0
        %v4229 = vadd.f32 %v2899, %v4228
        %v4230 = vpop.f32.mrb[0].mxu0
        %v4231 = vadd.f32 %v2903, %v4230
        %v4232 = vpop.f32.mrb[0].mxu0
        %v4233 = vadd.f32 %v2899, %v4232
        %v4234 = vpop.f32.mrb[0].mxu0
        %v4235 = vadd.f32 %v2903, %v4234
        %4236 = vmatprep.mubr.bf16.mxu0 %v2836
        %4237 = vmatmul.mubr.bf16.gmra.mrb[0].mxu0 %v2835
        %v4238 = vpop.f32.mrb[0].mxu0
        %v4239 = vadd.f32 %v2899, %v4238
        %v4240 = vpop.f32.mrb[0].mxu0
        %v4241 = vadd.f32 %v2903, %v4240
        %v4242 = vpop.f32.mrb[0].mxu0
        %v4243 = vadd.f32 %v2899, %v4242
        %v4244 = vpop.f32.mrb[0].mxu0
        %v4245 = vadd.f32 %v2903, %v4244
        %4246 = vmatprep.mubr.bf16.mxu0 %v2840
        %4247 = vmatmul.mubr.bf16.gmra.mrb[0].mxu0 %v2839
        %v4248 = vpop.f32.mrb[0].mxu0
        %v4249 = vadd.f32 %v2899, %v4248
        %v4250 = vpop.f32.mrb[0].mxu0
        %v4251 = vadd.f32 %v2903, %v4250
        %v4252 = vpop.f32.mrb[0].mxu0
        %v4253 = vadd.f32 %v2899, %v4252
        %v4254 = vpop.f32.mrb[0].mxu0
        %v4255 = vadd.f32 %v2903, %v4254
        %4256 = vmatprep.mubr.bf16.mxu0 %v2844
        %4257 = vmatmul.mubr.bf16.gmra.mrb[0].mxu0 %v2843
        %v4258 = vpop.f32.mrb[0].mxu0
        %v4259 = vadd.f32 %v2899, %v4258
        %v4260 = vpop.f32.mrb[0].mxu0
        %v4261 = vadd.f32 %v2903, %v4260
        %v4262 = vpop.f32.mrb[0].mxu0
        %v4263 = vadd.f32 %v2899, %v4262
        %v4264 = vpop.f32.mrb[0].mxu0
        %v4265 = vadd.f32 %v2903, %v4264
        %4266 = vmatprep.mubr.bf16.mxu0 %v2848
        %4267 = vmatmul.mubr.bf16.gmra.mrb[0].mxu0 %v2847
        %v4268 = vpop.f32.mrb[0].mxu0
        %v4269 = vadd.f32 %v2899, %v4268
        %v4270 = vpop.f32.mrb[0].mxu0
        %v4271 = vadd.f32 %v2903, %v4270
        %v4272 = vpop.f32.mrb[0].mxu0
        %v4273 = vadd.f32 %v2899, %v4272
        %v4274 = vpop.f32.mrb[0].mxu0
        %v4275 = vadd.f32 %v2903, %v4274
        %4276 = vmatprep.mubr.bf16.mxu0 %v2852
        %4277 = vmatmul.mubr.bf16.gmra.mrb[0].mxu0 %v2851
        %v4278 = vpop.f32.mrb[0].mxu0
        %v4279 = vadd.f32 %v2899, %v4278
        %v4280 = vpop.f32.mrb[0].mxu0
        %v4281 = vadd.f32 %v2903, %v4280
        %v4282 = vpop.f32.mrb[0].mxu0
        %v4283 = vadd.f32 %v2899, %v4282
        %v4284 = vpop.f32.mrb[0].mxu0
        %v4285 = vadd.f32 %v2903, %v4284
        %4286 = vmatprep.mubr.bf16.mxu0 %v2856
        %4287 = vmatmul.mubr.bf16.gmra.mrb[0].mxu0 %v2855
        %v4288 = vpop.f32.mrb[0].mxu0
        %v4289 = vadd.f32 %v2899, %v4288
        %v4290 = vpop.f32.mrb[0].mxu0
        %v4291 = vadd.f32 %v2903, %v4290
        %v4292 = vpop.f32.mrb[0].mxu0
        %v4293 = vadd.f32 %v2899, %v4292
        %v4294 = vpop.f32.mrb[0].mxu0
        %v4295 = vadd.f32 %v2903, %v4294
        %4296 = vmatprep.mubr.bf16.mxu0 %v2860
        %4297 = vmatmul.mubr.bf16.gmra.mrb[0].mxu0 %v2859
        %v4298 = vpop.f32.mrb[0].mxu0
        %v4299 = vadd.f32 %v2899, %v4298
        %v4300 = vpop.f32.mrb[0].mxu0
        %v4301 = vadd.f32 %v2903, %v4300
        %v4302 = vpop.f32.mrb[0].mxu0
        %v4303 = vadd.f32 %v2899, %v4302
        %v4304 = vpop.f32.mrb[0].mxu0
        %v4305 = vadd.f32 %v2903, %v4304
        %4306 = vmatprep.mubr.bf16.mxu0 %v2864
        %4307 = vmatmul.mubr.bf16.gmra.mrb[0].mxu0 %v2863
        %v4308 = vpop.f32.mrb[0].mxu0
        %v4309 = vadd.f32 %v2899, %v4308
        %v4310 = vpop.f32.mrb[0].mxu0
        %v4311 = vadd.f32 %v2903, %v4310
        %v4312 = vpop.f32.mrb[0].mxu0
        %v4313 = vadd.f32 %v2899, %v4312
        %v4314 = vpop.f32.mrb[0].mxu0
        %v4315 = vadd.f32 %v2903, %v4314
        %4316 = vmatprep.mubr.bf16.mxu0 %v2868
        %4317 = vmatmul.mubr.bf16.gmra.mrb[0].mxu0 %v2867
        %v4318 = vpop.f32.mrb[0].mxu0
        %v4319 = vadd.f32 %v2899, %v4318
        %v4320 = vpop.f32.mrb[0].mxu0
        %v4321 = vadd.f32 %v2903, %v4320
        %v4322 = vpop.f32.mrb[0].mxu0
        %v4323 = vadd.f32 %v2899, %v4322
        %v4324 = vpop.f32.mrb[0].mxu0
        %v4325 = vadd.f32 %v2903, %v4324
        %4326 = vmatprep.mubr.bf16.mxu0 %v2872
        %4327 = vmatmul.mubr.bf16.gmra.mrb[0].mxu0 %v2871
        %v4328 = vpop.f32.mrb[0].mxu0
        %v4329 = vadd.f32 %v2899, %v4328
        %v4330 = vpop.f32.mrb[0].mxu0
        %v4331 = vadd.f32 %v2903, %v4330
        %v4332 = vpop.f32.mrb[0].mxu0
        %v4333 = vadd.f32 %v2899, %v4332
        %v4334 = vpop.f32.mrb[0].mxu0
        %v4335 = vadd.f32 %v2903, %v4334
        %4336 = vmatprep.mubr.bf16.mxu0 %v2876
        %4337 = vmatmul.mubr.bf16.gmra.mrb[0].mxu0 %v2875
        %v4338 = vpop.f32.mrb[0].mxu0
        %v4339 = vadd.f32 %v2899, %v4338
        %v4340 = vpop.f32.mrb[0].mxu0
        %v4341 = vadd.f32 %v2903, %v4340
        %v4342 = vpop.f32.mrb[0].mxu0
        %v4343 = vadd.f32 %v2899, %v4342
        %v4344 = vpop.f32.mrb[0].mxu0
        %v4345 = vadd.f32 %v2903, %v4344
        %4346 = vmatprep.mubr.bf16.mxu0 %v2880
        %4347 = vmatmul.mubr.bf16.gmra.mrb[0].mxu0 %v2879
        %v4348 = vpop.f32.mrb[0].mxu0
        %v4349 = vadd.f32 %v2899, %v4348
        %v4350 = vpop.f32.mrb[0].mxu0
        %v4351 = vadd.f32 %v2903, %v4350
        %v4352 = vpop.f32.mrb[0].mxu0
        %v4353 = vadd.f32 %v2899, %v4352
        %v4354 = vpop.f32.mrb[0].mxu0
        %v4355 = vadd.f32 %v2903, %v4354
        %4356 = vmatprep.mubr.bf16.mxu0 %v2884
        %4357 = vmatmul.mubr.bf16.gmra.mrb[0].mxu0 %v2883
        %v4358 = vpop.f32.mrb[0].mxu0
        %v4359 = vadd.f32 %v2899, %v4358
        %v4360 = vpop.f32.mrb[0].mxu0
        %v4361 = vadd.f32 %v2903, %v4360
        %v4362 = vpop.f32.mrb[0].mxu0
        %v4363 = vadd.f32 %v2899, %v4362
        %v4364 = vpop.f32.mrb[0].mxu0
        %v4365 = vadd.f32 %v2903, %v4364
        %4366 = vdwg.mxu0
        %4367 = vmatprep.subr.bf16.mxu0 %v3359
        %4368 = vmatpush1.bf16.msra.mxu0 %v3358
        %4369 = vmatprep.subr.bf16.mxu0 %v3363
        %4370 = vmatpush1.bf16.msra.mxu0 %v3362
        %4371 = vmatprep.subr.bf16.mxu0 %v3367
        %4372 = vmatpush1.bf16.msra.mxu0 %v3366
        %4373 = vmatprep.subr.bf16.mxu0 %v3371
        %4374 = vmatpush1.bf16.msra.mxu0 %v3370
        %4375 = vmatprep.subr.bf16.mxu0 %v3375
        %4376 = vmatpush1.bf16.msra.mxu0 %v3374
        %4377 = vmatprep.subr.bf16.mxu0 %v3379
        %4378 = vmatpush1.bf16.msra.mxu0 %v3378
        %4379 = vmatprep.subr.bf16.mxu0 %v3383
        %4380 = vmatpush1.bf16.msra.mxu0 %v3382
        %4381 = vmatprep.subr.bf16.mxu0 %v3387
        %4382 = vmatpush1.bf16.msra.mxu0 %v3386
        %4383 = vmatprep.subr.bf16.mxu0 %v3391
        %4384 = vmatpush1.bf16.msra.mxu0 %v3390
        %4385 = vmatprep.subr.bf16.mxu0 %v3395
        %4386 = vmatpush1.bf16.msra.mxu0 %v3394
        %4387 = vmatprep.subr.bf16.mxu0 %v3399
        %4388 = vmatpush1.bf16.msra.mxu0 %v3398
        %4389 = vmatprep.subr.bf16.mxu0 %v3403
        %4390 = vmatpush1.bf16.msra.mxu0 %v3402
        %4391 = vmatprep.subr.bf16.mxu0 %v3407
        %4392 = vmatpush1.bf16.msra.mxu0 %v3406
        %4393 = vmatprep.subr.bf16.mxu0 %v3411
        %4394 = vmatpush1.bf16.msra.mxu0 %v3410
        %4395 = vmatprep.subr.bf16.mxu0 %v3415
        %4396 = vmatpush1.bf16.msra.mxu0 %v3414
        %4397 = vmatprep.subr.bf16.mxu0 %v3419
        %4398 = vmatpush1.bf16.msra.mxu0 %v3418
        %4399 = vmatprep.mubr.bf16.mxu0 %v2794
        %4400 = vmatmul.mubr.bf16.gmra.mrb[0].mxu0 %v2793
        %v4401 = vpop.f32.mrb[0].mxu0
        %v4402 = vadd.f32 %v4129, %v4401
        %v4403 = vpop.f32.mrb[0].mxu0
        %v4404 = vadd.f32 %v4131, %v4403
        %v4405 = vpop.f32.mrb[0].mxu0
        %v4406 = vadd.f32 %v4133, %v4405
        %v4407 = vpop.f32.mrb[0].mxu0
        %v4408 = vadd.f32 %v4135, %v4407
        %4409 = vmatprep.mubr.bf16.mxu0 %v2798
        %4410 = vmatmul.mubr.bf16.gmra.mrb[0].mxu0 %v2797
        %v4411 = vpop.f32.mrb[0].mxu0
        %v4412 = vadd.f32 %v4139, %v4411
        %v4413 = vpop.f32.mrb[0].mxu0
        %v4414 = vadd.f32 %v4141, %v4413
        %v4415 = vpop.f32.mrb[0].mxu0
        %v4416 = vadd.f32 %v4143, %v4415
        %v4417 = vpop.f32.mrb[0].mxu0
        %v4418 = vadd.f32 %v4145, %v4417
        %4419 = vmatprep.mubr.bf16.mxu0 %v2802
        %4420 = vmatmul.mubr.bf16.gmra.mrb[0].mxu0 %v2801
        %v4421 = vpop.f32.mrb[0].mxu0
        %v4422 = vadd.f32 %v4149, %v4421
        %v4423 = vpop.f32.mrb[0].mxu0
        %v4424 = vadd.f32 %v4151, %v4423
        %v4425 = vpop.f32.mrb[0].mxu0
        %v4426 = vadd.f32 %v4153, %v4425
        %v4427 = vpop.f32.mrb[0].mxu0
        %v4428 = vadd.f32 %v4155, %v4427
        %4429 = vmatprep.mubr.bf16.mxu0 %v2806
        %4430 = vmatmul.mubr.bf16.gmra.mrb[0].mxu0 %v2805
        %v4431 = vpop.f32.mrb[0].mxu0
        %v4432 = vadd.f32 %v4159, %v4431
        %v4433 = vpop.f32.mrb[0].mxu0
        %v4434 = vadd.f32 %v4161, %v4433
        %v4435 = vpop.f32.mrb[0].mxu0
        %v4436 = vadd.f32 %v4163, %v4435
        %v4437 = vpop.f32.mrb[0].mxu0
        %v4438 = vadd.f32 %v4165, %v4437
        %4439 = vmatprep.mubr.bf16.mxu0 %v2810
        %4440 = vmatmul.mubr.bf16.gmra.mrb[0].mxu0 %v2809
        %v4441 = vpop.f32.mrb[0].mxu0
        %v4442 = vadd.f32 %v4169, %v4441
        %v4443 = vpop.f32.mrb[0].mxu0
        %v4444 = vadd.f32 %v4171, %v4443
        %v4445 = vpop.f32.mrb[0].mxu0
        %v4446 = vadd.f32 %v4173, %v4445
        %v4447 = vpop.f32.mrb[0].mxu0
        %v4448 = vadd.f32 %v4175, %v4447
        %4449 = vmatprep.mubr.bf16.mxu0 %v2814
        %4450 = vmatmul.mubr.bf16.gmra.mrb[0].mxu0 %v2813
        %v4451 = vpop.f32.mrb[0].mxu0
        %v4452 = vadd.f32 %v4179, %v4451
        %v4453 = vpop.f32.mrb[0].mxu0
        %v4454 = vadd.f32 %v4181, %v4453
        %v4455 = vpop.f32.mrb[0].mxu0
        %v4456 = vadd.f32 %v4183, %v4455
        %v4457 = vpop.f32.mrb[0].mxu0
        %v4458 = vadd.f32 %v4185, %v4457
        %4459 = vmatprep.mubr.bf16.mxu0 %v2818
        %4460 = vmatmul.mubr.bf16.gmra.mrb[0].mxu0 %v2817
        %v4461 = vpop.f32.mrb[0].mxu0
        %v4462 = vadd.f32 %v4189, %v4461
        %v4463 = vpop.f32.mrb[0].mxu0
        %v4464 = vadd.f32 %v4191, %v4463
        %v4465 = vpop.f32.mrb[0].mxu0
        %v4466 = vadd.f32 %v4193, %v4465
        %v4467 = vpop.f32.mrb[0].mxu0
        %v4468 = vadd.f32 %v4195, %v4467
        %4469 = vmatprep.mubr.bf16.mxu0 %v2822
        %4470 = vmatmul.mubr.bf16.gmra.mrb[0].mxu0 %v2821
        %v4471 = vpop.f32.mrb[0].mxu0
        %v4472 = vadd.f32 %v4199, %v4471
        %v4473 = vpop.f32.mrb[0].mxu0
        %v4474 = vadd.f32 %v4201, %v4473
        %v4475 = vpop.f32.mrb[0].mxu0
        %v4476 = vadd.f32 %v4203, %v4475
        %v4477 = vpop.f32.mrb[0].mxu0
        %v4478 = vadd.f32 %v4205, %v4477
        %4479 = vmatprep.mubr.bf16.mxu0 %v2826
        %4480 = vmatmul.mubr.bf16.gmra.mrb[0].mxu0 %v2825
        %v4481 = vpop.f32.mrb[0].mxu0
        %v4482 = vadd.f32 %v4209, %v4481
        %v4483 = vpop.f32.mrb[0].mxu0
        %v4484 = vadd.f32 %v4211, %v4483
        %v4485 = vpop.f32.mrb[0].mxu0
        %v4486 = vadd.f32 %v4213, %v4485
        %v4487 = vpop.f32.mrb[0].mxu0
        %v4488 = vadd.f32 %v4215, %v4487
        %4489 = vmatprep.mubr.bf16.mxu0 %v2830
        %4490 = vmatmul.mubr.bf16.gmra.mrb[0].mxu0 %v2829
        %v4491 = vpop.f32.mrb[0].mxu0
        %v4492 = vadd.f32 %v4219, %v4491
        %v4493 = vpop.f32.mrb[0].mxu0
        %v4494 = vadd.f32 %v4221, %v4493
        %v4495 = vpop.f32.mrb[0].mxu0
        %v4496 = vadd.f32 %v4223, %v4495
        %v4497 = vpop.f32.mrb[0].mxu0
        %v4498 = vadd.f32 %v4225, %v4497
        %4499 = vmatprep.mubr.bf16.mxu0 %v2834
        %4500 = vmatmul.mubr.bf16.gmra.mrb[0].mxu0 %v2833
        %v4501 = vpop.f32.mrb[0].mxu0
        %v4502 = vadd.f32 %v4229, %v4501
        %v4503 = vpop.f32.mrb[0].mxu0
        %v4504 = vadd.f32 %v4231, %v4503
        %v4505 = vpop.f32.mrb[0].mxu0
        %v4506 = vadd.f32 %v4233, %v4505
        %v4507 = vpop.f32.mrb[0].mxu0
        %v4508 = vadd.f32 %v4235, %v4507
        %4509 = vmatprep.mubr.bf16.mxu0 %v2838
        %4510 = vmatmul.mubr.bf16.gmra.mrb[0].mxu0 %v2837
        %v4511 = vpop.f32.mrb[0].mxu0
        %v4512 = vadd.f32 %v4239, %v4511
        %v4513 = vpop.f32.mrb[0].mxu0
        %v4514 = vadd.f32 %v4241, %v4513
        %v4515 = vpop.f32.mrb[0].mxu0
        %v4516 = vadd.f32 %v4243, %v4515
        %v4517 = vpop.f32.mrb[0].mxu0
        %v4518 = vadd.f32 %v4245, %v4517
        %4519 = vmatprep.mubr.bf16.mxu0 %v2842
        %4520 = vmatmul.mubr.bf16.gmra.mrb[0].mxu0 %v2841
        %v4521 = vpop.f32.mrb[0].mxu0
        %v4522 = vadd.f32 %v4249, %v4521
        %v4523 = vpop.f32.mrb[0].mxu0
        %v4524 = vadd.f32 %v4251, %v4523
        %v4525 = vpop.f32.mrb[0].mxu0
        %v4526 = vadd.f32 %v4253, %v4525
        %v4527 = vpop.f32.mrb[0].mxu0
        %v4528 = vadd.f32 %v4255, %v4527
        %4529 = vmatprep.mubr.bf16.mxu0 %v2846
        %4530 = vmatmul.mubr.bf16.gmra.mrb[0].mxu0 %v2845
        %v4531 = vpop.f32.mrb[0].mxu0
        %v4532 = vadd.f32 %v4259, %v4531
        %v4533 = vpop.f32.mrb[0].mxu0
        %v4534 = vadd.f32 %v4261, %v4533
        %v4535 = vpop.f32.mrb[0].mxu0
        %v4536 = vadd.f32 %v4263, %v4535
        %v4537 = vpop.f32.mrb[0].mxu0
        %v4538 = vadd.f32 %v4265, %v4537
        %4539 = vmatprep.mubr.bf16.mxu0 %v2850
        %4540 = vmatmul.mubr.bf16.gmra.mrb[0].mxu0 %v2849
        %v4541 = vpop.f32.mrb[0].mxu0
        %v4542 = vadd.f32 %v4269, %v4541
        %v4543 = vpop.f32.mrb[0].mxu0
        %v4544 = vadd.f32 %v4271, %v4543
        %v4545 = vpop.f32.mrb[0].mxu0
        %v4546 = vadd.f32 %v4273, %v4545
        %v4547 = vpop.f32.mrb[0].mxu0
        %v4548 = vadd.f32 %v4275, %v4547
        %4549 = vmatprep.mubr.bf16.mxu0 %v2854
        %4550 = vmatmul.mubr.bf16.gmra.mrb[0].mxu0 %v2853
        %v4551 = vpop.f32.mrb[0].mxu0
        %v4552 = vadd.f32 %v4279, %v4551
        %v4553 = vpop.f32.mrb[0].mxu0
        %v4554 = vadd.f32 %v4281, %v4553
        %v4555 = vpop.f32.mrb[0].mxu0
        %v4556 = vadd.f32 %v4283, %v4555
        %v4557 = vpop.f32.mrb[0].mxu0
        %v4558 = vadd.f32 %v4285, %v4557
        %4559 = vmatprep.mubr.bf16.mxu0 %v2858
        %4560 = vmatmul.mubr.bf16.gmra.mrb[0].mxu0 %v2857
        %v4561 = vpop.f32.mrb[0].mxu0
        %v4562 = vadd.f32 %v4289, %v4561
        %v4563 = vpop.f32.mrb[0].mxu0
        %v4564 = vadd.f32 %v4291, %v4563
        %v4565 = vpop.f32.mrb[0].mxu0
        %v4566 = vadd.f32 %v4293, %v4565
        %v4567 = vpop.f32.mrb[0].mxu0
        %v4568 = vadd.f32 %v4295, %v4567
        %4569 = vmatprep.mubr.bf16.mxu0 %v2862
        %4570 = vmatmul.mubr.bf16.gmra.mrb[0].mxu0 %v2861
        %v4571 = vpop.f32.mrb[0].mxu0
        %v4572 = vadd.f32 %v4299, %v4571
        %v4573 = vpop.f32.mrb[0].mxu0
        %v4574 = vadd.f32 %v4301, %v4573
        %v4575 = vpop.f32.mrb[0].mxu0
        %v4576 = vadd.f32 %v4303, %v4575
        %v4577 = vpop.f32.mrb[0].mxu0
        %v4578 = vadd.f32 %v4305, %v4577
        %4579 = vmatprep.mubr.bf16.mxu0 %v2866
        %4580 = vmatmul.mubr.bf16.gmra.mrb[0].mxu0 %v2865
        %v4581 = vpop.f32.mrb[0].mxu0
        %v4582 = vadd.f32 %v4309, %v4581
        %v4583 = vpop.f32.mrb[0].mxu0
        %v4584 = vadd.f32 %v4311, %v4583
        %v4585 = vpop.f32.mrb[0].mxu0
        %v4586 = vadd.f32 %v4313, %v4585
        %v4587 = vpop.f32.mrb[0].mxu0
        %v4588 = vadd.f32 %v4315, %v4587
        %4589 = vmatprep.mubr.bf16.mxu0 %v2870
        %4590 = vmatmul.mubr.bf16.gmra.mrb[0].mxu0 %v2869
        %v4591 = vpop.f32.mrb[0].mxu0
        %v4592 = vadd.f32 %v4319, %v4591
        %v4593 = vpop.f32.mrb[0].mxu0
        %v4594 = vadd.f32 %v4321, %v4593
        %v4595 = vpop.f32.mrb[0].mxu0
        %v4596 = vadd.f32 %v4323, %v4595
        %v4597 = vpop.f32.mrb[0].mxu0
        %v4598 = vadd.f32 %v4325, %v4597
        %4599 = vmatprep.mubr.bf16.mxu0 %v2874
        %4600 = vmatmul.mubr.bf16.gmra.mrb[0].mxu0 %v2873
        %v4601 = vpop.f32.mrb[0].mxu0
        %v4602 = vadd.f32 %v4329, %v4601
        %v4603 = vpop.f32.mrb[0].mxu0
        %v4604 = vadd.f32 %v4331, %v4603
        %v4605 = vpop.f32.mrb[0].mxu0
        %v4606 = vadd.f32 %v4333, %v4605
        %v4607 = vpop.f32.mrb[0].mxu0
        %v4608 = vadd.f32 %v4335, %v4607
        %4609 = vmatprep.mubr.bf16.mxu0 %v2878
        %4610 = vmatmul.mubr.bf16.gmra.mrb[0].mxu0 %v2877
        %v4611 = vpop.f32.mrb[0].mxu0
        %v4612 = vadd.f32 %v4339, %v4611
        %v4613 = vpop.f32.mrb[0].mxu0
        %v4614 = vadd.f32 %v4341, %v4613
        %v4615 = vpop.f32.mrb[0].mxu0
        %v4616 = vadd.f32 %v4343, %v4615
        %v4617 = vpop.f32.mrb[0].mxu0
        %v4618 = vadd.f32 %v4345, %v4617
        %4619 = vmatprep.mubr.bf16.mxu0 %v2882
        %4620 = vmatmul.mubr.bf16.gmra.mrb[0].mxu0 %v2881
        %v4621 = vpop.f32.mrb[0].mxu0
        %v4622 = vadd.f32 %v4349, %v4621
        %v4623 = vpop.f32.mrb[0].mxu0
        %v4624 = vadd.f32 %v4351, %v4623
        %v4625 = vpop.f32.mrb[0].mxu0
        %v4626 = vadd.f32 %v4353, %v4625
        %v4627 = vpop.f32.mrb[0].mxu0
        %v4628 = vadd.f32 %v4355, %v4627
        %4629 = vmatprep.mubr.bf16.mxu0 %v2886
        %4630 = vmatmul.mubr.bf16.gmra.mrb[0].mxu0 %v2885
        %v4631 = vpop.f32.mrb[0].mxu0
        %v4632 = vadd.f32 %v4359, %v4631
        %v4633 = vpop.f32.mrb[0].mxu0
        %v4634 = vadd.f32 %v4361, %v4633
        %v4635 = vpop.f32.mrb[0].mxu0
        %v4636 = vadd.f32 %v4363, %v4635
        %v4637 = vpop.f32.mrb[0].mxu0
        %v4638 = vadd.f32 %v4365, %v4637
        %4639 = vdwg.mxu0
        %4640 = vst [vmem:[%s297] sm:$0xff] %v3856
        %4641 = vst [vmem:[%s297 + $0x8] sm:$0xff] %v3858
        %4642 = vst [vmem:[%s297 + $0x10] sm:$0xff] %v4402
        %4643 = vst [vmem:[%s297 + $0x18] sm:$0xff] %v4404
        %4644 = vst [vmem:[%s297 + $0x20] sm:$0xff] %v3860
        %4645 = vst [vmem:[%s297 + $0x28] sm:$0xff] %v3862
        %4646 = vst [vmem:[%s297 + $0x30] sm:$0xff] %v4406
        %4647 = vst [vmem:[%s297 + $0x38] sm:$0xff] %v4408
        %4648 = vst [vmem:[%s297 + $0x40] sm:$0xff] %v3866
        %4649 = vst [vmem:[%s297 + $0x48] sm:$0xff] %v3868
        %4650 = vst [vmem:[%s297 + $0x50] sm:$0xff] %v4412
        %4651 = vst [vmem:[%s297 + $0x58] sm:$0xff] %v4414
        %4652 = vst [vmem:[%s297 + $0x60] sm:$0xff] %v3870
        %4653 = vst [vmem:[%s297 + $0x68] sm:$0xff] %v3872
        %4654 = vst [vmem:[%s297 + $0x70] sm:$0xff] %v4416
        %4655 = vst [vmem:[%s297 + $0x78] sm:$0xff] %v4418
        %4656 = vst [vmem:[%s297 + $0x80] sm:$0xff] %v3876
        %4657 = vst [vmem:[%s297 + $0x88] sm:$0xff] %v3878
        %4658 = vst [vmem:[%s297 + $0x90] sm:$0xff] %v4422
        %4659 = vst [vmem:[%s297 + $0x98] sm:$0xff] %v4424
        %4660 = vst [vmem:[%s297 + $0xa0] sm:$0xff] %v3880
        %4661 = vst [vmem:[%s297 + $0xa8] sm:$0xff] %v3882
        %4662 = vst [vmem:[%s297 + $0xb0] sm:$0xff] %v4426
        %4663 = vst [vmem:[%s297 + $0xb8] sm:$0xff] %v4428
        %4664 = vst [vmem:[%s297 + $0xc0] sm:$0xff] %v3886
        %4665 = vst [vmem:[%s297 + $0xc8] sm:$0xff] %v3888
        %4666 = vst [vmem:[%s297 + $0xd0] sm:$0xff] %v4432
        %4667 = vst [vmem:[%s297 + $0xd8] sm:$0xff] %v4434
        %4668 = vst [vmem:[%s297 + $0xe0] sm:$0xff] %v3890
        %4669 = vst [vmem:[%s297 + $0xe8] sm:$0xff] %v3892
        %4670 = vst [vmem:[%s297 + $0xf0] sm:$0xff] %v4436
        %4671 = vst [vmem:[%s297 + $0xf8] sm:$0xff] %v4438
        %4672 = vst [vmem:[%s297 + $0x100] sm:$0xff] %v3896
        %4673 = vst [vmem:[%s297 + $0x108] sm:$0xff] %v3898
        %4674 = vst [vmem:[%s297 + $0x110] sm:$0xff] %v4442
        %4675 = vst [vmem:[%s297 + $0x118] sm:$0xff] %v4444
        %4676 = vst [vmem:[%s297 + $0x120] sm:$0xff] %v3900
        %4677 = vst [vmem:[%s297 + $0x128] sm:$0xff] %v3902
        %4678 = vst [vmem:[%s297 + $0x130] sm:$0xff] %v4446
        %4679 = vst [vmem:[%s297 + $0x138] sm:$0xff] %v4448
        %4680 = vst [vmem:[%s297 + $0x140] sm:$0xff] %v3906
        %4681 = vst [vmem:[%s297 + $0x148] sm:$0xff] %v3908
        %4682 = vst [vmem:[%s297 + $0x150] sm:$0xff] %v4452
        %4683 = vst [vmem:[%s297 + $0x158] sm:$0xff] %v4454
        %4684 = vst [vmem:[%s297 + $0x160] sm:$0xff] %v3910
        %4685 = vst [vmem:[%s297 + $0x168] sm:$0xff] %v3912
        %4686 = vst [vmem:[%s297 + $0x170] sm:$0xff] %v4456
        %4687 = vst [vmem:[%s297 + $0x178] sm:$0xff] %v4458
        %4688 = vst [vmem:[%s297 + $0x180] sm:$0xff] %v3916
        %4689 = vst [vmem:[%s297 + $0x188] sm:$0xff] %v3918
        %4690 = vst [vmem:[%s297 + $0x190] sm:$0xff] %v4462
        %4691 = vst [vmem:[%s297 + $0x198] sm:$0xff] %v4464
        %4692 = vst [vmem:[%s297 + $0x1a0] sm:$0xff] %v3920
        %4693 = vst [vmem:[%s297 + $0x1a8] sm:$0xff] %v3922
        %4694 = vst [vmem:[%s297 + $0x1b0] sm:$0xff] %v4466
        %4695 = vst [vmem:[%s297 + $0x1b8] sm:$0xff] %v4468
        %4696 = vst [vmem:[%s297 + $0x1c0] sm:$0xff] %v3926
        %4697 = vst [vmem:[%s297 + $0x1c8] sm:$0xff] %v3928
        %4698 = vst [vmem:[%s297 + $0x1d0] sm:$0xff] %v4472
        %4699 = vst [vmem:[%s297 + $0x1d8] sm:$0xff] %v4474
        %4700 = vst [vmem:[%s297 + $0x1e0] sm:$0xff] %v3930
        %4701 = vst [vmem:[%s297 + $0x1e8] sm:$0xff] %v3932
        %4702 = vst [vmem:[%s297 + $0x1f0] sm:$0xff] %v4476
        %4703 = vst [vmem:[%s297 + $0x1f8] sm:$0xff] %v4478
        %4704 = vst [vmem:[%s297 + $0x200] sm:$0xff] %v3936
        %4705 = vst [vmem:[%s297 + $0x208] sm:$0xff] %v3938
        %4706 = vst [vmem:[%s297 + $0x210] sm:$0xff] %v4482
        %4707 = vst [vmem:[%s297 + $0x218] sm:$0xff] %v4484
        %4708 = vst [vmem:[%s297 + $0x220] sm:$0xff] %v3940
        %4709 = vst [vmem:[%s297 + $0x228] sm:$0xff] %v3942
        %4710 = vst [vmem:[%s297 + $0x230] sm:$0xff] %v4486
        %4711 = vst [vmem:[%s297 + $0x238] sm:$0xff] %v4488
        %4712 = vst [vmem:[%s297 + $0x240] sm:$0xff] %v3946
        %4713 = vst [vmem:[%s297 + $0x248] sm:$0xff] %v3948
        %4714 = vst [vmem:[%s297 + $0x250] sm:$0xff] %v4492
        %4715 = vst [vmem:[%s297 + $0x258] sm:$0xff] %v4494
        %4716 = vst [vmem:[%s297 + $0x260] sm:$0xff] %v3950
        %4717 = vst [vmem:[%s297 + $0x268] sm:$0xff] %v3952
        %4718 = vst [vmem:[%s297 + $0x270] sm:$0xff] %v4496
        %4719 = vst [vmem:[%s297 + $0x278] sm:$0xff] %v4498
        %4720 = vst [vmem:[%s297 + $0x280] sm:$0xff] %v3956
        %4721 = vst [vmem:[%s297 + $0x288] sm:$0xff] %v3958
        %4722 = vst [vmem:[%s297 + $0x290] sm:$0xff] %v4502
        %4723 = vst [vmem:[%s297 + $0x298] sm:$0xff] %v4504
        %4724 = vst [vmem:[%s297 + $0x2a0] sm:$0xff] %v3960
        %4725 = vst [vmem:[%s297 + $0x2a8] sm:$0xff] %v3962
        %4726 = vst [vmem:[%s297 + $0x2b0] sm:$0xff] %v4506
        %4727 = vst [vmem:[%s297 + $0x2b8] sm:$0xff] %v4508
        %4728 = vst [vmem:[%s297 + $0x2c0] sm:$0xff] %v3966
        %4729 = vst [vmem:[%s297 + $0x2c8] sm:$0xff] %v3968
        %4730 = vst [vmem:[%s297 + $0x2d0] sm:$0xff] %v4512
        %4731 = vst [vmem:[%s297 + $0x2d8] sm:$0xff] %v4514
        %4732 = vst [vmem:[%s297 + $0x2e0] sm:$0xff] %v3970
        %4733 = vst [vmem:[%s297 + $0x2e8] sm:$0xff] %v3972
        %4734 = vst [vmem:[%s297 + $0x2f0] sm:$0xff] %v4516
        %4735 = vst [vmem:[%s297 + $0x2f8] sm:$0xff] %v4518
        %4736 = vst [vmem:[%s297 + $0x300] sm:$0xff] %v3976
        %4737 = vst [vmem:[%s297 + $0x308] sm:$0xff] %v3978
        %4738 = vst [vmem:[%s297 + $0x310] sm:$0xff] %v4522
        %4739 = vst [vmem:[%s297 + $0x318] sm:$0xff] %v4524
        %4740 = vst [vmem:[%s297 + $0x320] sm:$0xff] %v3980
        %4741 = vst [vmem:[%s297 + $0x328] sm:$0xff] %v3982
        %4742 = vst [vmem:[%s297 + $0x330] sm:$0xff] %v4526
        %4743 = vst [vmem:[%s297 + $0x338] sm:$0xff] %v4528
        %4744 = vst [vmem:[%s297 + $0x340] sm:$0xff] %v3986
        %4745 = vst [vmem:[%s297 + $0x348] sm:$0xff] %v3988
        %4746 = vst [vmem:[%s297 + $0x350] sm:$0xff] %v4532
        %4747 = vst [vmem:[%s297 + $0x358] sm:$0xff] %v4534
        %4748 = vst [vmem:[%s297 + $0x360] sm:$0xff] %v3990
        %4749 = vst [vmem:[%s297 + $0x368] sm:$0xff] %v3992
        %4750 = vst [vmem:[%s297 + $0x370] sm:$0xff] %v4536
        %4751 = vst [vmem:[%s297 + $0x378] sm:$0xff] %v4538
        %4752 = vst [vmem:[%s297 + $0x380] sm:$0xff] %v3996
        %4753 = vst [vmem:[%s297 + $0x388] sm:$0xff] %v3998
        %4754 = vst [vmem:[%s297 + $0x390] sm:$0xff] %v4542
        %4755 = vst [vmem:[%s297 + $0x398] sm:$0xff] %v4544
        %4756 = vst [vmem:[%s297 + $0x3a0] sm:$0xff] %v4000
        %4757 = vst [vmem:[%s297 + $0x3a8] sm:$0xff] %v4002
        %4758 = vst [vmem:[%s297 + $0x3b0] sm:$0xff] %v4546
        %4759 = vst [vmem:[%s297 + $0x3b8] sm:$0xff] %v4548
        %4760 = vst [vmem:[%s297 + $0x3c0] sm:$0xff] %v4006
        %4761 = vst [vmem:[%s297 + $0x3c8] sm:$0xff] %v4008
        %4762 = vst [vmem:[%s297 + $0x3d0] sm:$0xff] %v4552
        %4763 = vst [vmem:[%s297 + $0x3d8] sm:$0xff] %v4554
        %4764 = vst [vmem:[%s297 + $0x3e0] sm:$0xff] %v4010
        %4765 = vst [vmem:[%s297 + $0x3e8] sm:$0xff] %v4012
        %4766 = vst [vmem:[%s297 + $0x3f0] sm:$0xff] %v4556
        %4767 = vst [vmem:[%s297 + $0x3f8] sm:$0xff] %v4558
        %4768 = vst [vmem:[%s297 + $0x400] sm:$0xff] %v4016
        %4769 = vst [vmem:[%s297 + $0x408] sm:$0xff] %v4018
        %4770 = vst [vmem:[%s297 + $0x410] sm:$0xff] %v4562
        %4771 = vst [vmem:[%s297 + $0x418] sm:$0xff] %v4564
        %4772 = vst [vmem:[%s297 + $0x420] sm:$0xff] %v4020
        %4773 = vst [vmem:[%s297 + $0x428] sm:$0xff] %v4022
        %4774 = vst [vmem:[%s297 + $0x430] sm:$0xff] %v4566
        %4775 = vst [vmem:[%s297 + $0x438] sm:$0xff] %v4568
        %4776 = vst [vmem:[%s297 + $0x440] sm:$0xff] %v4026
        %4777 = vst [vmem:[%s297 + $0x448] sm:$0xff] %v4028
        %4778 = vst [vmem:[%s297 + $0x450] sm:$0xff] %v4572
        %4779 = vst [vmem:[%s297 + $0x458] sm:$0xff] %v4574
        %4780 = vst [vmem:[%s297 + $0x460] sm:$0xff] %v4030
        %4781 = vst [vmem:[%s297 + $0x468] sm:$0xff] %v4032
        %4782 = vst [vmem:[%s297 + $0x470] sm:$0xff] %v4576
        %4783 = vst [vmem:[%s297 + $0x478] sm:$0xff] %v4578
        %4784 = vst [vmem:[%s297 + $0x480] sm:$0xff] %v4036
        %4785 = vst [vmem:[%s297 + $0x488] sm:$0xff] %v4038
        %4786 = vst [vmem:[%s297 + $0x490] sm:$0xff] %v4582
        %4787 = vst [vmem:[%s297 + $0x498] sm:$0xff] %v4584
        %4788 = vst [vmem:[%s297 + $0x4a0] sm:$0xff] %v4040
        %4789 = vst [vmem:[%s297 + $0x4a8] sm:$0xff] %v4042
        %4790 = vst [vmem:[%s297 + $0x4b0] sm:$0xff] %v4586
        %4791 = vst [vmem:[%s297 + $0x4b8] sm:$0xff] %v4588
        %4792 = vst [vmem:[%s297 + $0x4c0] sm:$0xff] %v4046
        %4793 = vst [vmem:[%s297 + $0x4c8] sm:$0xff] %v4048
        %4794 = vst [vmem:[%s297 + $0x4d0] sm:$0xff] %v4592
        %4795 = vst [vmem:[%s297 + $0x4d8] sm:$0xff] %v4594
        %4796 = vst [vmem:[%s297 + $0x4e0] sm:$0xff] %v4050
        %4797 = vst [vmem:[%s297 + $0x4e8] sm:$0xff] %v4052
        %4798 = vst [vmem:[%s297 + $0x4f0] sm:$0xff] %v4596
        %4799 = vst [vmem:[%s297 + $0x4f8] sm:$0xff] %v4598
        %4800 = vst [vmem:[%s297 + $0x500] sm:$0xff] %v4056
        %4801 = vst [vmem:[%s297 + $0x508] sm:$0xff] %v4058
        %4802 = vst [vmem:[%s297 + $0x510] sm:$0xff] %v4602
        %4803 = vst [vmem:[%s297 + $0x518] sm:$0xff] %v4604
        %4804 = vst [vmem:[%s297 + $0x520] sm:$0xff] %v4060
        %4805 = vst [vmem:[%s297 + $0x528] sm:$0xff] %v4062
        %4806 = vst [vmem:[%s297 + $0x530] sm:$0xff] %v4606
        %4807 = vst [vmem:[%s297 + $0x538] sm:$0xff] %v4608
        %4808 = vst [vmem:[%s297 + $0x540] sm:$0xff] %v4066
        %4809 = vst [vmem:[%s297 + $0x548] sm:$0xff] %v4068
        %4810 = vst [vmem:[%s297 + $0x550] sm:$0xff] %v4612
        %4811 = vst [vmem:[%s297 + $0x558] sm:$0xff] %v4614
        %4812 = vst [vmem:[%s297 + $0x560] sm:$0xff] %v4070
        %4813 = vst [vmem:[%s297 + $0x568] sm:$0xff] %v4072
        %4814 = vst [vmem:[%s297 + $0x570] sm:$0xff] %v4616
        %4815 = vst [vmem:[%s297 + $0x578] sm:$0xff] %v4618
        %4816 = vst [vmem:[%s297 + $0x580] sm:$0xff] %v4076
        %4817 = vst [vmem:[%s297 + $0x588] sm:$0xff] %v4078
        %4818 = vst [vmem:[%s297 + $0x590] sm:$0xff] %v4622
        %4819 = vst [vmem:[%s297 + $0x598] sm:$0xff] %v4624
        %4820 = vst [vmem:[%s297 + $0x5a0] sm:$0xff] %v4080
        %4821 = vst [vmem:[%s297 + $0x5a8] sm:$0xff] %v4082
        %4822 = vst [vmem:[%s297 + $0x5b0] sm:$0xff] %v4626
        %4823 = vst [vmem:[%s297 + $0x5b8] sm:$0xff] %v4628
        %4824 = vst [vmem:[%s297 + $0x5c0] sm:$0xff] %v4086
        %4825 = vst [vmem:[%s297 + $0x5c8] sm:$0xff] %v4088
        %4826 = vst [vmem:[%s297 + $0x5d0] sm:$0xff] %v4632
        %4827 = vst [vmem:[%s297 + $0x5d8] sm:$0xff] %v4634
        %4828 = vst [vmem:[%s297 + $0x5e0] sm:$0xff] %v4090
        %4829 = vst [vmem:[%s297 + $0x5e8] sm:$0xff] %v4092
        %4830 = vst [vmem:[%s297 + $0x5f0] sm:$0xff] %v4636
        %4831 = vst [vmem:[%s297 + $0x5f8] sm:$0xff] %v4638
        %s4832 = sand.u32 %s142, 1
        %s4833 = scalar_lea.sflag [#allocation4], %s4832
        %s4834 = sand.u32 %s142, 1
        %s4835 = smul.addr %s4834, 1536
        %s4836 = scalar_lea.vmem [#allocation11], %s4835
        // Predicated region
        $region61: #{tpu_custom_call.1} parent=39 // pred_check
          %p4837 = pneg %p152
        $region62: #{tpu_custom_call.1} parent=39 // pred_check_branch
          %4839 = sbr.rel (%p4837) target = $region64
        $region63: #{tpu_custom_call.1} parent=39 // pred_region
          %s4840 = smul.u32 48, %s24
          %s4842 = ssub.s32 24576, 24576
          %4843 = vsyncadd %s4833, %s4842
          %s4844 = smul.addr %s4840, 4
          %s4845 = smul.addr %s4844, 128
          %s4846 = scalar_lea.hbm %s5, %s4845
          %s4847 = sshll.u32 %s4836, 4
          %s4848 = int_to_ptr.vmem [resolvable:$true] %s4847
          %4853 = dma.vmem_to_hbm [thread:$0]  %s4848, 24576, %s4846, %s4833, 512, 512, 32
        $region64: #{tpu_custom_call.1} parent=39 // pred_fallthru
          _
      $region40: #{tpu_custom_call.1} parent=5 // pred_fallthru
        _
      %p4854 = scmp.le.s32.totalorder 2, %s19
      // Predicated region
      $region65: #{tpu_custom_call.1} parent=5 // pred_check
        %p4855 = pneg %p4854
      $region66: #{tpu_custom_call.1} parent=5 // pred_check_branch
        %4857 = sbr.rel (%p4855) target = $region68
      $region67: #{tpu_custom_call.1} parent=5 // pred_region
        %s4858 = ssub.s32 %s19, 2
        // Predicated region
        $region69: #{tpu_custom_call.1} parent=67 // pred_check
          %p4859 = pneg %p158
        $region70: #{tpu_custom_call.1} parent=67 // pred_check_branch
          %4861 = sbr.rel (%p4859) target = $region72
        $region71: #{tpu_custom_call.1} parent=67 // pred_region
          %s4862 = sand.u32 %s143, 1
          %s4863 = scalar_lea.sflag [#allocation4], %s4862
          %s4864 = sand.u32 %s143, 1
          %s4865 = smul.addr %s4864, 1536
          %s4866 = scalar_lea.vmem [#allocation11], %s4865
          %4867 = dma.done %s4863, 24576
        $region72: #{tpu_custom_call.1} parent=67 // pred_fallthru
          _
      $region68: #{tpu_custom_call.1} parent=5 // pred_fallthru
        _
    $region6: #{tpu_custom_call.1} parent=1 // loop_footer
      %s23 = sadd.s32 1, %s19
    $region7: #{tpu_custom_call.1} parent=1 // loop_footer_branch
      %18 = sbr.rel target = $region3
    $region8: #{tpu_custom_call.1} parent=1 // loop_exit
      _
    %4868 = vsyncpa [#allocation3], 1
    %s4869 = scalar_lea.sflag [#allocation3], 1
    %4870 = vsyncpa %s4869, 1
    %4871 = vsyncpa [#allocation6], 1
    %4872 = vsyncpa [#allocation9], 1
    %4873 = vsyncpa [#allocation4], 1
    %s4874 = scalar_lea.sflag [#allocation4], 1
    %4875 = vsyncpa %s4874, 1

</llo_original>
